<compile_context>
chip_gen: v7x
topology: tpu7x:2x2x1
jax: 0.10.0
libtpu: 0.0.40
codegen_flags: <defaults>
</compile_context>

<pallas_src>
import math

import jax
import jax.numpy as jnp
from jax import lax
from jax.experimental import pallas as pl
from jax.experimental.pallas import tpu as pltpu


def _round_up(x, m):
    return (x + m - 1) // m * m


def _resident_spec(block_shape, index_map):
    """Single-buffer a grid-invariant block when the API supports it."""
    try:
        return pl.BlockSpec(block_shape, index_map, pipeline_mode=pl.Buffered(1))
    except Exception:  # older Pallas without pipeline_mode / Buffered
        return pl.BlockSpec(block_shape, index_map)


def _choose_tiles(B, L_pad, t_pad, h_lane, elt, vmem_cap):
    """Pick (ti, tj) row tiles.  tj | L_pad and (tj % 8 == 0 or tj == L_pad);
    ti | L_pad (no layout constraint, the i side lives in SMEM scalars)."""
    # j tile: prefer the full padded row; shrink (multiple-of-8 divisor) only
    # if the per-segment one-hot operands would crowd VMEM.
    hot_budget = max(vmem_cap // 6, 8 << 20)
    tj = L_pad
    if 6 * L_pad * t_pad * elt > hot_budget:
        cand = _round_up(max(L_pad // 2, 8), 8)
        while cand >= 8:
            if L_pad % cand == 0 and 6 * cand * t_pad * elt <= hot_budget:
                tj = cand
                break
            cand -= 8
    # i rows per grid step: bound the double-buffered output block and keep at
    # least 2 grid steps when possible (v7x has 2 TensorCores per chip).
    out_budget = max(vmem_cap // 12, 4 << 20)
    ti = 1
    for cand in range(L_pad, 0, -1):
        if L_pad % cand:
            continue
        if 2 * cand * tj * h_lane * 4 > out_budget:
            continue
        if B * (L_pad // cand) * (L_pad // tj) < 2 and cand > 1:
            continue
        ti = cand
        break
    return ti, tj


# --------------------------- Pallas kernel ----------------------------------
def _fusion_ff_kernel(ps_sm, pe_sm, osj_ref, oej_ref, p_ref, o_ref):
    """One (b, i-tile, j-tile) output block.

    ps_sm, pe_sm: (B, L_pad) int32 in SMEM (scalar prefetch) -- i-side positions.
    osj_ref/oej_ref: (1, tj, 1) int32 -- j-side offsets (L - pos_s / L - pos_e),
                     sublane oriented so idx = pos_i + off_j is (tj, 1).
    p_ref: (4, T_pad, H) projected tables (bias folded into segment 0),
           bf16 or f32; grid-invariant (resident).
    o_ref: (1, ti, tj, H) output block.
    """
    b = pl.program_id(0)
    ti = o_ref.shape[1]
    tj = o_ref.shape[2]
    i0 = pl.program_id(1) * ti
    t_pad = p_ref.shape[1]
    cdt = p_ref.dtype

    osj = osj_ref[0]                                        # (tj, 1) int32
    oej = oej_ref[0]                                        # (tj, 1) int32
    # One lane-iota reused for all 4 segments and all ti rows of the tile.
    lane = lax.broadcasted_iota(jnp.int32, (tj, t_pad), 1)

    def one_i(i, carry):
        ps_i = ps_sm[b, i0 + i]                             # scalar int32
        pe_i = pe_sm[b, i0 + i]
        # Per-segment one-hots (exact in bf16); disjoint dots accumulated f32.
        h_ss = (lane == (ps_i + osj)).astype(cdt)           # (tj, t_pad)
        h_se = (lane == (ps_i + oej)).astype(cdt)
        h_es = (lane == (pe_i + osj)).astype(cdt)
        h_ee = (lane == (pe_i + oej)).astype(cdt)
        acc = jnp.dot(h_ss, p_ref[0], preferred_element_type=jnp.float32)
        acc = acc + jnp.dot(h_se, p_ref[1], preferred_element_type=jnp.float32)
        acc = acc + jnp.dot(h_es, p_ref[2], preferred_element_type=jnp.float32)
        acc = acc + jnp.dot(h_ee, p_ref[3], preferred_element_type=jnp.float32)
        o_ref[0, i] = jnp.maximum(acc, 0.0).astype(o_ref.dtype)  # (tj, H)
        return carry

    lax.fori_loop(0, ti, one_i, None, unroll=(ti <= 8))


# --------------------------- wrapper -----------------------------------------
def four_pos_fusion_ff(pos_s, pos_e,
                       pe_ss_tab, pe_se_tab, pe_es_tab, pe_ee_tab,
                       w, b, *,
                       compute_dtype=jnp.bfloat16, out_dtype=jnp.float32):
    """FLAT 'ff' fusion: relu(Linear(concat of 4 gathered rel-pos embeddings)).

    pos_s, pos_e: (B, L) int. pe_*_tab: (T, H) with T >= 2L+1 (indexed at d+L).
    w: (H, 4H) PyTorch nn.Linear weight. b: (H,).  Returns (B, L, L, H).
    compute_dtype=bfloat16 runs the MXU in bf16 (f32 accumulate, ~1e-3 rel err);
    pass float32 for strict parity with the f32 reference.
    """
    B, L = pos_s.shape
    T, H = pe_ss_tab.shape
    assert w.shape == (H, 4 * H)

    # Clamp positions so every relative distance lands in [0, 2L] (the PyTorch
    # gather would raise on out-of-range indices; here OOB would silently drop
    # a term, so clamp in the wrapper -- a no-op for valid inputs).
    pos_s = jnp.clip(pos_s.astype(jnp.int32), 0, L - 1)
    pos_e = jnp.clip(pos_e.astype(jnp.int32), 0, L - 1)

    # ---- fold Linear weight (+ bias into segment 0) into the tables; pad the
    # per-segment K to a multiple of 128 with zero rows (numerically inert). ---
    t_pad = _round_up(max(T, 2 * L + 1), 128)
    w32 = w.astype(jnp.float32)
    b32 = b.astype(jnp.float32)
    wt = w32.T                                              # (4H, H)

    def fold(tab, c, with_bias):
        y = tab.astype(jnp.float32) @ wt[c * H:(c + 1) * H]   # (T, H)
        if with_bias:
            y = y + b32[None, :]
        return jnp.pad(y, ((0, t_pad - T), (0, 0)))

    p_tabs = jnp.stack(
        [fold(pe_ss_tab, 0, True), fold(pe_se_tab, 1, False),
         fold(pe_es_tab, 2, False), fold(pe_ee_tab, 3, False)],
        axis=0).astype(compute_dtype)                       # (4, t_pad, H)

    # ---- pad the sequence axes to a multiple of 8 (padded rows/cols produce
    # garbage that is sliced off; padded positions still index in-range). ------
    L_pad = _round_up(L, 8)
    if L_pad != L:
        pos_s_p = jnp.pad(pos_s, ((0, 0), (0, L_pad - L)))
        pos_e_p = jnp.pad(pos_e, ((0, 0), (0, L_pad - L)))
    else:
        pos_s_p, pos_e_p = pos_s, pos_e
    # j-side offsets so that idx_c = pos_i + off_j  (= d + L), sublane oriented.
    osj = (L - pos_s_p)[:, :, None]                         # (B, L_pad, 1) int32
    oej = (L - pos_e_p)[:, :, None]                         # (B, L_pad, 1) int32

    # ---- generation-aware tiling / VMEM budget ------------------------------
    elt = jnp.dtype(compute_dtype).itemsize
    h_lane = _round_up(H, 128)
    try:
        vmem_cap = int(pltpu.get_tpu_info().vmem_capacity_bytes)
    except Exception:
        vmem_cap = 128 << 20

    ti, tj = _choose_tiles(B, L_pad, t_pad, h_lane, elt, vmem_cap)
    grid = (B, L_pad // ti, L_pad // tj)

    # VMEM estimate with lane/sublane padding (resident table, dbl-buffered
    # j-side offsets + output block, in-kernel one-hot/iota/acc intermediates).
    p_bytes = 4 * t_pad * h_lane * elt
    posj_bytes = 2 * 2 * tj * 128 * 4
    out_bytes = 2 * ti * tj * h_lane * 4
    inter_bytes = tj * t_pad * (4 + 5 * elt) + 2 * tj * h_lane * 4
    vmem_limit = p_bytes + posj_bytes + out_bytes + inter_bytes + (6 << 20)
    vmem_limit = int(min(max(vmem_limit, 16 << 20), int(0.55 * vmem_cap)))

    out = pl.pallas_call(
        _fusion_ff_kernel,
        out_shape=jax.ShapeDtypeStruct((B, L_pad, L_pad, H), out_dtype),
        grid_spec=pltpu.PrefetchScalarGridSpec(
            num_scalar_prefetch=2,                     # pos_s, pos_e -> SMEM
            grid=grid,
            in_specs=[
                pl.BlockSpec((1, tj, 1), lambda bb, it, jt, ps, pe: (bb, jt, 0)),
                pl.BlockSpec((1, tj, 1), lambda bb, it, jt, ps, pe: (bb, jt, 0)),
                _resident_spec((4, t_pad, H),
                               lambda bb, it, jt, ps, pe: (0, 0, 0)),
            ],
            out_specs=pl.BlockSpec(
                (1, ti, tj, H), lambda bb, it, jt, ps, pe: (bb, it, jt, 0)),
        ),
        compiler_params=pltpu.CompilerParams(
            dimension_semantics=("parallel", "parallel", "parallel"),
            vmem_limit_bytes=vmem_limit),
    )(pos_s_p, pos_e_p, osj, oej, p_tabs)

    return out[:, :L, :L, :]


# --------------------------- glue (plain JAX) --------------------------------
def sinusoidal_pe_table(n_pos, hidden):
    """Deterministic sinusoidal PE table (n_pos, hidden)."""
    position = jnp.arange(n_pos, dtype=jnp.float32)[:, None]
    div_term = jnp.exp(jnp.arange(0, hidden, 2, dtype=jnp.float32)
                       * (-math.log(10000.0) / hidden))
    pe = jnp.zeros((n_pos, hidden), jnp.float32)
    pe = pe.at[:, 0::2].set(jnp.sin(position * div_term))
    pe = pe.at[:, 1::2].set(jnp.cos(position * div_term))
    return pe


# --------------------------------- main ---------------------------------------
if __name__ == "__main__":
    B, L, H = 2, 8, 32              # batch, max_seq_len, hidden_size
    n_pos = 2 * L + 1               # PE tables cover indices in [0, 2L]

    key = jax.random.PRNGKey(0)
    k_off, k_w, k_b = jax.random.split(key, 3)

    # Positions: pos_s increasing, pos_e = pos_s + small span (FLAT-style).
    pos_s = jnp.broadcast_to(jnp.arange(L, dtype=jnp.int32), (B, L))
    span = jax.random.randint(k_off, (B, L), 0, 3, dtype=jnp.int32)
    pos_e = jnp.clip(pos_s + span, 0, L - 1)

    # Deterministic parameters.
    pe_ss_tab = sinusoidal_pe_table(n_pos, H)
    pe_se_tab = 0.5 * sinusoidal_pe_table(n_pos, H)
    pe_es_tab = -sinusoidal_pe_table(n_pos, H)
    pe_ee_tab = 2.0 * sinusoidal_pe_table(n_pos, H)

    bound = 1.0 / math.sqrt(4 * H)  # PyTorch nn.Linear default init bound
    w = jax.random.uniform(k_w, (H, 4 * H), jnp.float32, -bound, bound)
    b = jax.random.uniform(k_b, (H,), jnp.float32, -bound, bound)

    # Strict f32 path and the default bf16-MXU path.
    out_f32 = four_pos_fusion_ff(pos_s, pos_e,
                                 pe_ss_tab, pe_se_tab, pe_es_tab, pe_ee_tab,
                                 w, b, compute_dtype=jnp.float32)
    out_bf16 = four_pos_fusion_ff(pos_s, pos_e,
                                  pe_ss_tab, pe_se_tab, pe_es_tab, pe_ee_tab,
                                  w, b)  # compute_dtype=bfloat16 default
    out_f32, out_bf16 = jax.block_until_ready((out_f32, out_bf16))

    # Pure-JAX reference mirroring the PyTorch module exactly:
    # gather -> concat(4H) -> Linear -> ReLU.
    def gather(tab, d):
        return tab[(d + L).reshape(-1)].reshape(B, L, L, -1)

    d_ss = pos_s[:, :, None] - pos_s[:, None, :]
    d_se = pos_s[:, :, None] - pos_e[:, None, :]
    d_es = pos_e[:, :, None] - pos_s[:, None, :]
    d_ee = pos_e[:, :, None] - pos_e[:, None, :]
    pe_4 = jnp.concatenate([gather(pe_ss_tab, d_ss), gather(pe_se_tab, d_se),
                            gather(pe_es_tab, d_es), gather(pe_ee_tab, d_ee)],
                           axis=-1)
    ref = jnp.maximum(jnp.einsum("blmf,hf->blmh", pe_4, w) + b, 0.0)

    assert out_f32.shape == (B, L, L, H)
    assert out_bf16.shape == (B, L, L, H)
    assert jnp.allclose(out_f32, ref, atol=1e-4, rtol=1e-4), "f32 mismatch"
    assert jnp.allclose(out_bf16, ref, atol=5e-2, rtol=5e-2), "bf16 mismatch"
    print("KERNEL_OK")
</pallas_src>

<mosaic_0001>
module attributes {stable_mosaic.version = 11 : i64} {
  func.func @_fusion_ff_kernel(%arg0: i32, %arg1: i32, %arg2: i32, %arg3: memref<2x8xi32, #tpu.memory_space<smem>>, %arg4: memref<2x8xi32, #tpu.memory_space<smem>>, %arg5: memref<1x8x1xi32, #tpu.memory_space<vmem>>, %arg6: memref<1x8x1xi32, #tpu.memory_space<vmem>>, %arg7: memref<4x128x32xf32, #tpu.memory_space<vmem>>, %arg8: memref<1x8x8x32xf32, #tpu.memory_space<vmem>>) attributes {dimension_semantics = [#tpu.dimension_semantics<parallel>, #tpu.dimension_semantics<parallel>, #tpu.dimension_semantics<parallel>], iteration_bounds = array<i64: 2, 1, 1>, scalar_prefetch = 2 : i64, scratch_operands = 0 : i64, tpu.core_type = #tpu.core_type<tc>, window_params = [{transform_indices = @transform_0, window_bounds = array<i64: 1, 8, 1>}, {transform_indices = @transform_1, window_bounds = array<i64: 1, 8, 1>}, {pipeline_mode = #tpu.pipeline_mode<synchronous>, transform_indices = @transform_2, window_bounds = array<i64: 4, 128, 32>}, {transform_indices = @transform_3, window_bounds = array<i64: 1, 8, 8, 32>}]} {
    %c8_i32 = arith.constant 8 : i32
    %0 = arith.muli %arg1, %c8_i32 : i32
    %c0 = arith.constant 0 : index
    %c0_0 = arith.constant 0 : index
    %c0_1 = arith.constant 0 : index
    %1 = vector.load %arg5[%c0, %c0_0, %c0_1] : memref<1x8x1xi32, #tpu.memory_space<vmem>>, vector<1x8x1xi32>
    %2 = vector.shape_cast %1 : vector<1x8x1xi32> to vector<8x1xi32>
    %c0_2 = arith.constant 0 : index
    %c0_3 = arith.constant 0 : index
    %c0_4 = arith.constant 0 : index
    %3 = vector.load %arg6[%c0_2, %c0_3, %c0_4] : memref<1x8x1xi32, #tpu.memory_space<vmem>>, vector<1x8x1xi32>
    %4 = vector.shape_cast %3 : vector<1x8x1xi32> to vector<8x1xi32>
    %5 = tpu.iota {dimensions = array<i32: 1>} : vector<8x128xi32>
    %c0_i32 = arith.constant 0 : i32
    %6 = arith.addi %0, %c0_i32 : i32
    %7 = arith.index_cast %arg0 : i32 to index
    %8 = arith.index_cast %6 : i32 to index
    %9 = memref.load %arg3[%7, %8] : memref<2x8xi32, #tpu.memory_space<smem>>
    %10 = arith.addi %0, %c0_i32 : i32
    %11 = arith.index_cast %arg0 : i32 to index
    %12 = arith.index_cast %10 : i32 to index
    %13 = memref.load %arg4[%11, %12] : memref<2x8xi32, #tpu.memory_space<smem>>
    %14 = vector.broadcast %9 : i32 to vector<8x1xi32>
    %15 = arith.addi %14, %2 : vector<8x1xi32>
    %16 = vector.broadcast %15 : vector<8x1xi32> to vector<8x128xi32>
    %17 = arith.cmpi eq, %5, %16 : vector<8x128xi32>
    %18 = arith.extui %17 : vector<8x128xi1> to vector<8x128xi32>
    %19 = arith.sitofp %18 : vector<8x128xi32> to vector<8x128xf32>
    %20 = vector.broadcast %9 : i32 to vector<8x1xi32>
    %21 = arith.addi %20, %4 : vector<8x1xi32>
    %22 = vector.broadcast %21 : vector<8x1xi32> to vector<8x128xi32>
    %23 = arith.cmpi eq, %5, %22 : vector<8x128xi32>
    %24 = arith.extui %23 : vector<8x128xi1> to vector<8x128xi32>
    %25 = arith.sitofp %24 : vector<8x128xi32> to vector<8x128xf32>
    %26 = vector.broadcast %13 : i32 to vector<8x1xi32>
    %27 = arith.addi %26, %2 : vector<8x1xi32>
    %28 = vector.broadcast %27 : vector<8x1xi32> to vector<8x128xi32>
    %29 = arith.cmpi eq, %5, %28 : vector<8x128xi32>
    %30 = arith.extui %29 : vector<8x128xi1> to vector<8x128xi32>
    %31 = arith.sitofp %30 : vector<8x128xi32> to vector<8x128xf32>
    %32 = vector.broadcast %13 : i32 to vector<8x1xi32>
    %33 = arith.addi %32, %4 : vector<8x1xi32>
    %34 = vector.broadcast %33 : vector<8x1xi32> to vector<8x128xi32>
    %35 = arith.cmpi eq, %5, %34 : vector<8x128xi32>
    %36 = arith.extui %35 : vector<8x128xi1> to vector<8x128xi32>
    %37 = arith.sitofp %36 : vector<8x128xi32> to vector<8x128xf32>
    %c0_5 = arith.constant 0 : index
    %c0_6 = arith.constant 0 : index
    %c0_7 = arith.constant 0 : index
    %38 = vector.load %arg7[%c0_5, %c0_6, %c0_7] : memref<4x128x32xf32, #tpu.memory_space<vmem>>, vector<1x128x32xf32>
    %39 = vector.shape_cast %38 : vector<1x128x32xf32> to vector<128x32xf32>
    %cst = arith.constant dense<0.000000e+00> : vector<8x32xf32>
    %40 = tpu.matmul %19, %39, %cst {dimension_numbers = #tpu.dot_dimension_numbers<[1], [0], [0], [1], [0, 0, 1, 1], [], []>} : vector<8x128xf32>, vector<128x32xf32>, vector<8x32xf32> -> vector<8x32xf32>
    %c1 = arith.constant 1 : index
    %c0_8 = arith.constant 0 : index
    %c0_9 = arith.constant 0 : index
    %41 = vector.load %arg7[%c1, %c0_8, %c0_9] : memref<4x128x32xf32, #tpu.memory_space<vmem>>, vector<1x128x32xf32>
    %42 = vector.shape_cast %41 : vector<1x128x32xf32> to vector<128x32xf32>
    %cst_10 = arith.constant dense<0.000000e+00> : vector<8x32xf32>
    %43 = tpu.matmul %25, %42, %cst_10 {dimension_numbers = #tpu.dot_dimension_numbers<[1], [0], [0], [1], [0, 0, 1, 1], [], []>} : vector<8x128xf32>, vector<128x32xf32>, vector<8x32xf32> -> vector<8x32xf32>
    %44 = arith.addf %40, %43 : vector<8x32xf32>
    %c2 = arith.constant 2 : index
    %c0_11 = arith.constant 0 : index
    %c0_12 = arith.constant 0 : index
    %45 = vector.load %arg7[%c2, %c0_11, %c0_12] : memref<4x128x32xf32, #tpu.memory_space<vmem>>, vector<1x128x32xf32>
    %46 = vector.shape_cast %45 : vector<1x128x32xf32> to vector<128x32xf32>
    %cst_13 = arith.constant dense<0.000000e+00> : vector<8x32xf32>
    %47 = tpu.matmul %31, %46, %cst_13 {dimension_numbers = #tpu.dot_dimension_numbers<[1], [0], [0], [1], [0, 0, 1, 1], [], []>} : vector<8x128xf32>, vector<128x32xf32>, vector<8x32xf32> -> vector<8x32xf32>
    %48 = arith.addf %44, %47 : vector<8x32xf32>
    %c3 = arith.constant 3 : index
    %c0_14 = arith.constant 0 : index
    %c0_15 = arith.constant 0 : index
    %49 = vector.load %arg7[%c3, %c0_14, %c0_15] : memref<4x128x32xf32, #tpu.memory_space<vmem>>, vector<1x128x32xf32>
    %50 = vector.shape_cast %49 : vector<1x128x32xf32> to vector<128x32xf32>
    %cst_16 = arith.constant dense<0.000000e+00> : vector<8x32xf32>
    %51 = tpu.matmul %37, %50, %cst_16 {dimension_numbers = #tpu.dot_dimension_numbers<[1], [0], [0], [1], [0, 0, 1, 1], [], []>} : vector<8x128xf32>, vector<128x32xf32>, vector<8x32xf32> -> vector<8x32xf32>
    %52 = arith.addf %48, %51 : vector<8x32xf32>
    %cst_17 = arith.constant 0.000000e+00 : f32
    %53 = vector.broadcast %cst_17 : f32 to vector<8x32xf32>
    %54 = arith.maximumf %52, %53 : vector<8x32xf32>
    %c0_18 = arith.constant 0 : index
    %55 = arith.index_cast %c0_i32 : i32 to index
    %c0_19 = arith.constant 0 : index
    %c0_20 = arith.constant 0 : index
    %56 = vector.load %arg8[%c0_18, %55, %c0_19, %c0_20] : memref<1x8x8x32xf32, #tpu.memory_space<vmem>>, vector<1x1x8x32xf32>
    %57 = vector.shape_cast %56 : vector<1x1x8x32xf32> to vector<8x32xf32>
    %58 = vector.shape_cast %54 : vector<8x32xf32> to vector<1x1x8x32xf32>
    tpu.vector_store %arg8[%c0_18, %55, %c0_19, %c0_20], %58 {strides = array<i32>} : memref<1x8x8x32xf32, #tpu.memory_space<vmem>>, vector<1x1x8x32xf32>,
    %c1_i32 = arith.constant 1 : i32
    %59 = arith.addi %0, %c1_i32 : i32
    %60 = arith.index_cast %arg0 : i32 to index
    %61 = arith.index_cast %59 : i32 to index
    %62 = memref.load %arg3[%60, %61] : memref<2x8xi32, #tpu.memory_space<smem>>
    %63 = arith.addi %0, %c1_i32 : i32
    %64 = arith.index_cast %arg0 : i32 to index
    %65 = arith.index_cast %63 : i32 to index
    %66 = memref.load %arg4[%64, %65] : memref<2x8xi32, #tpu.memory_space<smem>>
    %67 = vector.broadcast %62 : i32 to vector<8x1xi32>
    %68 = arith.addi %67, %2 : vector<8x1xi32>
    %69 = vector.broadcast %68 : vector<8x1xi32> to vector<8x128xi32>
    %70 = arith.cmpi eq, %5, %69 : vector<8x128xi32>
    %71 = arith.extui %70 : vector<8x128xi1> to vector<8x128xi32>
    %72 = arith.sitofp %71 : vector<8x128xi32> to vector<8x128xf32>
    %73 = vector.broadcast %62 : i32 to vector<8x1xi32>
    %74 = arith.addi %73, %4 : vector<8x1xi32>
    %75 = vector.broadcast %74 : vector<8x1xi32> to vector<8x128xi32>
    %76 = arith.cmpi eq, %5, %75 : vector<8x128xi32>
    %77 = arith.extui %76 : vector<8x128xi1> to vector<8x128xi32>
    %78 = arith.sitofp %77 : vector<8x128xi32> to vector<8x128xf32>
    %79 = vector.broadcast %66 : i32 to vector<8x1xi32>
    %80 = arith.addi %79, %2 : vector<8x1xi32>
    %81 = vector.broadcast %80 : vector<8x1xi32> to vector<8x128xi32>
    %82 = arith.cmpi eq, %5, %81 : vector<8x128xi32>
    %83 = arith.extui %82 : vector<8x128xi1> to vector<8x128xi32>
    %84 = arith.sitofp %83 : vector<8x128xi32> to vector<8x128xf32>
    %85 = vector.broadcast %66 : i32 to vector<8x1xi32>
    %86 = arith.addi %85, %4 : vector<8x1xi32>
    %87 = vector.broadcast %86 : vector<8x1xi32> to vector<8x128xi32>
    %88 = arith.cmpi eq, %5, %87 : vector<8x128xi32>
    %89 = arith.extui %88 : vector<8x128xi1> to vector<8x128xi32>
    %90 = arith.sitofp %89 : vector<8x128xi32> to vector<8x128xf32>
    %c0_21 = arith.constant 0 : index
    %c0_22 = arith.constant 0 : index
    %c0_23 = arith.constant 0 : index
    %91 = vector.load %arg7[%c0_21, %c0_22, %c0_23] : memref<4x128x32xf32, #tpu.memory_space<vmem>>, vector<1x128x32xf32>
    %92 = vector.shape_cast %91 : vector<1x128x32xf32> to vector<128x32xf32>
    %cst_24 = arith.constant dense<0.000000e+00> : vector<8x32xf32>
    %93 = tpu.matmul %72, %92, %cst_24 {dimension_numbers = #tpu.dot_dimension_numbers<[1], [0], [0], [1], [0, 0, 1, 1], [], []>} : vector<8x128xf32>, vector<128x32xf32>, vector<8x32xf32> -> vector<8x32xf32>
    %c1_25 = arith.constant 1 : index
    %c0_26 = arith.constant 0 : index
    %c0_27 = arith.constant 0 : index
    %94 = vector.load %arg7[%c1_25, %c0_26, %c0_27] : memref<4x128x32xf32, #tpu.memory_space<vmem>>, vector<1x128x32xf32>
    %95 = vector.shape_cast %94 : vector<1x128x32xf32> to vector<128x32xf32>
    %cst_28 = arith.constant dense<0.000000e+00> : vector<8x32xf32>
    %96 = tpu.matmul %78, %95, %cst_28 {dimension_numbers = #tpu.dot_dimension_numbers<[1], [0], [0], [1], [0, 0, 1, 1], [], []>} : vector<8x128xf32>, vector<128x32xf32>, vector<8x32xf32> -> vector<8x32xf32>
    %97 = arith.addf %93, %96 : vector<8x32xf32>
    %c2_29 = arith.constant 2 : index
    %c0_30 = arith.constant 0 : index
    %c0_31 = arith.constant 0 : index
    %98 = vector.load %arg7[%c2_29, %c0_30, %c0_31] : memref<4x128x32xf32, #tpu.memory_space<vmem>>, vector<1x128x32xf32>
    %99 = vector.shape_cast %98 : vector<1x128x32xf32> to vector<128x32xf32>
    %cst_32 = arith.constant dense<0.000000e+00> : vector<8x32xf32>
    %100 = tpu.matmul %84, %99, %cst_32 {dimension_numbers = #tpu.dot_dimension_numbers<[1], [0], [0], [1], [0, 0, 1, 1], [], []>} : vector<8x128xf32>, vector<128x32xf32>, vector<8x32xf32> -> vector<8x32xf32>
    %101 = arith.addf %97, %100 : vector<8x32xf32>
    %c3_33 = arith.constant 3 : index
    %c0_34 = arith.constant 0 : index
    %c0_35 = arith.constant 0 : index
    %102 = vector.load %arg7[%c3_33, %c0_34, %c0_35] : memref<4x128x32xf32, #tpu.memory_space<vmem>>, vector<1x128x32xf32>
    %103 = vector.shape_cast %102 : vector<1x128x32xf32> to vector<128x32xf32>
    %cst_36 = arith.constant dense<0.000000e+00> : vector<8x32xf32>
    %104 = tpu.matmul %90, %103, %cst_36 {dimension_numbers = #tpu.dot_dimension_numbers<[1], [0], [0], [1], [0, 0, 1, 1], [], []>} : vector<8x128xf32>, vector<128x32xf32>, vector<8x32xf32> -> vector<8x32xf32>
    %105 = arith.addf %101, %104 : vector<8x32xf32>
    %cst_37 = arith.constant 0.000000e+00 : f32
    %106 = vector.broadcast %cst_37 : f32 to vector<8x32xf32>
    %107 = arith.maximumf %105, %106 : vector<8x32xf32>
    %c0_38 = arith.constant 0 : index
    %108 = arith.index_cast %c1_i32 : i32 to index
    %c0_39 = arith.constant 0 : index
    %c0_40 = arith.constant 0 : index
    %109 = vector.load %arg8[%c0_38, %108, %c0_39, %c0_40] : memref<1x8x8x32xf32, #tpu.memory_space<vmem>>, vector<1x1x8x32xf32>
    %110 = vector.shape_cast %109 : vector<1x1x8x32xf32> to vector<8x32xf32>
    %111 = vector.shape_cast %107 : vector<8x32xf32> to vector<1x1x8x32xf32>
    tpu.vector_store %arg8[%c0_38, %108, %c0_39, %c0_40], %111 {strides = array<i32>} : memref<1x8x8x32xf32, #tpu.memory_space<vmem>>, vector<1x1x8x32xf32>,
    %c2_i32 = arith.constant 2 : i32
    %112 = arith.addi %0, %c2_i32 : i32
    %113 = arith.index_cast %arg0 : i32 to index
    %114 = arith.index_cast %112 : i32 to index
    %115 = memref.load %arg3[%113, %114] : memref<2x8xi32, #tpu.memory_space<smem>>
    %116 = arith.addi %0, %c2_i32 : i32
    %117 = arith.index_cast %arg0 : i32 to index
    %118 = arith.index_cast %116 : i32 to index
    %119 = memref.load %arg4[%117, %118] : memref<2x8xi32, #tpu.memory_space<smem>>
    %120 = vector.broadcast %115 : i32 to vector<8x1xi32>
    %121 = arith.addi %120, %2 : vector<8x1xi32>
    %122 = vector.broadcast %121 : vector<8x1xi32> to vector<8x128xi32>
    %123 = arith.cmpi eq, %5, %122 : vector<8x128xi32>
    %124 = arith.extui %123 : vector<8x128xi1> to vector<8x128xi32>
    %125 = arith.sitofp %124 : vector<8x128xi32> to vector<8x128xf32>
    %126 = vector.broadcast %115 : i32 to vector<8x1xi32>
    %127 = arith.addi %126, %4 : vector<8x1xi32>
    %128 = vector.broadcast %127 : vector<8x1xi32> to vector<8x128xi32>
    %129 = arith.cmpi eq, %5, %128 : vector<8x128xi32>
    %130 = arith.extui %129 : vector<8x128xi1> to vector<8x128xi32>
    %131 = arith.sitofp %130 : vector<8x128xi32> to vector<8x128xf32>
    %132 = vector.broadcast %119 : i32 to vector<8x1xi32>
    %133 = arith.addi %132, %2 : vector<8x1xi32>
    %134 = vector.broadcast %133 : vector<8x1xi32> to vector<8x128xi32>
    %135 = arith.cmpi eq, %5, %134 : vector<8x128xi32>
    %136 = arith.extui %135 : vector<8x128xi1> to vector<8x128xi32>
    %137 = arith.sitofp %136 : vector<8x128xi32> to vector<8x128xf32>
    %138 = vector.broadcast %119 : i32 to vector<8x1xi32>
    %139 = arith.addi %138, %4 : vector<8x1xi32>
    %140 = vector.broadcast %139 : vector<8x1xi32> to vector<8x128xi32>
    %141 = arith.cmpi eq, %5, %140 : vector<8x128xi32>
    %142 = arith.extui %141 : vector<8x128xi1> to vector<8x128xi32>
    %143 = arith.sitofp %142 : vector<8x128xi32> to vector<8x128xf32>
    %c0_41 = arith.constant 0 : index
    %c0_42 = arith.constant 0 : index
    %c0_43 = arith.constant 0 : index
    %144 = vector.load %arg7[%c0_41, %c0_42, %c0_43] : memref<4x128x32xf32, #tpu.memory_space<vmem>>, vector<1x128x32xf32>
    %145 = vector.shape_cast %144 : vector<1x128x32xf32> to vector<128x32xf32>
    %cst_44 = arith.constant dense<0.000000e+00> : vector<8x32xf32>
    %146 = tpu.matmul %125, %145, %cst_44 {dimension_numbers = #tpu.dot_dimension_numbers<[1], [0], [0], [1], [0, 0, 1, 1], [], []>} : vector<8x128xf32>, vector<128x32xf32>, vector<8x32xf32> -> vector<8x32xf32>
    %c1_45 = arith.constant 1 : index
    %c0_46 = arith.constant 0 : index
    %c0_47 = arith.constant 0 : index
    %147 = vector.load %arg7[%c1_45, %c0_46, %c0_47] : memref<4x128x32xf32, #tpu.memory_space<vmem>>, vector<1x128x32xf32>
    %148 = vector.shape_cast %147 : vector<1x128x32xf32> to vector<128x32xf32>
    %cst_48 = arith.constant dense<0.000000e+00> : vector<8x32xf32>
    %149 = tpu.matmul %131, %148, %cst_48 {dimension_numbers = #tpu.dot_dimension_numbers<[1], [0], [0], [1], [0, 0, 1, 1], [], []>} : vector<8x128xf32>, vector<128x32xf32>, vector<8x32xf32> -> vector<8x32xf32>
    %150 = arith.addf %146, %149 : vector<8x32xf32>
    %c2_49 = arith.constant 2 : index
    %c0_50 = arith.constant 0 : index
    %c0_51 = arith.constant 0 : index
    %151 = vector.load %arg7[%c2_49, %c0_50, %c0_51] : memref<4x128x32xf32, #tpu.memory_space<vmem>>, vector<1x128x32xf32>
    %152 = vector.shape_cast %151 : vector<1x128x32xf32> to vector<128x32xf32>
    %cst_52 = arith.constant dense<0.000000e+00> : vector<8x32xf32>
    %153 = tpu.matmul %137, %152, %cst_52 {dimension_numbers = #tpu.dot_dimension_numbers<[1], [0], [0], [1], [0, 0, 1, 1], [], []>} : vector<8x128xf32>, vector<128x32xf32>, vector<8x32xf32> -> vector<8x32xf32>
    %154 = arith.addf %150, %153 : vector<8x32xf32>
    %c3_53 = arith.constant 3 : index
    %c0_54 = arith.constant 0 : index
    %c0_55 = arith.constant 0 : index
    %155 = vector.load %arg7[%c3_53, %c0_54, %c0_55] : memref<4x128x32xf32, #tpu.memory_space<vmem>>, vector<1x128x32xf32>
    %156 = vector.shape_cast %155 : vector<1x128x32xf32> to vector<128x32xf32>
    %cst_56 = arith.constant dense<0.000000e+00> : vector<8x32xf32>
    %157 = tpu.matmul %143, %156, %cst_56 {dimension_numbers = #tpu.dot_dimension_numbers<[1], [0], [0], [1], [0, 0, 1, 1], [], []>} : vector<8x128xf32>, vector<128x32xf32>, vector<8x32xf32> -> vector<8x32xf32>
    %158 = arith.addf %154, %157 : vector<8x32xf32>
    %cst_57 = arith.constant 0.000000e+00 : f32
    %159 = vector.broadcast %cst_57 : f32 to vector<8x32xf32>
    %160 = arith.maximumf %158, %159 : vector<8x32xf32>
    %c0_58 = arith.constant 0 : index
    %161 = arith.index_cast %c2_i32 : i32 to index
    %c0_59 = arith.constant 0 : index
    %c0_60 = arith.constant 0 : index
    %162 = vector.load %arg8[%c0_58, %161, %c0_59, %c0_60] : memref<1x8x8x32xf32, #tpu.memory_space<vmem>>, vector<1x1x8x32xf32>
    %163 = vector.shape_cast %162 : vector<1x1x8x32xf32> to vector<8x32xf32>
    %164 = vector.shape_cast %160 : vector<8x32xf32> to vector<1x1x8x32xf32>
    tpu.vector_store %arg8[%c0_58, %161, %c0_59, %c0_60], %164 {strides = array<i32>} : memref<1x8x8x32xf32, #tpu.memory_space<vmem>>, vector<1x1x8x32xf32>,
    %c3_i32 = arith.constant 3 : i32
    %165 = arith.addi %0, %c3_i32 : i32
    %166 = arith.index_cast %arg0 : i32 to index
    %167 = arith.index_cast %165 : i32 to index
    %168 = memref.load %arg3[%166, %167] : memref<2x8xi32, #tpu.memory_space<smem>>
    %169 = arith.addi %0, %c3_i32 : i32
    %170 = arith.index_cast %arg0 : i32 to index
    %171 = arith.index_cast %169 : i32 to index
    %172 = memref.load %arg4[%170, %171] : memref<2x8xi32, #tpu.memory_space<smem>>
    %173 = vector.broadcast %168 : i32 to vector<8x1xi32>
    %174 = arith.addi %173, %2 : vector<8x1xi32>
    %175 = vector.broadcast %174 : vector<8x1xi32> to vector<8x128xi32>
    %176 = arith.cmpi eq, %5, %175 : vector<8x128xi32>
    %177 = arith.extui %176 : vector<8x128xi1> to vector<8x128xi32>
    %178 = arith.sitofp %177 : vector<8x128xi32> to vector<8x128xf32>
    %179 = vector.broadcast %168 : i32 to vector<8x1xi32>
    %180 = arith.addi %179, %4 : vector<8x1xi32>
    %181 = vector.broadcast %180 : vector<8x1xi32> to vector<8x128xi32>
    %182 = arith.cmpi eq, %5, %181 : vector<8x128xi32>
    %183 = arith.extui %182 : vector<8x128xi1> to vector<8x128xi32>
    %184 = arith.sitofp %183 : vector<8x128xi32> to vector<8x128xf32>
    %185 = vector.broadcast %172 : i32 to vector<8x1xi32>
    %186 = arith.addi %185, %2 : vector<8x1xi32>
    %187 = vector.broadcast %186 : vector<8x1xi32> to vector<8x128xi32>
    %188 = arith.cmpi eq, %5, %187 : vector<8x128xi32>
    %189 = arith.extui %188 : vector<8x128xi1> to vector<8x128xi32>
    %190 = arith.sitofp %189 : vector<8x128xi32> to vector<8x128xf32>
    %191 = vector.broadcast %172 : i32 to vector<8x1xi32>
    %192 = arith.addi %191, %4 : vector<8x1xi32>
    %193 = vector.broadcast %192 : vector<8x1xi32> to vector<8x128xi32>
    %194 = arith.cmpi eq, %5, %193 : vector<8x128xi32>
    %195 = arith.extui %194 : vector<8x128xi1> to vector<8x128xi32>
    %196 = arith.sitofp %195 : vector<8x128xi32> to vector<8x128xf32>
    %c0_61 = arith.constant 0 : index
    %c0_62 = arith.constant 0 : index
    %c0_63 = arith.constant 0 : index
    %197 = vector.load %arg7[%c0_61, %c0_62, %c0_63] : memref<4x128x32xf32, #tpu.memory_space<vmem>>, vector<1x128x32xf32>
    %198 = vector.shape_cast %197 : vector<1x128x32xf32> to vector<128x32xf32>
    %cst_64 = arith.constant dense<0.000000e+00> : vector<8x32xf32>
    %199 = tpu.matmul %178, %198, %cst_64 {dimension_numbers = #tpu.dot_dimension_numbers<[1], [0], [0], [1], [0, 0, 1, 1], [], []>} : vector<8x128xf32>, vector<128x32xf32>, vector<8x32xf32> -> vector<8x32xf32>
    %c1_65 = arith.constant 1 : index
    %c0_66 = arith.constant 0 : index
    %c0_67 = arith.constant 0 : index
    %200 = vector.load %arg7[%c1_65, %c0_66, %c0_67] : memref<4x128x32xf32, #tpu.memory_space<vmem>>, vector<1x128x32xf32>
    %201 = vector.shape_cast %200 : vector<1x128x32xf32> to vector<128x32xf32>
    %cst_68 = arith.constant dense<0.000000e+00> : vector<8x32xf32>
    %202 = tpu.matmul %184, %201, %cst_68 {dimension_numbers = #tpu.dot_dimension_numbers<[1], [0], [0], [1], [0, 0, 1, 1], [], []>} : vector<8x128xf32>, vector<128x32xf32>, vector<8x32xf32> -> vector<8x32xf32>
    %203 = arith.addf %199, %202 : vector<8x32xf32>
    %c2_69 = arith.constant 2 : index
    %c0_70 = arith.constant 0 : index
    %c0_71 = arith.constant 0 : index
    %204 = vector.load %arg7[%c2_69, %c0_70, %c0_71] : memref<4x128x32xf32, #tpu.memory_space<vmem>>, vector<1x128x32xf32>
    %205 = vector.shape_cast %204 : vector<1x128x32xf32> to vector<128x32xf32>
    %cst_72 = arith.constant dense<0.000000e+00> : vector<8x32xf32>
    %206 = tpu.matmul %190, %205, %cst_72 {dimension_numbers = #tpu.dot_dimension_numbers<[1], [0], [0], [1], [0, 0, 1, 1], [], []>} : vector<8x128xf32>, vector<128x32xf32>, vector<8x32xf32> -> vector<8x32xf32>
    %207 = arith.addf %203, %206 : vector<8x32xf32>
    %c3_73 = arith.constant 3 : index
    %c0_74 = arith.constant 0 : index
    %c0_75 = arith.constant 0 : index
    %208 = vector.load %arg7[%c3_73, %c0_74, %c0_75] : memref<4x128x32xf32, #tpu.memory_space<vmem>>, vector<1x128x32xf32>
    %209 = vector.shape_cast %208 : vector<1x128x32xf32> to vector<128x32xf32>
    %cst_76 = arith.constant dense<0.000000e+00> : vector<8x32xf32>
    %210 = tpu.matmul %196, %209, %cst_76 {dimension_numbers = #tpu.dot_dimension_numbers<[1], [0], [0], [1], [0, 0, 1, 1], [], []>} : vector<8x128xf32>, vector<128x32xf32>, vector<8x32xf32> -> vector<8x32xf32>
    %211 = arith.addf %207, %210 : vector<8x32xf32>
    %cst_77 = arith.constant 0.000000e+00 : f32
    %212 = vector.broadcast %cst_77 : f32 to vector<8x32xf32>
    %213 = arith.maximumf %211, %212 : vector<8x32xf32>
    %c0_78 = arith.constant 0 : index
    %214 = arith.index_cast %c3_i32 : i32 to index
    %c0_79 = arith.constant 0 : index
    %c0_80 = arith.constant 0 : index
    %215 = vector.load %arg8[%c0_78, %214, %c0_79, %c0_80] : memref<1x8x8x32xf32, #tpu.memory_space<vmem>>, vector<1x1x8x32xf32>
    %216 = vector.shape_cast %215 : vector<1x1x8x32xf32> to vector<8x32xf32>
    %217 = vector.shape_cast %213 : vector<8x32xf32> to vector<1x1x8x32xf32>
    tpu.vector_store %arg8[%c0_78, %214, %c0_79, %c0_80], %217 {strides = array<i32>} : memref<1x8x8x32xf32, #tpu.memory_space<vmem>>, vector<1x1x8x32xf32>,
    %c4_i32 = arith.constant 4 : i32
    %218 = arith.addi %0, %c4_i32 : i32
    %219 = arith.index_cast %arg0 : i32 to index
    %220 = arith.index_cast %218 : i32 to index
    %221 = memref.load %arg3[%219, %220] : memref<2x8xi32, #tpu.memory_space<smem>>
    %222 = arith.addi %0, %c4_i32 : i32
    %223 = arith.index_cast %arg0 : i32 to index
    %224 = arith.index_cast %222 : i32 to index
    %225 = memref.load %arg4[%223, %224] : memref<2x8xi32, #tpu.memory_space<smem>>
    %226 = vector.broadcast %221 : i32 to vector<8x1xi32>
    %227 = arith.addi %226, %2 : vector<8x1xi32>
    %228 = vector.broadcast %227 : vector<8x1xi32> to vector<8x128xi32>
    %229 = arith.cmpi eq, %5, %228 : vector<8x128xi32>
    %230 = arith.extui %229 : vector<8x128xi1> to vector<8x128xi32>
    %231 = arith.sitofp %230 : vector<8x128xi32> to vector<8x128xf32>
    %232 = vector.broadcast %221 : i32 to vector<8x1xi32>
    %233 = arith.addi %232, %4 : vector<8x1xi32>
    %234 = vector.broadcast %233 : vector<8x1xi32> to vector<8x128xi32>
    %235 = arith.cmpi eq, %5, %234 : vector<8x128xi32>
    %236 = arith.extui %235 : vector<8x128xi1> to vector<8x128xi32>
    %237 = arith.sitofp %236 : vector<8x128xi32> to vector<8x128xf32>
    %238 = vector.broadcast %225 : i32 to vector<8x1xi32>
    %239 = arith.addi %238, %2 : vector<8x1xi32>
    %240 = vector.broadcast %239 : vector<8x1xi32> to vector<8x128xi32>
    %241 = arith.cmpi eq, %5, %240 : vector<8x128xi32>
    %242 = arith.extui %241 : vector<8x128xi1> to vector<8x128xi32>
    %243 = arith.sitofp %242 : vector<8x128xi32> to vector<8x128xf32>
    %244 = vector.broadcast %225 : i32 to vector<8x1xi32>
    %245 = arith.addi %244, %4 : vector<8x1xi32>
    %246 = vector.broadcast %245 : vector<8x1xi32> to vector<8x128xi32>
    %247 = arith.cmpi eq, %5, %246 : vector<8x128xi32>
    %248 = arith.extui %247 : vector<8x128xi1> to vector<8x128xi32>
    %249 = arith.sitofp %248 : vector<8x128xi32> to vector<8x128xf32>
    %c0_81 = arith.constant 0 : index
    %c0_82 = arith.constant 0 : index
    %c0_83 = arith.constant 0 : index
    %250 = vector.load %arg7[%c0_81, %c0_82, %c0_83] : memref<4x128x32xf32, #tpu.memory_space<vmem>>, vector<1x128x32xf32>
    %251 = vector.shape_cast %250 : vector<1x128x32xf32> to vector<128x32xf32>
    %cst_84 = arith.constant dense<0.000000e+00> : vector<8x32xf32>
    %252 = tpu.matmul %231, %251, %cst_84 {dimension_numbers = #tpu.dot_dimension_numbers<[1], [0], [0], [1], [0, 0, 1, 1], [], []>} : vector<8x128xf32>, vector<128x32xf32>, vector<8x32xf32> -> vector<8x32xf32>
    %c1_85 = arith.constant 1 : index
    %c0_86 = arith.constant 0 : index
    %c0_87 = arith.constant 0 : index
    %253 = vector.load %arg7[%c1_85, %c0_86, %c0_87] : memref<4x128x32xf32, #tpu.memory_space<vmem>>, vector<1x128x32xf32>
    %254 = vector.shape_cast %253 : vector<1x128x32xf32> to vector<128x32xf32>
    %cst_88 = arith.constant dense<0.000000e+00> : vector<8x32xf32>
    %255 = tpu.matmul %237, %254, %cst_88 {dimension_numbers = #tpu.dot_dimension_numbers<[1], [0], [0], [1], [0, 0, 1, 1], [], []>} : vector<8x128xf32>, vector<128x32xf32>, vector<8x32xf32> -> vector<8x32xf32>
    %256 = arith.addf %252, %255 : vector<8x32xf32>
    %c2_89 = arith.constant 2 : index
    %c0_90 = arith.constant 0 : index
    %c0_91 = arith.constant 0 : index
    %257 = vector.load %arg7[%c2_89, %c0_90, %c0_91] : memref<4x128x32xf32, #tpu.memory_space<vmem>>, vector<1x128x32xf32>
    %258 = vector.shape_cast %257 : vector<1x128x32xf32> to vector<128x32xf32>
    %cst_92 = arith.constant dense<0.000000e+00> : vector<8x32xf32>
    %259 = tpu.matmul %243, %258, %cst_92 {dimension_numbers = #tpu.dot_dimension_numbers<[1], [0], [0], [1], [0, 0, 1, 1], [], []>} : vector<8x128xf32>, vector<128x32xf32>, vector<8x32xf32> -> vector<8x32xf32>
    %260 = arith.addf %256, %259 : vector<8x32xf32>
    %c3_93 = arith.constant 3 : index
    %c0_94 = arith.constant 0 : index
    %c0_95 = arith.constant 0 : index
    %261 = vector.load %arg7[%c3_93, %c0_94, %c0_95] : memref<4x128x32xf32, #tpu.memory_space<vmem>>, vector<1x128x32xf32>
    %262 = vector.shape_cast %261 : vector<1x128x32xf32> to vector<128x32xf32>
    %cst_96 = arith.constant dense<0.000000e+00> : vector<8x32xf32>
    %263 = tpu.matmul %249, %262, %cst_96 {dimension_numbers = #tpu.dot_dimension_numbers<[1], [0], [0], [1], [0, 0, 1, 1], [], []>} : vector<8x128xf32>, vector<128x32xf32>, vector<8x32xf32> -> vector<8x32xf32>
    %264 = arith.addf %260, %263 : vector<8x32xf32>
    %cst_97 = arith.constant 0.000000e+00 : f32
    %265 = vector.broadcast %cst_97 : f32 to vector<8x32xf32>
    %266 = arith.maximumf %264, %265 : vector<8x32xf32>
    %c0_98 = arith.constant 0 : index
    %267 = arith.index_cast %c4_i32 : i32 to index
    %c0_99 = arith.constant 0 : index
    %c0_100 = arith.constant 0 : index
    %268 = vector.load %arg8[%c0_98, %267, %c0_99, %c0_100] : memref<1x8x8x32xf32, #tpu.memory_space<vmem>>, vector<1x1x8x32xf32>
    %269 = vector.shape_cast %268 : vector<1x1x8x32xf32> to vector<8x32xf32>
    %270 = vector.shape_cast %266 : vector<8x32xf32> to vector<1x1x8x32xf32>
    tpu.vector_store %arg8[%c0_98, %267, %c0_99, %c0_100], %270 {strides = array<i32>} : memref<1x8x8x32xf32, #tpu.memory_space<vmem>>, vector<1x1x8x32xf32>,
    %c5_i32 = arith.constant 5 : i32
    %271 = arith.addi %0, %c5_i32 : i32
    %272 = arith.index_cast %arg0 : i32 to index
    %273 = arith.index_cast %271 : i32 to index
    %274 = memref.load %arg3[%272, %273] : memref<2x8xi32, #tpu.memory_space<smem>>
    %275 = arith.addi %0, %c5_i32 : i32
    %276 = arith.index_cast %arg0 : i32 to index
    %277 = arith.index_cast %275 : i32 to index
    %278 = memref.load %arg4[%276, %277] : memref<2x8xi32, #tpu.memory_space<smem>>
    %279 = vector.broadcast %274 : i32 to vector<8x1xi32>
    %280 = arith.addi %279, %2 : vector<8x1xi32>
    %281 = vector.broadcast %280 : vector<8x1xi32> to vector<8x128xi32>
    %282 = arith.cmpi eq, %5, %281 : vector<8x128xi32>
    %283 = arith.extui %282 : vector<8x128xi1> to vector<8x128xi32>
    %284 = arith.sitofp %283 : vector<8x128xi32> to vector<8x128xf32>
    %285 = vector.broadcast %274 : i32 to vector<8x1xi32>
    %286 = arith.addi %285, %4 : vector<8x1xi32>
    %287 = vector.broadcast %286 : vector<8x1xi32> to vector<8x128xi32>
    %288 = arith.cmpi eq, %5, %287 : vector<8x128xi32>
    %289 = arith.extui %288 : vector<8x128xi1> to vector<8x128xi32>
    %290 = arith.sitofp %289 : vector<8x128xi32> to vector<8x128xf32>
    %291 = vector.broadcast %278 : i32 to vector<8x1xi32>
    %292 = arith.addi %291, %2 : vector<8x1xi32>
    %293 = vector.broadcast %292 : vector<8x1xi32> to vector<8x128xi32>
    %294 = arith.cmpi eq, %5, %293 : vector<8x128xi32>
    %295 = arith.extui %294 : vector<8x128xi1> to vector<8x128xi32>
    %296 = arith.sitofp %295 : vector<8x128xi32> to vector<8x128xf32>
    %297 = vector.broadcast %278 : i32 to vector<8x1xi32>
    %298 = arith.addi %297, %4 : vector<8x1xi32>
    %299 = vector.broadcast %298 : vector<8x1xi32> to vector<8x128xi32>
    %300 = arith.cmpi eq, %5, %299 : vector<8x128xi32>
    %301 = arith.extui %300 : vector<8x128xi1> to vector<8x128xi32>
    %302 = arith.sitofp %301 : vector<8x128xi32> to vector<8x128xf32>
    %c0_101 = arith.constant 0 : index
    %c0_102 = arith.constant 0 : index
    %c0_103 = arith.constant 0 : index
    %303 = vector.load %arg7[%c0_101, %c0_102, %c0_103] : memref<4x128x32xf32, #tpu.memory_space<vmem>>, vector<1x128x32xf32>
    %304 = vector.shape_cast %303 : vector<1x128x32xf32> to vector<128x32xf32>
    %cst_104 = arith.constant dense<0.000000e+00> : vector<8x32xf32>
    %305 = tpu.matmul %284, %304, %cst_104 {dimension_numbers = #tpu.dot_dimension_numbers<[1], [0], [0], [1], [0, 0, 1, 1], [], []>} : vector<8x128xf32>, vector<128x32xf32>, vector<8x32xf32> -> vector<8x32xf32>
    %c1_105 = arith.constant 1 : index
    %c0_106 = arith.constant 0 : index
    %c0_107 = arith.constant 0 : index
    %306 = vector.load %arg7[%c1_105, %c0_106, %c0_107] : memref<4x128x32xf32, #tpu.memory_space<vmem>>, vector<1x128x32xf32>
    %307 = vector.shape_cast %306 : vector<1x128x32xf32> to vector<128x32xf32>
    %cst_108 = arith.constant dense<0.000000e+00> : vector<8x32xf32>
    %308 = tpu.matmul %290, %307, %cst_108 {dimension_numbers = #tpu.dot_dimension_numbers<[1], [0], [0], [1], [0, 0, 1, 1], [], []>} : vector<8x128xf32>, vector<128x32xf32>, vector<8x32xf32> -> vector<8x32xf32>
    %309 = arith.addf %305, %308 : vector<8x32xf32>
    %c2_109 = arith.constant 2 : index
    %c0_110 = arith.constant 0 : index
    %c0_111 = arith.constant 0 : index
    %310 = vector.load %arg7[%c2_109, %c0_110, %c0_111] : memref<4x128x32xf32, #tpu.memory_space<vmem>>, vector<1x128x32xf32>
    %311 = vector.shape_cast %310 : vector<1x128x32xf32> to vector<128x32xf32>
    %cst_112 = arith.constant dense<0.000000e+00> : vector<8x32xf32>
    %312 = tpu.matmul %296, %311, %cst_112 {dimension_numbers = #tpu.dot_dimension_numbers<[1], [0], [0], [1], [0, 0, 1, 1], [], []>} : vector<8x128xf32>, vector<128x32xf32>, vector<8x32xf32> -> vector<8x32xf32>
    %313 = arith.addf %309, %312 : vector<8x32xf32>
    %c3_113 = arith.constant 3 : index
    %c0_114 = arith.constant 0 : index
    %c0_115 = arith.constant 0 : index
    %314 = vector.load %arg7[%c3_113, %c0_114, %c0_115] : memref<4x128x32xf32, #tpu.memory_space<vmem>>, vector<1x128x32xf32>
    %315 = vector.shape_cast %314 : vector<1x128x32xf32> to vector<128x32xf32>
    %cst_116 = arith.constant dense<0.000000e+00> : vector<8x32xf32>
    %316 = tpu.matmul %302, %315, %cst_116 {dimension_numbers = #tpu.dot_dimension_numbers<[1], [0], [0], [1], [0, 0, 1, 1], [], []>} : vector<8x128xf32>, vector<128x32xf32>, vector<8x32xf32> -> vector<8x32xf32>
    %317 = arith.addf %313, %316 : vector<8x32xf32>
    %cst_117 = arith.constant 0.000000e+00 : f32
    %318 = vector.broadcast %cst_117 : f32 to vector<8x32xf32>
    %319 = arith.maximumf %317, %318 : vector<8x32xf32>
    %c0_118 = arith.constant 0 : index
    %320 = arith.index_cast %c5_i32 : i32 to index
    %c0_119 = arith.constant 0 : index
    %c0_120 = arith.constant 0 : index
    %321 = vector.load %arg8[%c0_118, %320, %c0_119, %c0_120] : memref<1x8x8x32xf32, #tpu.memory_space<vmem>>, vector<1x1x8x32xf32>
    %322 = vector.shape_cast %321 : vector<1x1x8x32xf32> to vector<8x32xf32>
    %323 = vector.shape_cast %319 : vector<8x32xf32> to vector<1x1x8x32xf32>
    tpu.vector_store %arg8[%c0_118, %320, %c0_119, %c0_120], %323 {strides = array<i32>} : memref<1x8x8x32xf32, #tpu.memory_space<vmem>>, vector<1x1x8x32xf32>,
    %c6_i32 = arith.constant 6 : i32
    %324 = arith.addi %0, %c6_i32 : i32
    %325 = arith.index_cast %arg0 : i32 to index
    %326 = arith.index_cast %324 : i32 to index
    %327 = memref.load %arg3[%325, %326] : memref<2x8xi32, #tpu.memory_space<smem>>
    %328 = arith.addi %0, %c6_i32 : i32
    %329 = arith.index_cast %arg0 : i32 to index
    %330 = arith.index_cast %328 : i32 to index
    %331 = memref.load %arg4[%329, %330] : memref<2x8xi32, #tpu.memory_space<smem>>
    %332 = vector.broadcast %327 : i32 to vector<8x1xi32>
    %333 = arith.addi %332, %2 : vector<8x1xi32>
    %334 = vector.broadcast %333 : vector<8x1xi32> to vector<8x128xi32>
    %335 = arith.cmpi eq, %5, %334 : vector<8x128xi32>
    %336 = arith.extui %335 : vector<8x128xi1> to vector<8x128xi32>
    %337 = arith.sitofp %336 : vector<8x128xi32> to vector<8x128xf32>
    %338 = vector.broadcast %327 : i32 to vector<8x1xi32>
    %339 = arith.addi %338, %4 : vector<8x1xi32>
    %340 = vector.broadcast %339 : vector<8x1xi32> to vector<8x128xi32>
    %341 = arith.cmpi eq, %5, %340 : vector<8x128xi32>
    %342 = arith.extui %341 : vector<8x128xi1> to vector<8x128xi32>
    %343 = arith.sitofp %342 : vector<8x128xi32> to vector<8x128xf32>
    %344 = vector.broadcast %331 : i32 to vector<8x1xi32>
    %345 = arith.addi %344, %2 : vector<8x1xi32>
    %346 = vector.broadcast %345 : vector<8x1xi32> to vector<8x128xi32>
    %347 = arith.cmpi eq, %5, %346 : vector<8x128xi32>
    %348 = arith.extui %347 : vector<8x128xi1> to vector<8x128xi32>
    %349 = arith.sitofp %348 : vector<8x128xi32> to vector<8x128xf32>
    %350 = vector.broadcast %331 : i32 to vector<8x1xi32>
    %351 = arith.addi %350, %4 : vector<8x1xi32>
    %352 = vector.broadcast %351 : vector<8x1xi32> to vector<8x128xi32>
    %353 = arith.cmpi eq, %5, %352 : vector<8x128xi32>
    %354 = arith.extui %353 : vector<8x128xi1> to vector<8x128xi32>
    %355 = arith.sitofp %354 : vector<8x128xi32> to vector<8x128xf32>
    %c0_121 = arith.constant 0 : index
    %c0_122 = arith.constant 0 : index
    %c0_123 = arith.constant 0 : index
    %356 = vector.load %arg7[%c0_121, %c0_122, %c0_123] : memref<4x128x32xf32, #tpu.memory_space<vmem>>, vector<1x128x32xf32>
    %357 = vector.shape_cast %356 : vector<1x128x32xf32> to vector<128x32xf32>
    %cst_124 = arith.constant dense<0.000000e+00> : vector<8x32xf32>
    %358 = tpu.matmul %337, %357, %cst_124 {dimension_numbers = #tpu.dot_dimension_numbers<[1], [0], [0], [1], [0, 0, 1, 1], [], []>} : vector<8x128xf32>, vector<128x32xf32>, vector<8x32xf32> -> vector<8x32xf32>
    %c1_125 = arith.constant 1 : index
    %c0_126 = arith.constant 0 : index
    %c0_127 = arith.constant 0 : index
    %359 = vector.load %arg7[%c1_125, %c0_126, %c0_127] : memref<4x128x32xf32, #tpu.memory_space<vmem>>, vector<1x128x32xf32>
    %360 = vector.shape_cast %359 : vector<1x128x32xf32> to vector<128x32xf32>
    %cst_128 = arith.constant dense<0.000000e+00> : vector<8x32xf32>
    %361 = tpu.matmul %343, %360, %cst_128 {dimension_numbers = #tpu.dot_dimension_numbers<[1], [0], [0], [1], [0, 0, 1, 1], [], []>} : vector<8x128xf32>, vector<128x32xf32>, vector<8x32xf32> -> vector<8x32xf32>
    %362 = arith.addf %358, %361 : vector<8x32xf32>
    %c2_129 = arith.constant 2 : index
    %c0_130 = arith.constant 0 : index
    %c0_131 = arith.constant 0 : index
    %363 = vector.load %arg7[%c2_129, %c0_130, %c0_131] : memref<4x128x32xf32, #tpu.memory_space<vmem>>, vector<1x128x32xf32>
    %364 = vector.shape_cast %363 : vector<1x128x32xf32> to vector<128x32xf32>
    %cst_132 = arith.constant dense<0.000000e+00> : vector<8x32xf32>
    %365 = tpu.matmul %349, %364, %cst_132 {dimension_numbers = #tpu.dot_dimension_numbers<[1], [0], [0], [1], [0, 0, 1, 1], [], []>} : vector<8x128xf32>, vector<128x32xf32>, vector<8x32xf32> -> vector<8x32xf32>
    %366 = arith.addf %362, %365 : vector<8x32xf32>
    %c3_133 = arith.constant 3 : index
    %c0_134 = arith.constant 0 : index
    %c0_135 = arith.constant 0 : index
    %367 = vector.load %arg7[%c3_133, %c0_134, %c0_135] : memref<4x128x32xf32, #tpu.memory_space<vmem>>, vector<1x128x32xf32>
    %368 = vector.shape_cast %367 : vector<1x128x32xf32> to vector<128x32xf32>
    %cst_136 = arith.constant dense<0.000000e+00> : vector<8x32xf32>
    %369 = tpu.matmul %355, %368, %cst_136 {dimension_numbers = #tpu.dot_dimension_numbers<[1], [0], [0], [1], [0, 0, 1, 1], [], []>} : vector<8x128xf32>, vector<128x32xf32>, vector<8x32xf32> -> vector<8x32xf32>
    %370 = arith.addf %366, %369 : vector<8x32xf32>
    %cst_137 = arith.constant 0.000000e+00 : f32
    %371 = vector.broadcast %cst_137 : f32 to vector<8x32xf32>
    %372 = arith.maximumf %370, %371 : vector<8x32xf32>
    %c0_138 = arith.constant 0 : index
    %373 = arith.index_cast %c6_i32 : i32 to index
    %c0_139 = arith.constant 0 : index
    %c0_140 = arith.constant 0 : index
    %374 = vector.load %arg8[%c0_138, %373, %c0_139, %c0_140] : memref<1x8x8x32xf32, #tpu.memory_space<vmem>>, vector<1x1x8x32xf32>
    %375 = vector.shape_cast %374 : vector<1x1x8x32xf32> to vector<8x32xf32>
    %376 = vector.shape_cast %372 : vector<8x32xf32> to vector<1x1x8x32xf32>
    tpu.vector_store %arg8[%c0_138, %373, %c0_139, %c0_140], %376 {strides = array<i32>} : memref<1x8x8x32xf32, #tpu.memory_space<vmem>>, vector<1x1x8x32xf32>,
    %c7_i32 = arith.constant 7 : i32
    %377 = arith.addi %0, %c7_i32 : i32
    %378 = arith.index_cast %arg0 : i32 to index
    %379 = arith.index_cast %377 : i32 to index
    %380 = memref.load %arg3[%378, %379] : memref<2x8xi32, #tpu.memory_space<smem>>
    %381 = arith.addi %0, %c7_i32 : i32
    %382 = arith.index_cast %arg0 : i32 to index
    %383 = arith.index_cast %381 : i32 to index
    %384 = memref.load %arg4[%382, %383] : memref<2x8xi32, #tpu.memory_space<smem>>
    %385 = vector.broadcast %380 : i32 to vector<8x1xi32>
    %386 = arith.addi %385, %2 : vector<8x1xi32>
    %387 = vector.broadcast %386 : vector<8x1xi32> to vector<8x128xi32>
    %388 = arith.cmpi eq, %5, %387 : vector<8x128xi32>
    %389 = arith.extui %388 : vector<8x128xi1> to vector<8x128xi32>
    %390 = arith.sitofp %389 : vector<8x128xi32> to vector<8x128xf32>
    %391 = vector.broadcast %380 : i32 to vector<8x1xi32>
    %392 = arith.addi %391, %4 : vector<8x1xi32>
    %393 = vector.broadcast %392 : vector<8x1xi32> to vector<8x128xi32>
    %394 = arith.cmpi eq, %5, %393 : vector<8x128xi32>
    %395 = arith.extui %394 : vector<8x128xi1> to vector<8x128xi32>
    %396 = arith.sitofp %395 : vector<8x128xi32> to vector<8x128xf32>
    %397 = vector.broadcast %384 : i32 to vector<8x1xi32>
    %398 = arith.addi %397, %2 : vector<8x1xi32>
    %399 = vector.broadcast %398 : vector<8x1xi32> to vector<8x128xi32>
    %400 = arith.cmpi eq, %5, %399 : vector<8x128xi32>
    %401 = arith.extui %400 : vector<8x128xi1> to vector<8x128xi32>
    %402 = arith.sitofp %401 : vector<8x128xi32> to vector<8x128xf32>
    %403 = vector.broadcast %384 : i32 to vector<8x1xi32>
    %404 = arith.addi %403, %4 : vector<8x1xi32>
    %405 = vector.broadcast %404 : vector<8x1xi32> to vector<8x128xi32>
    %406 = arith.cmpi eq, %5, %405 : vector<8x128xi32>
    %407 = arith.extui %406 : vector<8x128xi1> to vector<8x128xi32>
    %408 = arith.sitofp %407 : vector<8x128xi32> to vector<8x128xf32>
    %c0_141 = arith.constant 0 : index
    %c0_142 = arith.constant 0 : index
    %c0_143 = arith.constant 0 : index
    %409 = vector.load %arg7[%c0_141, %c0_142, %c0_143] : memref<4x128x32xf32, #tpu.memory_space<vmem>>, vector<1x128x32xf32>
    %410 = vector.shape_cast %409 : vector<1x128x32xf32> to vector<128x32xf32>
    %cst_144 = arith.constant dense<0.000000e+00> : vector<8x32xf32>
    %411 = tpu.matmul %390, %410, %cst_144 {dimension_numbers = #tpu.dot_dimension_numbers<[1], [0], [0], [1], [0, 0, 1, 1], [], []>} : vector<8x128xf32>, vector<128x32xf32>, vector<8x32xf32> -> vector<8x32xf32>
    %c1_145 = arith.constant 1 : index
    %c0_146 = arith.constant 0 : index
    %c0_147 = arith.constant 0 : index
    %412 = vector.load %arg7[%c1_145, %c0_146, %c0_147] : memref<4x128x32xf32, #tpu.memory_space<vmem>>, vector<1x128x32xf32>
    %413 = vector.shape_cast %412 : vector<1x128x32xf32> to vector<128x32xf32>
    %cst_148 = arith.constant dense<0.000000e+00> : vector<8x32xf32>
    %414 = tpu.matmul %396, %413, %cst_148 {dimension_numbers = #tpu.dot_dimension_numbers<[1], [0], [0], [1], [0, 0, 1, 1], [], []>} : vector<8x128xf32>, vector<128x32xf32>, vector<8x32xf32> -> vector<8x32xf32>
    %415 = arith.addf %411, %414 : vector<8x32xf32>
    %c2_149 = arith.constant 2 : index
    %c0_150 = arith.constant 0 : index
    %c0_151 = arith.constant 0 : index
    %416 = vector.load %arg7[%c2_149, %c0_150, %c0_151] : memref<4x128x32xf32, #tpu.memory_space<vmem>>, vector<1x128x32xf32>
    %417 = vector.shape_cast %416 : vector<1x128x32xf32> to vector<128x32xf32>
    %cst_152 = arith.constant dense<0.000000e+00> : vector<8x32xf32>
    %418 = tpu.matmul %402, %417, %cst_152 {dimension_numbers = #tpu.dot_dimension_numbers<[1], [0], [0], [1], [0, 0, 1, 1], [], []>} : vector<8x128xf32>, vector<128x32xf32>, vector<8x32xf32> -> vector<8x32xf32>
    %419 = arith.addf %415, %418 : vector<8x32xf32>
    %c3_153 = arith.constant 3 : index
    %c0_154 = arith.constant 0 : index
    %c0_155 = arith.constant 0 : index
    %420 = vector.load %arg7[%c3_153, %c0_154, %c0_155] : memref<4x128x32xf32, #tpu.memory_space<vmem>>, vector<1x128x32xf32>
    %421 = vector.shape_cast %420 : vector<1x128x32xf32> to vector<128x32xf32>
    %cst_156 = arith.constant dense<0.000000e+00> : vector<8x32xf32>
    %422 = tpu.matmul %408, %421, %cst_156 {dimension_numbers = #tpu.dot_dimension_numbers<[1], [0], [0], [1], [0, 0, 1, 1], [], []>} : vector<8x128xf32>, vector<128x32xf32>, vector<8x32xf32> -> vector<8x32xf32>
    %423 = arith.addf %419, %422 : vector<8x32xf32>
    %cst_157 = arith.constant 0.000000e+00 : f32
    %424 = vector.broadcast %cst_157 : f32 to vector<8x32xf32>
    %425 = arith.maximumf %423, %424 : vector<8x32xf32>
    %c0_158 = arith.constant 0 : index
    %426 = arith.index_cast %c7_i32 : i32 to index
    %c0_159 = arith.constant 0 : index
    %c0_160 = arith.constant 0 : index
    %427 = vector.load %arg8[%c0_158, %426, %c0_159, %c0_160] : memref<1x8x8x32xf32, #tpu.memory_space<vmem>>, vector<1x1x8x32xf32>
    %428 = vector.shape_cast %427 : vector<1x1x8x32xf32> to vector<8x32xf32>
    %429 = vector.shape_cast %425 : vector<8x32xf32> to vector<1x1x8x32xf32>
    tpu.vector_store %arg8[%c0_158, %426, %c0_159, %c0_160], %429 {strides = array<i32>} : memref<1x8x8x32xf32, #tpu.memory_space<vmem>>, vector<1x1x8x32xf32>,
    %c8_i32_161 = arith.constant 8 : i32
    return
  }
  func.func @transform_0(%arg0: i32, %arg1: i32, %arg2: i32, %arg3: memref<2x8xi32, #tpu.memory_space<smem>>, %arg4: memref<2x8xi32, #tpu.memory_space<smem>>) -> (i32, i32, i32) {
    %c0_i32 = arith.constant 0 : i32
    %c0_i32_0 = arith.constant 0 : i32
    return %arg0, %arg2, %c0_i32 : i32, i32, i32
  }
  func.func @transform_1(%arg0: i32, %arg1: i32, %arg2: i32, %arg3: memref<2x8xi32, #tpu.memory_space<smem>>, %arg4: memref<2x8xi32, #tpu.memory_space<smem>>) -> (i32, i32, i32) {
    %c0_i32 = arith.constant 0 : i32
    %c0_i32_0 = arith.constant 0 : i32
    return %arg0, %arg2, %c0_i32 : i32, i32, i32
  }
  func.func @transform_2(%arg0: i32, %arg1: i32, %arg2: i32, %arg3: memref<2x8xi32, #tpu.memory_space<smem>>, %arg4: memref<2x8xi32, #tpu.memory_space<smem>>) -> (i32, i32, i32) {
    %c0_i32 = arith.constant 0 : i32
    %c0_i32_0 = arith.constant 0 : i32
    %c0_i32_1 = arith.constant 0 : i32
    %c0_i32_2 = arith.constant 0 : i32
    return %c0_i32, %c0_i32_0, %c0_i32_1 : i32, i32, i32
  }
  func.func @transform_3(%arg0: i32, %arg1: i32, %arg2: i32, %arg3: memref<2x8xi32, #tpu.memory_space<smem>>, %arg4: memref<2x8xi32, #tpu.memory_space<smem>>) -> (i32, i32, i32, i32) {
    %c0_i32 = arith.constant 0 : i32
    %c0_i32_0 = arith.constant 0 : i32
    return %arg0, %arg1, %arg2, %c0_i32 : i32, i32, i32, i32
  }
}

</mosaic_0001>

<llo_original>
// kernel: tpu_custom_call.1
$region0: #{tpu_custom_call.1}
  #allocation0 [shape = 'u32[]', space=smem, size = 0x4, offset = 0x4, fixed_abs, tag = 'smem constant byte address 0x4 - core index']
  #allocation1 [shape = 'u32[144,128]{1,0:T(1,128)}', space=vmem, size = 0x12000, scoped, tag = 'internal scratch']
  #allocation2 [shape = 's32[1]{0}', space=sflag, size = 0x4, scoped, tag = 'scoped memory for tpu_custom_call.1']
  #allocation3 [shape = 'u8[1024]{0}', space=smem, size = 0x400, scoped, tag = 'prefetched SMEM operand 0']
  #allocation4 [shape = 'u8[1024]{0}', space=smem, size = 0x400, scoped, tag = 'prefetched SMEM operand 1']
  %s0 = inlined_call_operand.vmem [shape: s32[2,8], index: 0, kind: input, shape index: {}]
  %s1 = inlined_call_operand.vmem [shape: s32[2,8], index: 1, kind: input, shape index: {}]
  %s2 = inlined_call_operand.vmem [shape: s32[2,8,1], index: 2, kind: input, shape index: {}]
  %s3 = inlined_call_operand.vmem [shape: s32[2,8,1], index: 3, kind: input, shape index: {}]
  %s4 = inlined_call_operand.vmem [shape: f32[4,128,32], index: 4, kind: input, shape index: {}]
  %s5 = inlined_call_operand.hbm [shape: f32[2,8,8,32], index: 5, kind: output, shape index: {}]
  %s6 = sld [smem:[#allocation0]]
  $region45: #{tpu_custom_call.1} parent=0
    _
  %s8 = ssub.s32 1, %s6
  %s9 = scalar_select 0, %s8, %s6
  %s10 = sshll.u32 %s0, 4
  %s11 = int_to_ptr.vmem [resolvable:$true] %s10
  %13 = dma.vmem_to_smem %s11, 32, [#allocation3], [#allocation2]
  %s14 = sshll.u32 %s1, 4
  %s15 = int_to_ptr.vmem [resolvable:$true] %s14
  %17 = dma.vmem_to_smem %s15, 32, [#allocation4], [#allocation2]
  %18 = dma.done [#allocation2], 64
  %19 = sfence
  $region1: #{tpu_custom_call.1} parent=0
    #allocation5 [shape = 'u8[65536]{0}', space=vmem, size = 0x10000, scoped, tag = 'output window, operand 0']
    #allocation6 [shape = 's32[2]{0}', space=sflag, size = 0x8, scoped, tag = 'scoped memory for tpu_custom_call.1']
    %20 = vsyncpa [#allocation6], 0
    %s21 = scalar_lea.sflag [#allocation6], 1
    %22 = vsyncpa %s21, 0
    loop: start=0, step=1, limit=4
    $region2: #{tpu_custom_call.1} parent=1 // loop_pre_header
      _
    $region3: #{tpu_custom_call.1} parent=1 // loop_header
      %s24 = sphi 0, %s28
      %p25 = scmp.ge.s32.totalorder %s24, 4
      %s31 = sphi 0, %s50
      %s32 = sphi 0, %s46
      %s33 = sphi 0, %s42
      %s34 = sphi 0, %s31
      %s35 = sphi 0, %s32
      %s36 = sphi 0, %s33
      %s37 = sphi 0, %s34
      %s38 = sphi 0, %s35
      %s39 = sphi 0, %s36
      %s55 = sphi 0, %s57
      %s58 = sphi 0, %s55
      %s59 = sphi 0, %s58
      %s75 = sphi 0, %s59
      %s83 = sphi 0, %s85
      %s86 = sphi 0, %s83
      %s87 = sphi 0, %s86
      %s103 = sphi 0, %s87
      %s107 = sphi 0, %s107
      %s109 = sphi 0, %s107
      %s110 = sphi 0, %s109
      %s124 = sphi 0, %s110
      %s134 = sphi 0, %s136
      %s137 = sphi 0, %s134
      %s138 = sphi 0, %s137
      %s154 = sphi 0, %s138
    $region4: #{tpu_custom_call.1} parent=1 // loop_header_branch
      %27 = sbr.rel (%p25) target = $region8
    $region5: #{tpu_custom_call.1} parent=1 // loop_body
      %s29 = ssub.s32 %s24, 1
      %s30 = ssub.s32 %s24, 2
      %s40 = sadd.s32 1, %s33
      %p41 = scmp.ge.s32.totalorder %s40, 1
      %s42 = scalar_select %p41, 0, %s40
      %s43 = sadd.s32 1, %s32
      %s44 = scalar_select %p41, %s43, %s32
      %p45 = scmp.ge.s32.totalorder %s44, 1
      %s46 = scalar_select %p45, 0, %s44
      %s47 = sadd.s32 1, %s31
      %s48 = scalar_select %p45, %s47, %s31
      %p49 = scmp.ge.s32.totalorder %s48, 2
      %s50 = scalar_select %p49, 0, %s48
      %s51 = ssub.s32 %s31, %s50
      %s52 = ssub.s32 %s33, %s42
      %s53 = sor.u32 %s51, %s52
      %p54 = scmp.eq.s32.totalorder %s53, 0
      %s56 = sadd.s32 %s55, 1
      %s57 = scalar_select %p54, %s55, %s56
      %p60 = pneg %p54
      %p61 = scmp.eq.s32.totalorder %s24, 1
      %p62 = por %p60, %p61
      %p63 = scmp.ne.s32.totalorder %s55, %s58
      %p64 = scmp.eq.s32.totalorder %s24, 0
      %p65 = por %p63, %p64
      %p66 = scmp.ne.s32.totalorder %s55, %s58
      %p67 = scmp.eq.s32.totalorder %s29, 1
      %p68 = por %p66, %p67
      %p69 = scmp.ne.s32.totalorder %s58, %s59
      %p70 = scmp.eq.s32.totalorder %s29, 0
      %p71 = por %p69, %p70
      %p72 = scmp.ne.s32.totalorder %s58, %s59
      %p73 = scmp.eq.s32.totalorder %s30, 1
      %p74 = por %p72, %p73
      %p76 = scmp.ne.s32.totalorder %s59, %s75
      %p77 = scmp.eq.s32.totalorder %s30, 0
      %p78 = por %p76, %p77
      %s79 = ssub.s32 %s31, %s50
      %s80 = ssub.s32 %s33, %s42
      %s81 = sor.u32 %s79, %s80
      %p82 = scmp.eq.s32.totalorder %s81, 0
      %s84 = sadd.s32 %s83, 1
      %s85 = scalar_select %p82, %s83, %s84
      %p88 = pneg %p82
      %p89 = scmp.eq.s32.totalorder %s24, 1
      %p90 = por %p88, %p89
      %p91 = scmp.ne.s32.totalorder %s83, %s86
      %p92 = scmp.eq.s32.totalorder %s24, 0
      %p93 = por %p91, %p92
      %p94 = scmp.ne.s32.totalorder %s83, %s86
      %p95 = scmp.eq.s32.totalorder %s29, 1
      %p96 = por %p94, %p95
      %p97 = scmp.ne.s32.totalorder %s86, %s87
      %p98 = scmp.eq.s32.totalorder %s29, 0
      %p99 = por %p97, %p98
      %p100 = scmp.ne.s32.totalorder %s86, %s87
      %p101 = scmp.eq.s32.totalorder %s30, 1
      %p102 = por %p100, %p101
      %p104 = scmp.ne.s32.totalorder %s87, %s103
      %p105 = scmp.eq.s32.totalorder %s30, 0
      %p106 = por %p104, %p105
      %s108 = sadd.s32 %s107, 1
      %p111 = scmp.eq.s32.totalorder %s24, 1
      %p112 = scmp.ne.s32.totalorder %s107, %s109
      %p113 = scmp.eq.s32.totalorder %s24, 0
      %p114 = por %p112, %p113
      %p115 = scmp.ne.s32.totalorder %s107, %s109
      %p116 = scmp.eq.s32.totalorder %s29, 1
      %p117 = por %p115, %p116
      %p118 = scmp.ne.s32.totalorder %s109, %s110
      %p119 = scmp.eq.s32.totalorder %s29, 0
      %p120 = por %p118, %p119
      %p121 = scmp.ne.s32.totalorder %s109, %s110
      %p122 = scmp.eq.s32.totalorder %s30, 1
      %p123 = por %p121, %p122
      %p125 = scmp.ne.s32.totalorder %s110, %s124
      %p126 = scmp.eq.s32.totalorder %s30, 0
      %p127 = por %p125, %p126
      %s128 = ssub.s32 %s31, %s50
      %s129 = ssub.s32 %s32, %s46
      %s130 = sor.u32 %s128, %s129
      %s131 = ssub.s32 %s33, %s42
      %s132 = sor.u32 %s130, %s131
      %p133 = scmp.eq.s32.totalorder %s132, 0
      %s135 = sadd.s32 %s134, 1
      %s136 = scalar_select %p133, %s134, %s135
      %p139 = pneg %p133
      %p140 = scmp.eq.s32.totalorder %s24, 1
      %p141 = por %p139, %p140
      %p142 = scmp.ne.s32.totalorder %s134, %s137
      %p143 = scmp.eq.s32.totalorder %s24, 0
      %p144 = por %p142, %p143
      %p145 = scmp.ne.s32.totalorder %s134, %s137
      %p146 = scmp.eq.s32.totalorder %s29, 1
      %p147 = por %p145, %p146
      %p148 = scmp.ne.s32.totalorder %s137, %s138
      %p149 = scmp.eq.s32.totalorder %s29, 0
      %p150 = por %p148, %p149
      %p151 = scmp.ne.s32.totalorder %s137, %s138
      %p152 = scmp.eq.s32.totalorder %s30, 1
      %p153 = por %p151, %p152
      %p155 = scmp.ne.s32.totalorder %s138, %s154
      %p156 = scmp.eq.s32.totalorder %s30, 0
      %p157 = por %p155, %p156
      %p158 = scmp.le.s32.totalorder 1, %s24
      %p159 = scmp.lt.s32.totalorder %s24, 3
      %p160 = pnand %p158, %p159
      %p161 = pneg %p160
      // Predicated region
      $region9: #{tpu_custom_call.1} parent=5 // pred_check
        _
      $region10: #{tpu_custom_call.1} parent=5 // pred_check_branch
        %163 = sbr.rel (%p160) target = $region12
      $region11: #{tpu_custom_call.1} parent=5 // pred_region
        %s164 = ssub.s32 %s24, 1
        // Predicated region
        $region13: #{tpu_custom_call.1} parent=11 // pred_check
          %p165 = pneg %p120
        $region14: #{tpu_custom_call.1} parent=11 // pred_check_branch
          %167 = sbr.rel (%p165) target = $region16
        $region15: #{tpu_custom_call.1} parent=11 // pred_region
          _
        $region16: #{tpu_custom_call.1} parent=11 // pred_fallthru
          _
      $region12: #{tpu_custom_call.1} parent=5 // pred_fallthru
        _
      %p168 = scmp.lt.s32.totalorder %s24, 2
      // Predicated region
      $region17: #{tpu_custom_call.1} parent=5 // pred_check
        %p169 = pneg %p168
      $region18: #{tpu_custom_call.1} parent=5 // pred_check_branch
        %171 = sbr.rel (%p169) target = $region20
      $region19: #{tpu_custom_call.1} parent=5 // pred_region
        // Predicated region
        $region21: #{tpu_custom_call.1} parent=19 // pred_check
          %p172 = pneg %p65
        $region22: #{tpu_custom_call.1} parent=19 // pred_check_branch
          %174 = sbr.rel (%p172) target = $region24
        $region23: #{tpu_custom_call.1} parent=19 // pred_region
          %p175 = scmp.lt.s32.totalorder %s31, 1
          %s176 = scalar_select %p175, %s31, 1
          %p177 = scmp.lt.s32.totalorder %s33, 0
          %s178 = scalar_select %p177, %s33, 0
          %s179 = sadd.s32 %s178, %s176
          %s180 = smul.addr %s179, 8
          %s181 = scalar_lea.vmem %s2, %s180
        $region24: #{tpu_custom_call.1} parent=19 // pred_fallthru
          _
        // Predicated region
        $region25: #{tpu_custom_call.1} parent=19 // pred_check
          %p182 = pneg %p93
        $region26: #{tpu_custom_call.1} parent=19 // pred_check_branch
          %184 = sbr.rel (%p182) target = $region28
        $region27: #{tpu_custom_call.1} parent=19 // pred_region
          %p185 = scmp.lt.s32.totalorder %s31, 1
          %s186 = scalar_select %p185, %s31, 1
          %p187 = scmp.lt.s32.totalorder %s33, 0
          %s188 = scalar_select %p187, %s33, 0
          %s189 = sadd.s32 %s188, %s186
          %s190 = smul.addr %s189, 8
          %s191 = scalar_lea.vmem %s3, %s190
        $region28: #{tpu_custom_call.1} parent=19 // pred_fallthru
          _
      $region20: #{tpu_custom_call.1} parent=5 // pred_fallthru
        _
      %p192 = scmp.le.s32.totalorder 1, %s24
      %p193 = scmp.lt.s32.totalorder %s24, 3
      %p194 = pnand %p192, %p193
      %p195 = pneg %p194
      // Predicated region
      $region29: #{tpu_custom_call.1} parent=5 // pred_check
        _
      $region30: #{tpu_custom_call.1} parent=5 // pred_check_branch
        %197 = sbr.rel (%p194) target = $region32
      $region31: #{tpu_custom_call.1} parent=5 // pred_region
        %s198 = ssub.s32 %s24, 1
        %p199 = scmp.lt.s32.totalorder %s34, 1
        %s200 = scalar_select %p199, %s34, 1
        %p201 = scmp.lt.s32.totalorder %s36, 0
        %s202 = scalar_select %p201, %s36, 0
        %s203 = sadd.s32 %s202, %s200
        %s204 = smul.addr %s203, 8
        %s205 = scalar_lea.vmem %s2, %s204
        %p206 = pneg %p71
        %p207 = pneg %p68
        %p208 = scmp.lt.s32.totalorder %s34, 1
        %s209 = scalar_select %p208, %s34, 1
        %p210 = scmp.lt.s32.totalorder %s36, 0
        %s211 = scalar_select %p210, %s36, 0
        %s212 = sadd.s32 %s211, %s209
        %s213 = smul.addr %s212, 8
        %s214 = scalar_lea.vmem %s3, %s213
        %p215 = pneg %p99
        %p216 = pneg %p96
        %p217 = pneg %p120
        %p218 = pneg %p117
        %p219 = pneg %p150
        %p220 = pneg %p147
        %s221 = sand.u32 %s137, 1
        %s222 = scalar_lea.sflag [#allocation6], %s221
        %s223 = sand.u32 %s137, 1
        %s224 = smul.addr %s223, 64
        %s225 = scalar_lea.vmem [#allocation5], %s224
        %p226 = scmp.lt.s32.totalorder %s34, 1
        %s227 = scalar_select %p226, %s34, 1
        %p228 = scmp.lt.s32.totalorder %s36, 0
        %s229 = scalar_select %p228, %s36, 0
        %s230 = sadd.s32 %s229, %s227
        %s231 = smul.addr %s230, 8
        %s232 = scalar_lea.vmem %s2, %s231
        %p233 = scmp.lt.s32.totalorder %s34, 1
        %s234 = scalar_select %p233, %s34, 1
        %p235 = scmp.lt.s32.totalorder %s36, 0
        %s236 = scalar_select %p235, %s36, 0
        %s237 = sadd.s32 %s236, %s234
        %s238 = smul.addr %s237, 8
        %s239 = scalar_lea.vmem %s3, %s238
        %s240 = smul.u32 8, %s35
        %s241 = smul.u32 %s35, 8
        %v242 = vld [vmem:[%s232] sm:$0xff]
        %v243 = vld [vmem:[%s239] sm:$0xff]
        %v244 = vlaneseq
        %v245 = vand.u32 %v244, 127
        %s246 = sshra.s32 %s241, 7
        %s247 = sand.u32 %s241, 127
        %s248 = sadd.s32 %s246, %s34
        %s249 = smul.u32 %s248, 128
        %s250 = sshra.s32 %s241, 7
        %s251 = sand.u32 %s241, 127
        %s252 = sadd.s32 %s249, %s251
        %s253 = sld [smem:[#allocation3 + %s252]]
        %s254 = sld [smem:[#allocation4 + %s252]]
        %v255 = vstv %s253
        %v256 = vadd.s32 %v255, %v242
        %257 = vset.pattern.permute.xlu0 0
        %258 = vperm.xlu0 %257, %v256
        %v259 = vpop.permute.xlu0 %258
        %vm260 = vcmp.eq.s32.totalorder %v245, %v259
        %v261 = vsel %vm260, 1, 0
        %v262 = vcvt.s32.f32 %v261
        %v263 = vadd.s32 %v255, %v243
        %264 = vset.pattern.permute.xlu0 0
        %265 = vperm.xlu0 %264, %v263
        %v266 = vpop.permute.xlu0 %265
        %vm267 = vcmp.eq.s32.totalorder %v245, %v266
        %v268 = vsel %vm267, 1, 0
        %v269 = vcvt.s32.f32 %v268
        %v270 = vstv %s254
        %v271 = vadd.s32 %v270, %v242
        %272 = vset.pattern.permute.xlu0 0
        %273 = vperm.xlu0 %272, %v271
        %v274 = vpop.permute.xlu0 %273
        %vm275 = vcmp.eq.s32.totalorder %v245, %v274
        %v276 = vsel %vm275, 1, 0
        %v277 = vcvt.s32.f32 %v276
        %v278 = vadd.s32 %v270, %v243
        %279 = vset.pattern.permute.xlu0 0
        %280 = vperm.xlu0 %279, %v278
        %v281 = vpop.permute.xlu0 %280
        %vm282 = vcmp.eq.s32.totalorder %v245, %v281
        %v283 = vsel %vm282, 1, 0
        %v284 = vcvt.s32.f32 %v283
        %v285 = vld [vmem:[%s4] sm:$0xff]
        %v286 = vld [vmem:[%s4 + $0x8] sm:$0xff]
        %v287 = vld [vmem:[%s4 + $0x10] sm:$0xff]
        %v288 = vld [vmem:[%s4 + $0x18] sm:$0xff]
        %v289 = vld [vmem:[%s4 + $0x20] sm:$0xff]
        %v290 = vld [vmem:[%s4 + $0x28] sm:$0xff]
        %v291 = vld [vmem:[%s4 + $0x30] sm:$0xff]
        %v292 = vld [vmem:[%s4 + $0x38] sm:$0xff]
        %v293 = vld [vmem:[%s4 + $0x40] sm:$0xff]
        %v294 = vld [vmem:[%s4 + $0x48] sm:$0xff]
        %v295 = vld [vmem:[%s4 + $0x50] sm:$0xff]
        %v296 = vld [vmem:[%s4 + $0x58] sm:$0xff]
        %v297 = vld [vmem:[%s4 + $0x60] sm:$0xff]
        %v298 = vld [vmem:[%s4 + $0x68] sm:$0xff]
        %v299 = vld [vmem:[%s4 + $0x70] sm:$0xff]
        %v300 = vld [vmem:[%s4 + $0x78] sm:$0xff]
        %s301 = scalar_lea.vmem %s4, 128
        %v302 = vld [vmem:[%s301] sm:$0xff]
        %v303 = vld [vmem:[%s301 + $0x8] sm:$0xff]
        %v304 = vld [vmem:[%s301 + $0x10] sm:$0xff]
        %v305 = vld [vmem:[%s301 + $0x18] sm:$0xff]
        %v306 = vld [vmem:[%s301 + $0x20] sm:$0xff]
        %v307 = vld [vmem:[%s301 + $0x28] sm:$0xff]
        %v308 = vld [vmem:[%s301 + $0x30] sm:$0xff]
        %v309 = vld [vmem:[%s301 + $0x38] sm:$0xff]
        %v310 = vld [vmem:[%s301 + $0x40] sm:$0xff]
        %v311 = vld [vmem:[%s301 + $0x48] sm:$0xff]
        %v312 = vld [vmem:[%s301 + $0x50] sm:$0xff]
        %v313 = vld [vmem:[%s301 + $0x58] sm:$0xff]
        %v314 = vld [vmem:[%s301 + $0x60] sm:$0xff]
        %v315 = vld [vmem:[%s301 + $0x68] sm:$0xff]
        %v316 = vld [vmem:[%s301 + $0x70] sm:$0xff]
        %v317 = vld [vmem:[%s301 + $0x78] sm:$0xff]
        %318 = vmatprep.subr.mxu0 0.0
        %319 = vmatpush1.msra.mxu0 %v302
        %320 = vmatprep.subr.mxu0 0.0
        %321 = vmatpush1.msra.mxu0 %v303
        %322 = vmatprep.subr.mxu0 0.0
        %323 = vmatpush1.msra.mxu0 %v304
        %324 = vmatprep.subr.mxu0 0.0
        %325 = vmatpush1.msra.mxu0 %v305
        %326 = vmatprep.subr.mxu0 0.0
        %327 = vmatpush1.msra.mxu0 %v306
        %328 = vmatprep.subr.mxu0 0.0
        %329 = vmatpush1.msra.mxu0 %v307
        %330 = vmatprep.subr.mxu0 0.0
        %331 = vmatpush1.msra.mxu0 %v308
        %332 = vmatprep.subr.mxu0 0.0
        %333 = vmatpush1.msra.mxu0 %v309
        %334 = vmatprep.subr.mxu0 0.0
        %335 = vmatpush1.msra.mxu0 %v310
        %336 = vmatprep.subr.mxu0 0.0
        %337 = vmatpush1.msra.mxu0 %v311
        %338 = vmatprep.subr.mxu0 0.0
        %339 = vmatpush1.msra.mxu0 %v312
        %340 = vmatprep.subr.mxu0 0.0
        %341 = vmatpush1.msra.mxu0 %v313
        %342 = vmatprep.subr.mxu0 0.0
        %343 = vmatpush1.msra.mxu0 %v314
        %344 = vmatprep.subr.mxu0 0.0
        %345 = vmatpush1.msra.mxu0 %v315
        %346 = vmatprep.subr.mxu0 0.0
        %347 = vmatpush1.msra.mxu0 %v316
        %348 = vmatprep.subr.mxu0 0.0
        %349 = vmatpush1.msra.mxu0 %v317
        %350 = vmatprep.subr.mxu0 0.0
        %351 = vmatpush1.msra.mxu0 0.0
        %352 = vmatprep.subr.mxu0 0.0
        %353 = vmatpush1.msra.mxu0 0.0
        %354 = vmatprep.subr.mxu0 0.0
        %355 = vmatpush1.msra.mxu0 0.0
        %356 = vmatprep.subr.mxu0 0.0
        %357 = vmatpush1.msra.mxu0 0.0
        %358 = vmatprep.subr.mxu0 0.0
        %359 = vmatpush1.msra.mxu0 0.0
        %360 = vmatprep.subr.mxu0 0.0
        %361 = vmatpush1.msra.mxu0 0.0
        %362 = vmatprep.subr.mxu0 0.0
        %363 = vmatpush1.msra.mxu0 0.0
        %364 = vmatprep.subr.mxu0 0.0
        %365 = vmatpush1.msra.mxu0 0.0
        %366 = vmatprep.subr.mxu0 0.0
        %367 = vmatpush1.msra.mxu0 0.0
        %368 = vmatprep.subr.mxu0 0.0
        %369 = vmatpush1.msra.mxu0 0.0
        %370 = vmatprep.subr.mxu0 0.0
        %371 = vmatpush1.msra.mxu0 0.0
        %372 = vmatprep.subr.mxu0 0.0
        %373 = vmatpush1.msra.mxu0 0.0
        %374 = vmatprep.subr.mxu0 0.0
        %375 = vmatpush1.msra.mxu0 0.0
        %376 = vmatprep.subr.mxu0 0.0
        %377 = vmatpush1.msra.mxu0 0.0
        %378 = vmatprep.subr.mxu0 0.0
        %379 = vmatpush1.msra.mxu0 0.0
        %380 = vmatprep.subr.mxu0 0.0
        %381 = vmatpush1.msra.mxu0 0.0
        %382 = vmatprep.mubr.f32.mxu0 0.0
        %383 = vmatmul.mubr.f32.gmra.mrb[0].mxu0 %v269
        %v384 = vpop.f32.mrb[0].mxu0
        %v385 = vadd.f32 0.0, %v384
        %v386 = vpop.f32.mrb[0].mxu0
        %387 = vdwg.mxu0
        %388 = vmatprep.subr.mxu0 0.0
        %389 = vmatpush1.msra.mxu0 %v285
        %390 = vmatprep.subr.mxu0 0.0
        %391 = vmatpush1.msra.mxu0 %v286
        %392 = vmatprep.subr.mxu0 0.0
        %393 = vmatpush1.msra.mxu0 %v287
        %394 = vmatprep.subr.mxu0 0.0
        %395 = vmatpush1.msra.mxu0 %v288
        %396 = vmatprep.subr.mxu0 0.0
        %397 = vmatpush1.msra.mxu0 %v289
        %398 = vmatprep.subr.mxu0 0.0
        %399 = vmatpush1.msra.mxu0 %v290
        %400 = vmatprep.subr.mxu0 0.0
        %401 = vmatpush1.msra.mxu0 %v291
        %402 = vmatprep.subr.mxu0 0.0
        %403 = vmatpush1.msra.mxu0 %v292
        %404 = vmatprep.subr.mxu0 0.0
        %405 = vmatpush1.msra.mxu0 %v293
        %406 = vmatprep.subr.mxu0 0.0
        %407 = vmatpush1.msra.mxu0 %v294
        %408 = vmatprep.subr.mxu0 0.0
        %409 = vmatpush1.msra.mxu0 %v295
        %410 = vmatprep.subr.mxu0 0.0
        %411 = vmatpush1.msra.mxu0 %v296
        %412 = vmatprep.subr.mxu0 0.0
        %413 = vmatpush1.msra.mxu0 %v297
        %414 = vmatprep.subr.mxu0 0.0
        %415 = vmatpush1.msra.mxu0 %v298
        %416 = vmatprep.subr.mxu0 0.0
        %417 = vmatpush1.msra.mxu0 %v299
        %418 = vmatprep.subr.mxu0 0.0
        %419 = vmatpush1.msra.mxu0 %v300
        %420 = vmatprep.subr.mxu0 0.0
        %421 = vmatpush1.msra.mxu0 0.0
        %422 = vmatprep.subr.mxu0 0.0
        %423 = vmatpush1.msra.mxu0 0.0
        %424 = vmatprep.subr.mxu0 0.0
        %425 = vmatpush1.msra.mxu0 0.0
        %426 = vmatprep.subr.mxu0 0.0
        %427 = vmatpush1.msra.mxu0 0.0
        %428 = vmatprep.subr.mxu0 0.0
        %429 = vmatpush1.msra.mxu0 0.0
        %430 = vmatprep.subr.mxu0 0.0
        %431 = vmatpush1.msra.mxu0 0.0
        %432 = vmatprep.subr.mxu0 0.0
        %433 = vmatpush1.msra.mxu0 0.0
        %434 = vmatprep.subr.mxu0 0.0
        %435 = vmatpush1.msra.mxu0 0.0
        %436 = vmatprep.subr.mxu0 0.0
        %437 = vmatpush1.msra.mxu0 0.0
        %438 = vmatprep.subr.mxu0 0.0
        %439 = vmatpush1.msra.mxu0 0.0
        %440 = vmatprep.subr.mxu0 0.0
        %441 = vmatpush1.msra.mxu0 0.0
        %442 = vmatprep.subr.mxu0 0.0
        %443 = vmatpush1.msra.mxu0 0.0
        %444 = vmatprep.subr.mxu0 0.0
        %445 = vmatpush1.msra.mxu0 0.0
        %446 = vmatprep.subr.mxu0 0.0
        %447 = vmatpush1.msra.mxu0 0.0
        %448 = vmatprep.subr.mxu0 0.0
        %449 = vmatpush1.msra.mxu0 0.0
        %450 = vmatprep.subr.mxu0 0.0
        %451 = vmatpush1.msra.mxu0 0.0
        %452 = vmatprep.mubr.f32.mxu0 0.0
        %453 = vmatmul.mubr.f32.gmra.mrb[0].mxu0 %v262
        %v454 = vpop.f32.mrb[0].mxu0
        %v455 = vadd.f32 %v385, %v454
        %v456 = vpop.f32.mrb[0].mxu0
        %457 = vdwg.mxu0
        %s458 = scalar_lea.vmem %s4, 256
        %v459 = vld [vmem:[%s458] sm:$0xff]
        %v460 = vld [vmem:[%s458 + $0x8] sm:$0xff]
        %v461 = vld [vmem:[%s458 + $0x10] sm:$0xff]
        %v462 = vld [vmem:[%s458 + $0x18] sm:$0xff]
        %v463 = vld [vmem:[%s458 + $0x20] sm:$0xff]
        %v464 = vld [vmem:[%s458 + $0x28] sm:$0xff]
        %v465 = vld [vmem:[%s458 + $0x30] sm:$0xff]
        %v466 = vld [vmem:[%s458 + $0x38] sm:$0xff]
        %v467 = vld [vmem:[%s458 + $0x40] sm:$0xff]
        %v468 = vld [vmem:[%s458 + $0x48] sm:$0xff]
        %v469 = vld [vmem:[%s458 + $0x50] sm:$0xff]
        %v470 = vld [vmem:[%s458 + $0x58] sm:$0xff]
        %v471 = vld [vmem:[%s458 + $0x60] sm:$0xff]
        %v472 = vld [vmem:[%s458 + $0x68] sm:$0xff]
        %v473 = vld [vmem:[%s458 + $0x70] sm:$0xff]
        %v474 = vld [vmem:[%s458 + $0x78] sm:$0xff]
        %475 = vmatprep.subr.mxu0 0.0
        %476 = vmatpush1.msra.mxu0 %v459
        %477 = vmatprep.subr.mxu0 0.0
        %478 = vmatpush1.msra.mxu0 %v460
        %479 = vmatprep.subr.mxu0 0.0
        %480 = vmatpush1.msra.mxu0 %v461
        %481 = vmatprep.subr.mxu0 0.0
        %482 = vmatpush1.msra.mxu0 %v462
        %483 = vmatprep.subr.mxu0 0.0
        %484 = vmatpush1.msra.mxu0 %v463
        %485 = vmatprep.subr.mxu0 0.0
        %486 = vmatpush1.msra.mxu0 %v464
        %487 = vmatprep.subr.mxu0 0.0
        %488 = vmatpush1.msra.mxu0 %v465
        %489 = vmatprep.subr.mxu0 0.0
        %490 = vmatpush1.msra.mxu0 %v466
        %491 = vmatprep.subr.mxu0 0.0
        %492 = vmatpush1.msra.mxu0 %v467
        %493 = vmatprep.subr.mxu0 0.0
        %494 = vmatpush1.msra.mxu0 %v468
        %495 = vmatprep.subr.mxu0 0.0
        %496 = vmatpush1.msra.mxu0 %v469
        %497 = vmatprep.subr.mxu0 0.0
        %498 = vmatpush1.msra.mxu0 %v470
        %499 = vmatprep.subr.mxu0 0.0
        %500 = vmatpush1.msra.mxu0 %v471
        %501 = vmatprep.subr.mxu0 0.0
        %502 = vmatpush1.msra.mxu0 %v472
        %503 = vmatprep.subr.mxu0 0.0
        %504 = vmatpush1.msra.mxu0 %v473
        %505 = vmatprep.subr.mxu0 0.0
        %506 = vmatpush1.msra.mxu0 %v474
        %507 = vmatprep.subr.mxu0 0.0
        %508 = vmatpush1.msra.mxu0 0.0
        %509 = vmatprep.subr.mxu0 0.0
        %510 = vmatpush1.msra.mxu0 0.0
        %511 = vmatprep.subr.mxu0 0.0
        %512 = vmatpush1.msra.mxu0 0.0
        %513 = vmatprep.subr.mxu0 0.0
        %514 = vmatpush1.msra.mxu0 0.0
        %515 = vmatprep.subr.mxu0 0.0
        %516 = vmatpush1.msra.mxu0 0.0
        %517 = vmatprep.subr.mxu0 0.0
        %518 = vmatpush1.msra.mxu0 0.0
        %519 = vmatprep.subr.mxu0 0.0
        %520 = vmatpush1.msra.mxu0 0.0
        %521 = vmatprep.subr.mxu0 0.0
        %522 = vmatpush1.msra.mxu0 0.0
        %523 = vmatprep.subr.mxu0 0.0
        %524 = vmatpush1.msra.mxu0 0.0
        %525 = vmatprep.subr.mxu0 0.0
        %526 = vmatpush1.msra.mxu0 0.0
        %527 = vmatprep.subr.mxu0 0.0
        %528 = vmatpush1.msra.mxu0 0.0
        %529 = vmatprep.subr.mxu0 0.0
        %530 = vmatpush1.msra.mxu0 0.0
        %531 = vmatprep.subr.mxu0 0.0
        %532 = vmatpush1.msra.mxu0 0.0
        %533 = vmatprep.subr.mxu0 0.0
        %534 = vmatpush1.msra.mxu0 0.0
        %535 = vmatprep.subr.mxu0 0.0
        %536 = vmatpush1.msra.mxu0 0.0
        %537 = vmatprep.subr.mxu0 0.0
        %538 = vmatpush1.msra.mxu0 0.0
        %539 = vmatprep.mubr.f32.mxu0 0.0
        %540 = vmatmul.mubr.f32.gmra.mrb[0].mxu0 %v277
        %v541 = vpop.f32.mrb[0].mxu0
        %v542 = vadd.f32 0.0, %v541
        %v543 = vpop.f32.mrb[0].mxu0
        %544 = vdwg.mxu0
        %v545 = vadd.f32 %v455, %v542
        %s546 = scalar_lea.vmem %s4, 384
        %v547 = vld [vmem:[%s546] sm:$0xff]
        %v548 = vld [vmem:[%s546 + $0x8] sm:$0xff]
        %v549 = vld [vmem:[%s546 + $0x10] sm:$0xff]
        %v550 = vld [vmem:[%s546 + $0x18] sm:$0xff]
        %v551 = vld [vmem:[%s546 + $0x20] sm:$0xff]
        %v552 = vld [vmem:[%s546 + $0x28] sm:$0xff]
        %v553 = vld [vmem:[%s546 + $0x30] sm:$0xff]
        %v554 = vld [vmem:[%s546 + $0x38] sm:$0xff]
        %v555 = vld [vmem:[%s546 + $0x40] sm:$0xff]
        %v556 = vld [vmem:[%s546 + $0x48] sm:$0xff]
        %v557 = vld [vmem:[%s546 + $0x50] sm:$0xff]
        %v558 = vld [vmem:[%s546 + $0x58] sm:$0xff]
        %v559 = vld [vmem:[%s546 + $0x60] sm:$0xff]
        %v560 = vld [vmem:[%s546 + $0x68] sm:$0xff]
        %v561 = vld [vmem:[%s546 + $0x70] sm:$0xff]
        %v562 = vld [vmem:[%s546 + $0x78] sm:$0xff]
        %563 = vmatprep.subr.mxu0 0.0
        %564 = vmatpush1.msra.mxu0 %v547
        %565 = vmatprep.subr.mxu0 0.0
        %566 = vmatpush1.msra.mxu0 %v548
        %567 = vmatprep.subr.mxu0 0.0
        %568 = vmatpush1.msra.mxu0 %v549
        %569 = vmatprep.subr.mxu0 0.0
        %570 = vmatpush1.msra.mxu0 %v550
        %571 = vmatprep.subr.mxu0 0.0
        %572 = vmatpush1.msra.mxu0 %v551
        %573 = vmatprep.subr.mxu0 0.0
        %574 = vmatpush1.msra.mxu0 %v552
        %575 = vmatprep.subr.mxu0 0.0
        %576 = vmatpush1.msra.mxu0 %v553
        %577 = vmatprep.subr.mxu0 0.0
        %578 = vmatpush1.msra.mxu0 %v554
        %579 = vmatprep.subr.mxu0 0.0
        %580 = vmatpush1.msra.mxu0 %v555
        %581 = vmatprep.subr.mxu0 0.0
        %582 = vmatpush1.msra.mxu0 %v556
        %583 = vmatprep.subr.mxu0 0.0
        %584 = vmatpush1.msra.mxu0 %v557
        %585 = vmatprep.subr.mxu0 0.0
        %586 = vmatpush1.msra.mxu0 %v558
        %587 = vmatprep.subr.mxu0 0.0
        %588 = vmatpush1.msra.mxu0 %v559
        %589 = vmatprep.subr.mxu0 0.0
        %590 = vmatpush1.msra.mxu0 %v560
        %591 = vmatprep.subr.mxu0 0.0
        %592 = vmatpush1.msra.mxu0 %v561
        %593 = vmatprep.subr.mxu0 0.0
        %594 = vmatpush1.msra.mxu0 %v562
        %595 = vmatprep.subr.mxu0 0.0
        %596 = vmatpush1.msra.mxu0 0.0
        %597 = vmatprep.subr.mxu0 0.0
        %598 = vmatpush1.msra.mxu0 0.0
        %599 = vmatprep.subr.mxu0 0.0
        %600 = vmatpush1.msra.mxu0 0.0
        %601 = vmatprep.subr.mxu0 0.0
        %602 = vmatpush1.msra.mxu0 0.0
        %603 = vmatprep.subr.mxu0 0.0
        %604 = vmatpush1.msra.mxu0 0.0
        %605 = vmatprep.subr.mxu0 0.0
        %606 = vmatpush1.msra.mxu0 0.0
        %607 = vmatprep.subr.mxu0 0.0
        %608 = vmatpush1.msra.mxu0 0.0
        %609 = vmatprep.subr.mxu0 0.0
        %610 = vmatpush1.msra.mxu0 0.0
        %611 = vmatprep.subr.mxu0 0.0
        %612 = vmatpush1.msra.mxu0 0.0
        %613 = vmatprep.subr.mxu0 0.0
        %614 = vmatpush1.msra.mxu0 0.0
        %615 = vmatprep.subr.mxu0 0.0
        %616 = vmatpush1.msra.mxu0 0.0
        %617 = vmatprep.subr.mxu0 0.0
        %618 = vmatpush1.msra.mxu0 0.0
        %619 = vmatprep.subr.mxu0 0.0
        %620 = vmatpush1.msra.mxu0 0.0
        %621 = vmatprep.subr.mxu0 0.0
        %622 = vmatpush1.msra.mxu0 0.0
        %623 = vmatprep.subr.mxu0 0.0
        %624 = vmatpush1.msra.mxu0 0.0
        %625 = vmatprep.subr.mxu0 0.0
        %626 = vmatpush1.msra.mxu0 0.0
        %627 = vmatprep.mubr.f32.mxu0 0.0
        %628 = vmatmul.mubr.f32.gmra.mrb[0].mxu0 %v284
        %v629 = vpop.f32.mrb[0].mxu0
        %v630 = vadd.f32 0.0, %v629
        %v631 = vpop.f32.mrb[0].mxu0
        %632 = vdwg.mxu0
        %v633 = vadd.f32 %v545, %v630
        %v634 = vmax.f32 %v633, 0.0
        %vm635 = vcmask 261120
        %636 = vst.msk [vmem:[%s225] sm:$0xff] %vm635, %v634
        %s637 = sadd.s32 %s241, 1
        %s638 = sshra.s32 %s637, 7
        %s639 = sand.u32 %s637, 127
        %s640 = sadd.s32 %s638, %s34
        %s641 = smul.u32 %s640, 128
        %s642 = sshra.s32 %s637, 7
        %s643 = sand.u32 %s637, 127
        %s644 = sadd.s32 %s641, %s643
        %s645 = sld [smem:[#allocation3 + %s644]]
        %s646 = sld [smem:[#allocation4 + %s644]]
        %v647 = vstv %s645
        %v648 = vadd.s32 %v647, %v242
        %649 = vset.pattern.permute.xlu0 0
        %650 = vperm.xlu0 %649, %v648
        %v651 = vpop.permute.xlu0 %650
        %vm652 = vcmp.eq.s32.totalorder %v245, %v651
        %v653 = vsel %vm652, 1, 0
        %v654 = vcvt.s32.f32 %v653
        %v655 = vadd.s32 %v647, %v243
        %656 = vset.pattern.permute.xlu0 0
        %657 = vperm.xlu0 %656, %v655
        %v658 = vpop.permute.xlu0 %657
        %vm659 = vcmp.eq.s32.totalorder %v245, %v658
        %v660 = vsel %vm659, 1, 0
        %v661 = vcvt.s32.f32 %v660
        %v662 = vstv %s646
        %v663 = vadd.s32 %v662, %v242
        %664 = vset.pattern.permute.xlu0 0
        %665 = vperm.xlu0 %664, %v663
        %v666 = vpop.permute.xlu0 %665
        %vm667 = vcmp.eq.s32.totalorder %v245, %v666
        %v668 = vsel %vm667, 1, 0
        %v669 = vcvt.s32.f32 %v668
        %v670 = vadd.s32 %v662, %v243
        %671 = vset.pattern.permute.xlu0 0
        %672 = vperm.xlu0 %671, %v670
        %v673 = vpop.permute.xlu0 %672
        %vm674 = vcmp.eq.s32.totalorder %v245, %v673
        %v675 = vsel %vm674, 1, 0
        %v676 = vcvt.s32.f32 %v675
        %v677 = vld [vmem:[%s4] sm:$0xff]
        %v678 = vld [vmem:[%s4 + $0x8] sm:$0xff]
        %v679 = vld [vmem:[%s4 + $0x10] sm:$0xff]
        %v680 = vld [vmem:[%s4 + $0x18] sm:$0xff]
        %v681 = vld [vmem:[%s4 + $0x20] sm:$0xff]
        %v682 = vld [vmem:[%s4 + $0x28] sm:$0xff]
        %v683 = vld [vmem:[%s4 + $0x30] sm:$0xff]
        %v684 = vld [vmem:[%s4 + $0x38] sm:$0xff]
        %v685 = vld [vmem:[%s4 + $0x40] sm:$0xff]
        %v686 = vld [vmem:[%s4 + $0x48] sm:$0xff]
        %v687 = vld [vmem:[%s4 + $0x50] sm:$0xff]
        %v688 = vld [vmem:[%s4 + $0x58] sm:$0xff]
        %v689 = vld [vmem:[%s4 + $0x60] sm:$0xff]
        %v690 = vld [vmem:[%s4 + $0x68] sm:$0xff]
        %v691 = vld [vmem:[%s4 + $0x70] sm:$0xff]
        %v692 = vld [vmem:[%s4 + $0x78] sm:$0xff]
        %v693 = vld [vmem:[%s301] sm:$0xff]
        %v694 = vld [vmem:[%s301 + $0x8] sm:$0xff]
        %v695 = vld [vmem:[%s301 + $0x10] sm:$0xff]
        %v696 = vld [vmem:[%s301 + $0x18] sm:$0xff]
        %v697 = vld [vmem:[%s301 + $0x20] sm:$0xff]
        %v698 = vld [vmem:[%s301 + $0x28] sm:$0xff]
        %v699 = vld [vmem:[%s301 + $0x30] sm:$0xff]
        %v700 = vld [vmem:[%s301 + $0x38] sm:$0xff]
        %v701 = vld [vmem:[%s301 + $0x40] sm:$0xff]
        %v702 = vld [vmem:[%s301 + $0x48] sm:$0xff]
        %v703 = vld [vmem:[%s301 + $0x50] sm:$0xff]
        %v704 = vld [vmem:[%s301 + $0x58] sm:$0xff]
        %v705 = vld [vmem:[%s301 + $0x60] sm:$0xff]
        %v706 = vld [vmem:[%s301 + $0x68] sm:$0xff]
        %v707 = vld [vmem:[%s301 + $0x70] sm:$0xff]
        %v708 = vld [vmem:[%s301 + $0x78] sm:$0xff]
        %709 = vmatprep.subr.mxu0 0.0
        %710 = vmatpush1.msra.mxu0 %v693
        %711 = vmatprep.subr.mxu0 0.0
        %712 = vmatpush1.msra.mxu0 %v694
        %713 = vmatprep.subr.mxu0 0.0
        %714 = vmatpush1.msra.mxu0 %v695
        %715 = vmatprep.subr.mxu0 0.0
        %716 = vmatpush1.msra.mxu0 %v696
        %717 = vmatprep.subr.mxu0 0.0
        %718 = vmatpush1.msra.mxu0 %v697
        %719 = vmatprep.subr.mxu0 0.0
        %720 = vmatpush1.msra.mxu0 %v698
        %721 = vmatprep.subr.mxu0 0.0
        %722 = vmatpush1.msra.mxu0 %v699
        %723 = vmatprep.subr.mxu0 0.0
        %724 = vmatpush1.msra.mxu0 %v700
        %725 = vmatprep.subr.mxu0 0.0
        %726 = vmatpush1.msra.mxu0 %v701
        %727 = vmatprep.subr.mxu0 0.0
        %728 = vmatpush1.msra.mxu0 %v702
        %729 = vmatprep.subr.mxu0 0.0
        %730 = vmatpush1.msra.mxu0 %v703
        %731 = vmatprep.subr.mxu0 0.0
        %732 = vmatpush1.msra.mxu0 %v704
        %733 = vmatprep.subr.mxu0 0.0
        %734 = vmatpush1.msra.mxu0 %v705
        %735 = vmatprep.subr.mxu0 0.0
        %736 = vmatpush1.msra.mxu0 %v706
        %737 = vmatprep.subr.mxu0 0.0
        %738 = vmatpush1.msra.mxu0 %v707
        %739 = vmatprep.subr.mxu0 0.0
        %740 = vmatpush1.msra.mxu0 %v708
        %741 = vmatprep.subr.mxu0 0.0
        %742 = vmatpush1.msra.mxu0 0.0
        %743 = vmatprep.subr.mxu0 0.0
        %744 = vmatpush1.msra.mxu0 0.0
        %745 = vmatprep.subr.mxu0 0.0
        %746 = vmatpush1.msra.mxu0 0.0
        %747 = vmatprep.subr.mxu0 0.0
        %748 = vmatpush1.msra.mxu0 0.0
        %749 = vmatprep.subr.mxu0 0.0
        %750 = vmatpush1.msra.mxu0 0.0
        %751 = vmatprep.subr.mxu0 0.0
        %752 = vmatpush1.msra.mxu0 0.0
        %753 = vmatprep.subr.mxu0 0.0
        %754 = vmatpush1.msra.mxu0 0.0
        %755 = vmatprep.subr.mxu0 0.0
        %756 = vmatpush1.msra.mxu0 0.0
        %757 = vmatprep.subr.mxu0 0.0
        %758 = vmatpush1.msra.mxu0 0.0
        %759 = vmatprep.subr.mxu0 0.0
        %760 = vmatpush1.msra.mxu0 0.0
        %761 = vmatprep.subr.mxu0 0.0
        %762 = vmatpush1.msra.mxu0 0.0
        %763 = vmatprep.subr.mxu0 0.0
        %764 = vmatpush1.msra.mxu0 0.0
        %765 = vmatprep.subr.mxu0 0.0
        %766 = vmatpush1.msra.mxu0 0.0
        %767 = vmatprep.subr.mxu0 0.0
        %768 = vmatpush1.msra.mxu0 0.0
        %769 = vmatprep.subr.mxu0 0.0
        %770 = vmatpush1.msra.mxu0 0.0
        %771 = vmatprep.subr.mxu0 0.0
        %772 = vmatpush1.msra.mxu0 0.0
        %773 = vmatprep.mubr.f32.mxu0 0.0
        %774 = vmatmul.mubr.f32.gmra.mrb[0].mxu0 %v661
        %v775 = vpop.f32.mrb[0].mxu0
        %v776 = vadd.f32 0.0, %v775
        %v777 = vpop.f32.mrb[0].mxu0
        %778 = vdwg.mxu0
        %779 = vmatprep.subr.mxu0 0.0
        %780 = vmatpush1.msra.mxu0 %v677
        %781 = vmatprep.subr.mxu0 0.0
        %782 = vmatpush1.msra.mxu0 %v678
        %783 = vmatprep.subr.mxu0 0.0
        %784 = vmatpush1.msra.mxu0 %v679
        %785 = vmatprep.subr.mxu0 0.0
        %786 = vmatpush1.msra.mxu0 %v680
        %787 = vmatprep.subr.mxu0 0.0
        %788 = vmatpush1.msra.mxu0 %v681
        %789 = vmatprep.subr.mxu0 0.0
        %790 = vmatpush1.msra.mxu0 %v682
        %791 = vmatprep.subr.mxu0 0.0
        %792 = vmatpush1.msra.mxu0 %v683
        %793 = vmatprep.subr.mxu0 0.0
        %794 = vmatpush1.msra.mxu0 %v684
        %795 = vmatprep.subr.mxu0 0.0
        %796 = vmatpush1.msra.mxu0 %v685
        %797 = vmatprep.subr.mxu0 0.0
        %798 = vmatpush1.msra.mxu0 %v686
        %799 = vmatprep.subr.mxu0 0.0
        %800 = vmatpush1.msra.mxu0 %v687
        %801 = vmatprep.subr.mxu0 0.0
        %802 = vmatpush1.msra.mxu0 %v688
        %803 = vmatprep.subr.mxu0 0.0
        %804 = vmatpush1.msra.mxu0 %v689
        %805 = vmatprep.subr.mxu0 0.0
        %806 = vmatpush1.msra.mxu0 %v690
        %807 = vmatprep.subr.mxu0 0.0
        %808 = vmatpush1.msra.mxu0 %v691
        %809 = vmatprep.subr.mxu0 0.0
        %810 = vmatpush1.msra.mxu0 %v692
        %811 = vmatprep.subr.mxu0 0.0
        %812 = vmatpush1.msra.mxu0 0.0
        %813 = vmatprep.subr.mxu0 0.0
        %814 = vmatpush1.msra.mxu0 0.0
        %815 = vmatprep.subr.mxu0 0.0
        %816 = vmatpush1.msra.mxu0 0.0
        %817 = vmatprep.subr.mxu0 0.0
        %818 = vmatpush1.msra.mxu0 0.0
        %819 = vmatprep.subr.mxu0 0.0
        %820 = vmatpush1.msra.mxu0 0.0
        %821 = vmatprep.subr.mxu0 0.0
        %822 = vmatpush1.msra.mxu0 0.0
        %823 = vmatprep.subr.mxu0 0.0
        %824 = vmatpush1.msra.mxu0 0.0
        %825 = vmatprep.subr.mxu0 0.0
        %826 = vmatpush1.msra.mxu0 0.0
        %827 = vmatprep.subr.mxu0 0.0
        %828 = vmatpush1.msra.mxu0 0.0
        %829 = vmatprep.subr.mxu0 0.0
        %830 = vmatpush1.msra.mxu0 0.0
        %831 = vmatprep.subr.mxu0 0.0
        %832 = vmatpush1.msra.mxu0 0.0
        %833 = vmatprep.subr.mxu0 0.0
        %834 = vmatpush1.msra.mxu0 0.0
        %835 = vmatprep.subr.mxu0 0.0
        %836 = vmatpush1.msra.mxu0 0.0
        %837 = vmatprep.subr.mxu0 0.0
        %838 = vmatpush1.msra.mxu0 0.0
        %839 = vmatprep.subr.mxu0 0.0
        %840 = vmatpush1.msra.mxu0 0.0
        %841 = vmatprep.subr.mxu0 0.0
        %842 = vmatpush1.msra.mxu0 0.0
        %843 = vmatprep.mubr.f32.mxu0 0.0
        %844 = vmatmul.mubr.f32.gmra.mrb[0].mxu0 %v654
        %v845 = vpop.f32.mrb[0].mxu0
        %v846 = vadd.f32 %v776, %v845
        %v847 = vpop.f32.mrb[0].mxu0
        %848 = vdwg.mxu0
        %v849 = vld [vmem:[%s458] sm:$0xff]
        %v850 = vld [vmem:[%s458 + $0x8] sm:$0xff]
        %v851 = vld [vmem:[%s458 + $0x10] sm:$0xff]
        %v852 = vld [vmem:[%s458 + $0x18] sm:$0xff]
        %v853 = vld [vmem:[%s458 + $0x20] sm:$0xff]
        %v854 = vld [vmem:[%s458 + $0x28] sm:$0xff]
        %v855 = vld [vmem:[%s458 + $0x30] sm:$0xff]
        %v856 = vld [vmem:[%s458 + $0x38] sm:$0xff]
        %v857 = vld [vmem:[%s458 + $0x40] sm:$0xff]
        %v858 = vld [vmem:[%s458 + $0x48] sm:$0xff]
        %v859 = vld [vmem:[%s458 + $0x50] sm:$0xff]
        %v860 = vld [vmem:[%s458 + $0x58] sm:$0xff]
        %v861 = vld [vmem:[%s458 + $0x60] sm:$0xff]
        %v862 = vld [vmem:[%s458 + $0x68] sm:$0xff]
        %v863 = vld [vmem:[%s458 + $0x70] sm:$0xff]
        %v864 = vld [vmem:[%s458 + $0x78] sm:$0xff]
        %865 = vmatprep.subr.mxu0 0.0
        %866 = vmatpush1.msra.mxu0 %v849
        %867 = vmatprep.subr.mxu0 0.0
        %868 = vmatpush1.msra.mxu0 %v850
        %869 = vmatprep.subr.mxu0 0.0
        %870 = vmatpush1.msra.mxu0 %v851
        %871 = vmatprep.subr.mxu0 0.0
        %872 = vmatpush1.msra.mxu0 %v852
        %873 = vmatprep.subr.mxu0 0.0
        %874 = vmatpush1.msra.mxu0 %v853
        %875 = vmatprep.subr.mxu0 0.0
        %876 = vmatpush1.msra.mxu0 %v854
        %877 = vmatprep.subr.mxu0 0.0
        %878 = vmatpush1.msra.mxu0 %v855
        %879 = vmatprep.subr.mxu0 0.0
        %880 = vmatpush1.msra.mxu0 %v856
        %881 = vmatprep.subr.mxu0 0.0
        %882 = vmatpush1.msra.mxu0 %v857
        %883 = vmatprep.subr.mxu0 0.0
        %884 = vmatpush1.msra.mxu0 %v858
        %885 = vmatprep.subr.mxu0 0.0
        %886 = vmatpush1.msra.mxu0 %v859
        %887 = vmatprep.subr.mxu0 0.0
        %888 = vmatpush1.msra.mxu0 %v860
        %889 = vmatprep.subr.mxu0 0.0
        %890 = vmatpush1.msra.mxu0 %v861
        %891 = vmatprep.subr.mxu0 0.0
        %892 = vmatpush1.msra.mxu0 %v862
        %893 = vmatprep.subr.mxu0 0.0
        %894 = vmatpush1.msra.mxu0 %v863
        %895 = vmatprep.subr.mxu0 0.0
        %896 = vmatpush1.msra.mxu0 %v864
        %897 = vmatprep.subr.mxu0 0.0
        %898 = vmatpush1.msra.mxu0 0.0
        %899 = vmatprep.subr.mxu0 0.0
        %900 = vmatpush1.msra.mxu0 0.0
        %901 = vmatprep.subr.mxu0 0.0
        %902 = vmatpush1.msra.mxu0 0.0
        %903 = vmatprep.subr.mxu0 0.0
        %904 = vmatpush1.msra.mxu0 0.0
        %905 = vmatprep.subr.mxu0 0.0
        %906 = vmatpush1.msra.mxu0 0.0
        %907 = vmatprep.subr.mxu0 0.0
        %908 = vmatpush1.msra.mxu0 0.0
        %909 = vmatprep.subr.mxu0 0.0
        %910 = vmatpush1.msra.mxu0 0.0
        %911 = vmatprep.subr.mxu0 0.0
        %912 = vmatpush1.msra.mxu0 0.0
        %913 = vmatprep.subr.mxu0 0.0
        %914 = vmatpush1.msra.mxu0 0.0
        %915 = vmatprep.subr.mxu0 0.0
        %916 = vmatpush1.msra.mxu0 0.0
        %917 = vmatprep.subr.mxu0 0.0
        %918 = vmatpush1.msra.mxu0 0.0
        %919 = vmatprep.subr.mxu0 0.0
        %920 = vmatpush1.msra.mxu0 0.0
        %921 = vmatprep.subr.mxu0 0.0
        %922 = vmatpush1.msra.mxu0 0.0
        %923 = vmatprep.subr.mxu0 0.0
        %924 = vmatpush1.msra.mxu0 0.0
        %925 = vmatprep.subr.mxu0 0.0
        %926 = vmatpush1.msra.mxu0 0.0
        %927 = vmatprep.subr.mxu0 0.0
        %928 = vmatpush1.msra.mxu0 0.0
        %929 = vmatprep.mubr.f32.mxu0 0.0
        %930 = vmatmul.mubr.f32.gmra.mrb[0].mxu0 %v669
        %v931 = vpop.f32.mrb[0].mxu0
        %v932 = vadd.f32 0.0, %v931
        %v933 = vpop.f32.mrb[0].mxu0
        %934 = vdwg.mxu0
        %v935 = vadd.f32 %v846, %v932
        %v936 = vld [vmem:[%s546] sm:$0xff]
        %v937 = vld [vmem:[%s546 + $0x8] sm:$0xff]
        %v938 = vld [vmem:[%s546 + $0x10] sm:$0xff]
        %v939 = vld [vmem:[%s546 + $0x18] sm:$0xff]
        %v940 = vld [vmem:[%s546 + $0x20] sm:$0xff]
        %v941 = vld [vmem:[%s546 + $0x28] sm:$0xff]
        %v942 = vld [vmem:[%s546 + $0x30] sm:$0xff]
        %v943 = vld [vmem:[%s546 + $0x38] sm:$0xff]
        %v944 = vld [vmem:[%s546 + $0x40] sm:$0xff]
        %v945 = vld [vmem:[%s546 + $0x48] sm:$0xff]
        %v946 = vld [vmem:[%s546 + $0x50] sm:$0xff]
        %v947 = vld [vmem:[%s546 + $0x58] sm:$0xff]
        %v948 = vld [vmem:[%s546 + $0x60] sm:$0xff]
        %v949 = vld [vmem:[%s546 + $0x68] sm:$0xff]
        %v950 = vld [vmem:[%s546 + $0x70] sm:$0xff]
        %v951 = vld [vmem:[%s546 + $0x78] sm:$0xff]
        %952 = vmatprep.subr.mxu0 0.0
        %953 = vmatpush1.msra.mxu0 %v936
        %954 = vmatprep.subr.mxu0 0.0
        %955 = vmatpush1.msra.mxu0 %v937
        %956 = vmatprep.subr.mxu0 0.0
        %957 = vmatpush1.msra.mxu0 %v938
        %958 = vmatprep.subr.mxu0 0.0
        %959 = vmatpush1.msra.mxu0 %v939
        %960 = vmatprep.subr.mxu0 0.0
        %961 = vmatpush1.msra.mxu0 %v940
        %962 = vmatprep.subr.mxu0 0.0
        %963 = vmatpush1.msra.mxu0 %v941
        %964 = vmatprep.subr.mxu0 0.0
        %965 = vmatpush1.msra.mxu0 %v942
        %966 = vmatprep.subr.mxu0 0.0
        %967 = vmatpush1.msra.mxu0 %v943
        %968 = vmatprep.subr.mxu0 0.0
        %969 = vmatpush1.msra.mxu0 %v944
        %970 = vmatprep.subr.mxu0 0.0
        %971 = vmatpush1.msra.mxu0 %v945
        %972 = vmatprep.subr.mxu0 0.0
        %973 = vmatpush1.msra.mxu0 %v946
        %974 = vmatprep.subr.mxu0 0.0
        %975 = vmatpush1.msra.mxu0 %v947
        %976 = vmatprep.subr.mxu0 0.0
        %977 = vmatpush1.msra.mxu0 %v948
        %978 = vmatprep.subr.mxu0 0.0
        %979 = vmatpush1.msra.mxu0 %v949
        %980 = vmatprep.subr.mxu0 0.0
        %981 = vmatpush1.msra.mxu0 %v950
        %982 = vmatprep.subr.mxu0 0.0
        %983 = vmatpush1.msra.mxu0 %v951
        %984 = vmatprep.subr.mxu0 0.0
        %985 = vmatpush1.msra.mxu0 0.0
        %986 = vmatprep.subr.mxu0 0.0
        %987 = vmatpush1.msra.mxu0 0.0
        %988 = vmatprep.subr.mxu0 0.0
        %989 = vmatpush1.msra.mxu0 0.0
        %990 = vmatprep.subr.mxu0 0.0
        %991 = vmatpush1.msra.mxu0 0.0
        %992 = vmatprep.subr.mxu0 0.0
        %993 = vmatpush1.msra.mxu0 0.0
        %994 = vmatprep.subr.mxu0 0.0
        %995 = vmatpush1.msra.mxu0 0.0
        %996 = vmatprep.subr.mxu0 0.0
        %997 = vmatpush1.msra.mxu0 0.0
        %998 = vmatprep.subr.mxu0 0.0
        %999 = vmatpush1.msra.mxu0 0.0
        %1000 = vmatprep.subr.mxu0 0.0
        %1001 = vmatpush1.msra.mxu0 0.0
        %1002 = vmatprep.subr.mxu0 0.0
        %1003 = vmatpush1.msra.mxu0 0.0
        %1004 = vmatprep.subr.mxu0 0.0
        %1005 = vmatpush1.msra.mxu0 0.0
        %1006 = vmatprep.subr.mxu0 0.0
        %1007 = vmatpush1.msra.mxu0 0.0
        %1008 = vmatprep.subr.mxu0 0.0
        %1009 = vmatpush1.msra.mxu0 0.0
        %1010 = vmatprep.subr.mxu0 0.0
        %1011 = vmatpush1.msra.mxu0 0.0
        %1012 = vmatprep.subr.mxu0 0.0
        %1013 = vmatpush1.msra.mxu0 0.0
        %1014 = vmatprep.subr.mxu0 0.0
        %1015 = vmatpush1.msra.mxu0 0.0
        %1016 = vmatprep.mubr.f32.mxu0 0.0
        %1017 = vmatmul.mubr.f32.gmra.mrb[0].mxu0 %v676
        %v1018 = vpop.f32.mrb[0].mxu0
        %v1019 = vadd.f32 0.0, %v1018
        %v1020 = vpop.f32.mrb[0].mxu0
        %1021 = vdwg.mxu0
        %v1022 = vadd.f32 %v935, %v1019
        %v1023 = vmax.f32 %v1022, 0.0
        %s1024 = scalar_lea.vmem %s225, 8 [#allocation5]
        %1025 = vst.msk [vmem:[%s1024] sm:$0xff] %vm635, %v1023
        %s1026 = sadd.s32 %s241, 2
        %s1027 = sshra.s32 %s1026, 7
        %s1028 = sand.u32 %s1026, 127
        %s1029 = sadd.s32 %s1027, %s34
        %s1030 = smul.u32 %s1029, 128
        %s1031 = sshra.s32 %s1026, 7
        %s1032 = sand.u32 %s1026, 127
        %s1033 = sadd.s32 %s1030, %s1032
        %s1034 = sld [smem:[#allocation3 + %s1033]]
        %s1035 = sld [smem:[#allocation4 + %s1033]]
        %v1036 = vstv %s1034
        %v1037 = vadd.s32 %v1036, %v242
        %1038 = vset.pattern.permute.xlu0 0
        %1039 = vperm.xlu0 %1038, %v1037
        %v1040 = vpop.permute.xlu0 %1039
        %vm1041 = vcmp.eq.s32.totalorder %v245, %v1040
        %v1042 = vsel %vm1041, 1, 0
        %v1043 = vcvt.s32.f32 %v1042
        %v1044 = vadd.s32 %v1036, %v243
        %1045 = vset.pattern.permute.xlu0 0
        %1046 = vperm.xlu0 %1045, %v1044
        %v1047 = vpop.permute.xlu0 %1046
        %vm1048 = vcmp.eq.s32.totalorder %v245, %v1047
        %v1049 = vsel %vm1048, 1, 0
        %v1050 = vcvt.s32.f32 %v1049
        %v1051 = vstv %s1035
        %v1052 = vadd.s32 %v1051, %v242
        %1053 = vset.pattern.permute.xlu0 0
        %1054 = vperm.xlu0 %1053, %v1052
        %v1055 = vpop.permute.xlu0 %1054
        %vm1056 = vcmp.eq.s32.totalorder %v245, %v1055
        %v1057 = vsel %vm1056, 1, 0
        %v1058 = vcvt.s32.f32 %v1057
        %v1059 = vadd.s32 %v1051, %v243
        %1060 = vset.pattern.permute.xlu0 0
        %1061 = vperm.xlu0 %1060, %v1059
        %v1062 = vpop.permute.xlu0 %1061
        %vm1063 = vcmp.eq.s32.totalorder %v245, %v1062
        %v1064 = vsel %vm1063, 1, 0
        %v1065 = vcvt.s32.f32 %v1064
        %v1066 = vld [vmem:[%s4] sm:$0xff]
        %v1067 = vld [vmem:[%s4 + $0x8] sm:$0xff]
        %v1068 = vld [vmem:[%s4 + $0x10] sm:$0xff]
        %v1069 = vld [vmem:[%s4 + $0x18] sm:$0xff]
        %v1070 = vld [vmem:[%s4 + $0x20] sm:$0xff]
        %v1071 = vld [vmem:[%s4 + $0x28] sm:$0xff]
        %v1072 = vld [vmem:[%s4 + $0x30] sm:$0xff]
        %v1073 = vld [vmem:[%s4 + $0x38] sm:$0xff]
        %v1074 = vld [vmem:[%s4 + $0x40] sm:$0xff]
        %v1075 = vld [vmem:[%s4 + $0x48] sm:$0xff]
        %v1076 = vld [vmem:[%s4 + $0x50] sm:$0xff]
        %v1077 = vld [vmem:[%s4 + $0x58] sm:$0xff]
        %v1078 = vld [vmem:[%s4 + $0x60] sm:$0xff]
        %v1079 = vld [vmem:[%s4 + $0x68] sm:$0xff]
        %v1080 = vld [vmem:[%s4 + $0x70] sm:$0xff]
        %v1081 = vld [vmem:[%s4 + $0x78] sm:$0xff]
        %v1082 = vld [vmem:[%s301] sm:$0xff]
        %v1083 = vld [vmem:[%s301 + $0x8] sm:$0xff]
        %v1084 = vld [vmem:[%s301 + $0x10] sm:$0xff]
        %v1085 = vld [vmem:[%s301 + $0x18] sm:$0xff]
        %v1086 = vld [vmem:[%s301 + $0x20] sm:$0xff]
        %v1087 = vld [vmem:[%s301 + $0x28] sm:$0xff]
        %v1088 = vld [vmem:[%s301 + $0x30] sm:$0xff]
        %v1089 = vld [vmem:[%s301 + $0x38] sm:$0xff]
        %v1090 = vld [vmem:[%s301 + $0x40] sm:$0xff]
        %v1091 = vld [vmem:[%s301 + $0x48] sm:$0xff]
        %v1092 = vld [vmem:[%s301 + $0x50] sm:$0xff]
        %v1093 = vld [vmem:[%s301 + $0x58] sm:$0xff]
        %v1094 = vld [vmem:[%s301 + $0x60] sm:$0xff]
        %v1095 = vld [vmem:[%s301 + $0x68] sm:$0xff]
        %v1096 = vld [vmem:[%s301 + $0x70] sm:$0xff]
        %v1097 = vld [vmem:[%s301 + $0x78] sm:$0xff]
        %1098 = vmatprep.subr.mxu0 0.0
        %1099 = vmatpush1.msra.mxu0 %v1082
        %1100 = vmatprep.subr.mxu0 0.0
        %1101 = vmatpush1.msra.mxu0 %v1083
        %1102 = vmatprep.subr.mxu0 0.0
        %1103 = vmatpush1.msra.mxu0 %v1084
        %1104 = vmatprep.subr.mxu0 0.0
        %1105 = vmatpush1.msra.mxu0 %v1085
        %1106 = vmatprep.subr.mxu0 0.0
        %1107 = vmatpush1.msra.mxu0 %v1086
        %1108 = vmatprep.subr.mxu0 0.0
        %1109 = vmatpush1.msra.mxu0 %v1087
        %1110 = vmatprep.subr.mxu0 0.0
        %1111 = vmatpush1.msra.mxu0 %v1088
        %1112 = vmatprep.subr.mxu0 0.0
        %1113 = vmatpush1.msra.mxu0 %v1089
        %1114 = vmatprep.subr.mxu0 0.0
        %1115 = vmatpush1.msra.mxu0 %v1090
        %1116 = vmatprep.subr.mxu0 0.0
        %1117 = vmatpush1.msra.mxu0 %v1091
        %1118 = vmatprep.subr.mxu0 0.0
        %1119 = vmatpush1.msra.mxu0 %v1092
        %1120 = vmatprep.subr.mxu0 0.0
        %1121 = vmatpush1.msra.mxu0 %v1093
        %1122 = vmatprep.subr.mxu0 0.0
        %1123 = vmatpush1.msra.mxu0 %v1094
        %1124 = vmatprep.subr.mxu0 0.0
        %1125 = vmatpush1.msra.mxu0 %v1095
        %1126 = vmatprep.subr.mxu0 0.0
        %1127 = vmatpush1.msra.mxu0 %v1096
        %1128 = vmatprep.subr.mxu0 0.0
        %1129 = vmatpush1.msra.mxu0 %v1097
        %1130 = vmatprep.subr.mxu0 0.0
        %1131 = vmatpush1.msra.mxu0 0.0
        %1132 = vmatprep.subr.mxu0 0.0
        %1133 = vmatpush1.msra.mxu0 0.0
        %1134 = vmatprep.subr.mxu0 0.0
        %1135 = vmatpush1.msra.mxu0 0.0
        %1136 = vmatprep.subr.mxu0 0.0
        %1137 = vmatpush1.msra.mxu0 0.0
        %1138 = vmatprep.subr.mxu0 0.0
        %1139 = vmatpush1.msra.mxu0 0.0
        %1140 = vmatprep.subr.mxu0 0.0
        %1141 = vmatpush1.msra.mxu0 0.0
        %1142 = vmatprep.subr.mxu0 0.0
        %1143 = vmatpush1.msra.mxu0 0.0
        %1144 = vmatprep.subr.mxu0 0.0
        %1145 = vmatpush1.msra.mxu0 0.0
        %1146 = vmatprep.subr.mxu0 0.0
        %1147 = vmatpush1.msra.mxu0 0.0
        %1148 = vmatprep.subr.mxu0 0.0
        %1149 = vmatpush1.msra.mxu0 0.0
        %1150 = vmatprep.subr.mxu0 0.0
        %1151 = vmatpush1.msra.mxu0 0.0
        %1152 = vmatprep.subr.mxu0 0.0
        %1153 = vmatpush1.msra.mxu0 0.0
        %1154 = vmatprep.subr.mxu0 0.0
        %1155 = vmatpush1.msra.mxu0 0.0
        %1156 = vmatprep.subr.mxu0 0.0
        %1157 = vmatpush1.msra.mxu0 0.0
        %1158 = vmatprep.subr.mxu0 0.0
        %1159 = vmatpush1.msra.mxu0 0.0
        %1160 = vmatprep.subr.mxu0 0.0
        %1161 = vmatpush1.msra.mxu0 0.0
        %1162 = vmatprep.mubr.f32.mxu0 0.0
        %1163 = vmatmul.mubr.f32.gmra.mrb[0].mxu0 %v1050
        %v1164 = vpop.f32.mrb[0].mxu0
        %v1165 = vadd.f32 0.0, %v1164
        %v1166 = vpop.f32.mrb[0].mxu0
        %1167 = vdwg.mxu0
        %1168 = vmatprep.subr.mxu0 0.0
        %1169 = vmatpush1.msra.mxu0 %v1066
        %1170 = vmatprep.subr.mxu0 0.0
        %1171 = vmatpush1.msra.mxu0 %v1067
        %1172 = vmatprep.subr.mxu0 0.0
        %1173 = vmatpush1.msra.mxu0 %v1068
        %1174 = vmatprep.subr.mxu0 0.0
        %1175 = vmatpush1.msra.mxu0 %v1069
        %1176 = vmatprep.subr.mxu0 0.0
        %1177 = vmatpush1.msra.mxu0 %v1070
        %1178 = vmatprep.subr.mxu0 0.0
        %1179 = vmatpush1.msra.mxu0 %v1071
        %1180 = vmatprep.subr.mxu0 0.0
        %1181 = vmatpush1.msra.mxu0 %v1072
        %1182 = vmatprep.subr.mxu0 0.0
        %1183 = vmatpush1.msra.mxu0 %v1073
        %1184 = vmatprep.subr.mxu0 0.0
        %1185 = vmatpush1.msra.mxu0 %v1074
        %1186 = vmatprep.subr.mxu0 0.0
        %1187 = vmatpush1.msra.mxu0 %v1075
        %1188 = vmatprep.subr.mxu0 0.0
        %1189 = vmatpush1.msra.mxu0 %v1076
        %1190 = vmatprep.subr.mxu0 0.0
        %1191 = vmatpush1.msra.mxu0 %v1077
        %1192 = vmatprep.subr.mxu0 0.0
        %1193 = vmatpush1.msra.mxu0 %v1078
        %1194 = vmatprep.subr.mxu0 0.0
        %1195 = vmatpush1.msra.mxu0 %v1079
        %1196 = vmatprep.subr.mxu0 0.0
        %1197 = vmatpush1.msra.mxu0 %v1080
        %1198 = vmatprep.subr.mxu0 0.0
        %1199 = vmatpush1.msra.mxu0 %v1081
        %1200 = vmatprep.subr.mxu0 0.0
        %1201 = vmatpush1.msra.mxu0 0.0
        %1202 = vmatprep.subr.mxu0 0.0
        %1203 = vmatpush1.msra.mxu0 0.0
        %1204 = vmatprep.subr.mxu0 0.0
        %1205 = vmatpush1.msra.mxu0 0.0
        %1206 = vmatprep.subr.mxu0 0.0
        %1207 = vmatpush1.msra.mxu0 0.0
        %1208 = vmatprep.subr.mxu0 0.0
        %1209 = vmatpush1.msra.mxu0 0.0
        %1210 = vmatprep.subr.mxu0 0.0
        %1211 = vmatpush1.msra.mxu0 0.0
        %1212 = vmatprep.subr.mxu0 0.0
        %1213 = vmatpush1.msra.mxu0 0.0
        %1214 = vmatprep.subr.mxu0 0.0
        %1215 = vmatpush1.msra.mxu0 0.0
        %1216 = vmatprep.subr.mxu0 0.0
        %1217 = vmatpush1.msra.mxu0 0.0
        %1218 = vmatprep.subr.mxu0 0.0
        %1219 = vmatpush1.msra.mxu0 0.0
        %1220 = vmatprep.subr.mxu0 0.0
        %1221 = vmatpush1.msra.mxu0 0.0
        %1222 = vmatprep.subr.mxu0 0.0
        %1223 = vmatpush1.msra.mxu0 0.0
        %1224 = vmatprep.subr.mxu0 0.0
        %1225 = vmatpush1.msra.mxu0 0.0
        %1226 = vmatprep.subr.mxu0 0.0
        %1227 = vmatpush1.msra.mxu0 0.0
        %1228 = vmatprep.subr.mxu0 0.0
        %1229 = vmatpush1.msra.mxu0 0.0
        %1230 = vmatprep.subr.mxu0 0.0
        %1231 = vmatpush1.msra.mxu0 0.0
        %1232 = vmatprep.mubr.f32.mxu0 0.0
        %1233 = vmatmul.mubr.f32.gmra.mrb[0].mxu0 %v1043
        %v1234 = vpop.f32.mrb[0].mxu0
        %v1235 = vadd.f32 %v1165, %v1234
        %v1236 = vpop.f32.mrb[0].mxu0
        %1237 = vdwg.mxu0
        %v1238 = vld [vmem:[%s458] sm:$0xff]
        %v1239 = vld [vmem:[%s458 + $0x8] sm:$0xff]
        %v1240 = vld [vmem:[%s458 + $0x10] sm:$0xff]
        %v1241 = vld [vmem:[%s458 + $0x18] sm:$0xff]
        %v1242 = vld [vmem:[%s458 + $0x20] sm:$0xff]
        %v1243 = vld [vmem:[%s458 + $0x28] sm:$0xff]
        %v1244 = vld [vmem:[%s458 + $0x30] sm:$0xff]
        %v1245 = vld [vmem:[%s458 + $0x38] sm:$0xff]
        %v1246 = vld [vmem:[%s458 + $0x40] sm:$0xff]
        %v1247 = vld [vmem:[%s458 + $0x48] sm:$0xff]
        %v1248 = vld [vmem:[%s458 + $0x50] sm:$0xff]
        %v1249 = vld [vmem:[%s458 + $0x58] sm:$0xff]
        %v1250 = vld [vmem:[%s458 + $0x60] sm:$0xff]
        %v1251 = vld [vmem:[%s458 + $0x68] sm:$0xff]
        %v1252 = vld [vmem:[%s458 + $0x70] sm:$0xff]
        %v1253 = vld [vmem:[%s458 + $0x78] sm:$0xff]
        %1254 = vmatprep.subr.mxu0 0.0
        %1255 = vmatpush1.msra.mxu0 %v1238
        %1256 = vmatprep.subr.mxu0 0.0
        %1257 = vmatpush1.msra.mxu0 %v1239
        %1258 = vmatprep.subr.mxu0 0.0
        %1259 = vmatpush1.msra.mxu0 %v1240
        %1260 = vmatprep.subr.mxu0 0.0
        %1261 = vmatpush1.msra.mxu0 %v1241
        %1262 = vmatprep.subr.mxu0 0.0
        %1263 = vmatpush1.msra.mxu0 %v1242
        %1264 = vmatprep.subr.mxu0 0.0
        %1265 = vmatpush1.msra.mxu0 %v1243
        %1266 = vmatprep.subr.mxu0 0.0
        %1267 = vmatpush1.msra.mxu0 %v1244
        %1268 = vmatprep.subr.mxu0 0.0
        %1269 = vmatpush1.msra.mxu0 %v1245
        %1270 = vmatprep.subr.mxu0 0.0
        %1271 = vmatpush1.msra.mxu0 %v1246
        %1272 = vmatprep.subr.mxu0 0.0
        %1273 = vmatpush1.msra.mxu0 %v1247
        %1274 = vmatprep.subr.mxu0 0.0
        %1275 = vmatpush1.msra.mxu0 %v1248
        %1276 = vmatprep.subr.mxu0 0.0
        %1277 = vmatpush1.msra.mxu0 %v1249
        %1278 = vmatprep.subr.mxu0 0.0
        %1279 = vmatpush1.msra.mxu0 %v1250
        %1280 = vmatprep.subr.mxu0 0.0
        %1281 = vmatpush1.msra.mxu0 %v1251
        %1282 = vmatprep.subr.mxu0 0.0
        %1283 = vmatpush1.msra.mxu0 %v1252
        %1284 = vmatprep.subr.mxu0 0.0
        %1285 = vmatpush1.msra.mxu0 %v1253
        %1286 = vmatprep.subr.mxu0 0.0
        %1287 = vmatpush1.msra.mxu0 0.0
        %1288 = vmatprep.subr.mxu0 0.0
        %1289 = vmatpush1.msra.mxu0 0.0
        %1290 = vmatprep.subr.mxu0 0.0
        %1291 = vmatpush1.msra.mxu0 0.0
        %1292 = vmatprep.subr.mxu0 0.0
        %1293 = vmatpush1.msra.mxu0 0.0
        %1294 = vmatprep.subr.mxu0 0.0
        %1295 = vmatpush1.msra.mxu0 0.0
        %1296 = vmatprep.subr.mxu0 0.0
        %1297 = vmatpush1.msra.mxu0 0.0
        %1298 = vmatprep.subr.mxu0 0.0
        %1299 = vmatpush1.msra.mxu0 0.0
        %1300 = vmatprep.subr.mxu0 0.0
        %1301 = vmatpush1.msra.mxu0 0.0
        %1302 = vmatprep.subr.mxu0 0.0
        %1303 = vmatpush1.msra.mxu0 0.0
        %1304 = vmatprep.subr.mxu0 0.0
        %1305 = vmatpush1.msra.mxu0 0.0
        %1306 = vmatprep.subr.mxu0 0.0
        %1307 = vmatpush1.msra.mxu0 0.0
        %1308 = vmatprep.subr.mxu0 0.0
        %1309 = vmatpush1.msra.mxu0 0.0
        %1310 = vmatprep.subr.mxu0 0.0
        %1311 = vmatpush1.msra.mxu0 0.0
        %1312 = vmatprep.subr.mxu0 0.0
        %1313 = vmatpush1.msra.mxu0 0.0
        %1314 = vmatprep.subr.mxu0 0.0
        %1315 = vmatpush1.msra.mxu0 0.0
        %1316 = vmatprep.subr.mxu0 0.0
        %1317 = vmatpush1.msra.mxu0 0.0
        %1318 = vmatprep.mubr.f32.mxu0 0.0
        %1319 = vmatmul.mubr.f32.gmra.mrb[0].mxu0 %v1058
        %v1320 = vpop.f32.mrb[0].mxu0
        %v1321 = vadd.f32 0.0, %v1320
        %v1322 = vpop.f32.mrb[0].mxu0
        %1323 = vdwg.mxu0
        %v1324 = vadd.f32 %v1235, %v1321
        %v1325 = vld [vmem:[%s546] sm:$0xff]
        %v1326 = vld [vmem:[%s546 + $0x8] sm:$0xff]
        %v1327 = vld [vmem:[%s546 + $0x10] sm:$0xff]
        %v1328 = vld [vmem:[%s546 + $0x18] sm:$0xff]
        %v1329 = vld [vmem:[%s546 + $0x20] sm:$0xff]
        %v1330 = vld [vmem:[%s546 + $0x28] sm:$0xff]
        %v1331 = vld [vmem:[%s546 + $0x30] sm:$0xff]
        %v1332 = vld [vmem:[%s546 + $0x38] sm:$0xff]
        %v1333 = vld [vmem:[%s546 + $0x40] sm:$0xff]
        %v1334 = vld [vmem:[%s546 + $0x48] sm:$0xff]
        %v1335 = vld [vmem:[%s546 + $0x50] sm:$0xff]
        %v1336 = vld [vmem:[%s546 + $0x58] sm:$0xff]
        %v1337 = vld [vmem:[%s546 + $0x60] sm:$0xff]
        %v1338 = vld [vmem:[%s546 + $0x68] sm:$0xff]
        %v1339 = vld [vmem:[%s546 + $0x70] sm:$0xff]
        %v1340 = vld [vmem:[%s546 + $0x78] sm:$0xff]
        %1341 = vmatprep.subr.mxu0 0.0
        %1342 = vmatpush1.msra.mxu0 %v1325
        %1343 = vmatprep.subr.mxu0 0.0
        %1344 = vmatpush1.msra.mxu0 %v1326
        %1345 = vmatprep.subr.mxu0 0.0
        %1346 = vmatpush1.msra.mxu0 %v1327
        %1347 = vmatprep.subr.mxu0 0.0
        %1348 = vmatpush1.msra.mxu0 %v1328
        %1349 = vmatprep.subr.mxu0 0.0
        %1350 = vmatpush1.msra.mxu0 %v1329
        %1351 = vmatprep.subr.mxu0 0.0
        %1352 = vmatpush1.msra.mxu0 %v1330
        %1353 = vmatprep.subr.mxu0 0.0
        %1354 = vmatpush1.msra.mxu0 %v1331
        %1355 = vmatprep.subr.mxu0 0.0
        %1356 = vmatpush1.msra.mxu0 %v1332
        %1357 = vmatprep.subr.mxu0 0.0
        %1358 = vmatpush1.msra.mxu0 %v1333
        %1359 = vmatprep.subr.mxu0 0.0
        %1360 = vmatpush1.msra.mxu0 %v1334
        %1361 = vmatprep.subr.mxu0 0.0
        %1362 = vmatpush1.msra.mxu0 %v1335
        %1363 = vmatprep.subr.mxu0 0.0
        %1364 = vmatpush1.msra.mxu0 %v1336
        %1365 = vmatprep.subr.mxu0 0.0
        %1366 = vmatpush1.msra.mxu0 %v1337
        %1367 = vmatprep.subr.mxu0 0.0
        %1368 = vmatpush1.msra.mxu0 %v1338
        %1369 = vmatprep.subr.mxu0 0.0
        %1370 = vmatpush1.msra.mxu0 %v1339
        %1371 = vmatprep.subr.mxu0 0.0
        %1372 = vmatpush1.msra.mxu0 %v1340
        %1373 = vmatprep.subr.mxu0 0.0
        %1374 = vmatpush1.msra.mxu0 0.0
        %1375 = vmatprep.subr.mxu0 0.0
        %1376 = vmatpush1.msra.mxu0 0.0
        %1377 = vmatprep.subr.mxu0 0.0
        %1378 = vmatpush1.msra.mxu0 0.0
        %1379 = vmatprep.subr.mxu0 0.0
        %1380 = vmatpush1.msra.mxu0 0.0
        %1381 = vmatprep.subr.mxu0 0.0
        %1382 = vmatpush1.msra.mxu0 0.0
        %1383 = vmatprep.subr.mxu0 0.0
        %1384 = vmatpush1.msra.mxu0 0.0
        %1385 = vmatprep.subr.mxu0 0.0
        %1386 = vmatpush1.msra.mxu0 0.0
        %1387 = vmatprep.subr.mxu0 0.0
        %1388 = vmatpush1.msra.mxu0 0.0
        %1389 = vmatprep.subr.mxu0 0.0
        %1390 = vmatpush1.msra.mxu0 0.0
        %1391 = vmatprep.subr.mxu0 0.0
        %1392 = vmatpush1.msra.mxu0 0.0
        %1393 = vmatprep.subr.mxu0 0.0
        %1394 = vmatpush1.msra.mxu0 0.0
        %1395 = vmatprep.subr.mxu0 0.0
        %1396 = vmatpush1.msra.mxu0 0.0
        %1397 = vmatprep.subr.mxu0 0.0
        %1398 = vmatpush1.msra.mxu0 0.0
        %1399 = vmatprep.subr.mxu0 0.0
        %1400 = vmatpush1.msra.mxu0 0.0
        %1401 = vmatprep.subr.mxu0 0.0
        %1402 = vmatpush1.msra.mxu0 0.0
        %1403 = vmatprep.subr.mxu0 0.0
        %1404 = vmatpush1.msra.mxu0 0.0
        %1405 = vmatprep.mubr.f32.mxu0 0.0
        %1406 = vmatmul.mubr.f32.gmra.mrb[0].mxu0 %v1065
        %v1407 = vpop.f32.mrb[0].mxu0
        %v1408 = vadd.f32 0.0, %v1407
        %v1409 = vpop.f32.mrb[0].mxu0
        %1410 = vdwg.mxu0
        %v1411 = vadd.f32 %v1324, %v1408
        %v1412 = vmax.f32 %v1411, 0.0
        %s1413 = scalar_lea.vmem %s225, 16 [#allocation5]
        %1414 = vst.msk [vmem:[%s1413] sm:$0xff] %vm635, %v1412
        %s1415 = sadd.s32 %s241, 3
        %s1416 = sshra.s32 %s1415, 7
        %s1417 = sand.u32 %s1415, 127
        %s1418 = sadd.s32 %s1416, %s34
        %s1419 = smul.u32 %s1418, 128
        %s1420 = sshra.s32 %s1415, 7
        %s1421 = sand.u32 %s1415, 127
        %s1422 = sadd.s32 %s1419, %s1421
        %s1423 = sld [smem:[#allocation3 + %s1422]]
        %s1424 = sld [smem:[#allocation4 + %s1422]]
        %v1425 = vstv %s1423
        %v1426 = vadd.s32 %v1425, %v242
        %1427 = vset.pattern.permute.xlu0 0
        %1428 = vperm.xlu0 %1427, %v1426
        %v1429 = vpop.permute.xlu0 %1428
        %vm1430 = vcmp.eq.s32.totalorder %v245, %v1429
        %v1431 = vsel %vm1430, 1, 0
        %v1432 = vcvt.s32.f32 %v1431
        %v1433 = vadd.s32 %v1425, %v243
        %1434 = vset.pattern.permute.xlu0 0
        %1435 = vperm.xlu0 %1434, %v1433
        %v1436 = vpop.permute.xlu0 %1435
        %vm1437 = vcmp.eq.s32.totalorder %v245, %v1436
        %v1438 = vsel %vm1437, 1, 0
        %v1439 = vcvt.s32.f32 %v1438
        %v1440 = vstv %s1424
        %v1441 = vadd.s32 %v1440, %v242
        %1442 = vset.pattern.permute.xlu0 0
        %1443 = vperm.xlu0 %1442, %v1441
        %v1444 = vpop.permute.xlu0 %1443
        %vm1445 = vcmp.eq.s32.totalorder %v245, %v1444
        %v1446 = vsel %vm1445, 1, 0
        %v1447 = vcvt.s32.f32 %v1446
        %v1448 = vadd.s32 %v1440, %v243
        %1449 = vset.pattern.permute.xlu0 0
        %1450 = vperm.xlu0 %1449, %v1448
        %v1451 = vpop.permute.xlu0 %1450
        %vm1452 = vcmp.eq.s32.totalorder %v245, %v1451
        %v1453 = vsel %vm1452, 1, 0
        %v1454 = vcvt.s32.f32 %v1453
        %v1455 = vld [vmem:[%s4] sm:$0xff]
        %v1456 = vld [vmem:[%s4 + $0x8] sm:$0xff]
        %v1457 = vld [vmem:[%s4 + $0x10] sm:$0xff]
        %v1458 = vld [vmem:[%s4 + $0x18] sm:$0xff]
        %v1459 = vld [vmem:[%s4 + $0x20] sm:$0xff]
        %v1460 = vld [vmem:[%s4 + $0x28] sm:$0xff]
        %v1461 = vld [vmem:[%s4 + $0x30] sm:$0xff]
        %v1462 = vld [vmem:[%s4 + $0x38] sm:$0xff]
        %v1463 = vld [vmem:[%s4 + $0x40] sm:$0xff]
        %v1464 = vld [vmem:[%s4 + $0x48] sm:$0xff]
        %v1465 = vld [vmem:[%s4 + $0x50] sm:$0xff]
        %v1466 = vld [vmem:[%s4 + $0x58] sm:$0xff]
        %v1467 = vld [vmem:[%s4 + $0x60] sm:$0xff]
        %v1468 = vld [vmem:[%s4 + $0x68] sm:$0xff]
        %v1469 = vld [vmem:[%s4 + $0x70] sm:$0xff]
        %v1470 = vld [vmem:[%s4 + $0x78] sm:$0xff]
        %v1471 = vld [vmem:[%s301] sm:$0xff]
        %v1472 = vld [vmem:[%s301 + $0x8] sm:$0xff]
        %v1473 = vld [vmem:[%s301 + $0x10] sm:$0xff]
        %v1474 = vld [vmem:[%s301 + $0x18] sm:$0xff]
        %v1475 = vld [vmem:[%s301 + $0x20] sm:$0xff]
        %v1476 = vld [vmem:[%s301 + $0x28] sm:$0xff]
        %v1477 = vld [vmem:[%s301 + $0x30] sm:$0xff]
        %v1478 = vld [vmem:[%s301 + $0x38] sm:$0xff]
        %v1479 = vld [vmem:[%s301 + $0x40] sm:$0xff]
        %v1480 = vld [vmem:[%s301 + $0x48] sm:$0xff]
        %v1481 = vld [vmem:[%s301 + $0x50] sm:$0xff]
        %v1482 = vld [vmem:[%s301 + $0x58] sm:$0xff]
        %v1483 = vld [vmem:[%s301 + $0x60] sm:$0xff]
        %v1484 = vld [vmem:[%s301 + $0x68] sm:$0xff]
        %v1485 = vld [vmem:[%s301 + $0x70] sm:$0xff]
        %v1486 = vld [vmem:[%s301 + $0x78] sm:$0xff]
        %1487 = vmatprep.subr.mxu0 0.0
        %1488 = vmatpush1.msra.mxu0 %v1471
        %1489 = vmatprep.subr.mxu0 0.0
        %1490 = vmatpush1.msra.mxu0 %v1472
        %1491 = vmatprep.subr.mxu0 0.0
        %1492 = vmatpush1.msra.mxu0 %v1473
        %1493 = vmatprep.subr.mxu0 0.0
        %1494 = vmatpush1.msra.mxu0 %v1474
        %1495 = vmatprep.subr.mxu0 0.0
        %1496 = vmatpush1.msra.mxu0 %v1475
        %1497 = vmatprep.subr.mxu0 0.0
        %1498 = vmatpush1.msra.mxu0 %v1476
        %1499 = vmatprep.subr.mxu0 0.0
        %1500 = vmatpush1.msra.mxu0 %v1477
        %1501 = vmatprep.subr.mxu0 0.0
        %1502 = vmatpush1.msra.mxu0 %v1478
        %1503 = vmatprep.subr.mxu0 0.0
        %1504 = vmatpush1.msra.mxu0 %v1479
        %1505 = vmatprep.subr.mxu0 0.0
        %1506 = vmatpush1.msra.mxu0 %v1480
        %1507 = vmatprep.subr.mxu0 0.0
        %1508 = vmatpush1.msra.mxu0 %v1481
        %1509 = vmatprep.subr.mxu0 0.0
        %1510 = vmatpush1.msra.mxu0 %v1482
        %1511 = vmatprep.subr.mxu0 0.0
        %1512 = vmatpush1.msra.mxu0 %v1483
        %1513 = vmatprep.subr.mxu0 0.0
        %1514 = vmatpush1.msra.mxu0 %v1484
        %1515 = vmatprep.subr.mxu0 0.0
        %1516 = vmatpush1.msra.mxu0 %v1485
        %1517 = vmatprep.subr.mxu0 0.0
        %1518 = vmatpush1.msra.mxu0 %v1486
        %1519 = vmatprep.subr.mxu0 0.0
        %1520 = vmatpush1.msra.mxu0 0.0
        %1521 = vmatprep.subr.mxu0 0.0
        %1522 = vmatpush1.msra.mxu0 0.0
        %1523 = vmatprep.subr.mxu0 0.0
        %1524 = vmatpush1.msra.mxu0 0.0
        %1525 = vmatprep.subr.mxu0 0.0
        %1526 = vmatpush1.msra.mxu0 0.0
        %1527 = vmatprep.subr.mxu0 0.0
        %1528 = vmatpush1.msra.mxu0 0.0
        %1529 = vmatprep.subr.mxu0 0.0
        %1530 = vmatpush1.msra.mxu0 0.0
        %1531 = vmatprep.subr.mxu0 0.0
        %1532 = vmatpush1.msra.mxu0 0.0
        %1533 = vmatprep.subr.mxu0 0.0
        %1534 = vmatpush1.msra.mxu0 0.0
        %1535 = vmatprep.subr.mxu0 0.0
        %1536 = vmatpush1.msra.mxu0 0.0
        %1537 = vmatprep.subr.mxu0 0.0
        %1538 = vmatpush1.msra.mxu0 0.0
        %1539 = vmatprep.subr.mxu0 0.0
        %1540 = vmatpush1.msra.mxu0 0.0
        %1541 = vmatprep.subr.mxu0 0.0
        %1542 = vmatpush1.msra.mxu0 0.0
        %1543 = vmatprep.subr.mxu0 0.0
        %1544 = vmatpush1.msra.mxu0 0.0
        %1545 = vmatprep.subr.mxu0 0.0
        %1546 = vmatpush1.msra.mxu0 0.0
        %1547 = vmatprep.subr.mxu0 0.0
        %1548 = vmatpush1.msra.mxu0 0.0
        %1549 = vmatprep.subr.mxu0 0.0
        %1550 = vmatpush1.msra.mxu0 0.0
        %1551 = vmatprep.mubr.f32.mxu0 0.0
        %1552 = vmatmul.mubr.f32.gmra.mrb[0].mxu0 %v1439
        %v1553 = vpop.f32.mrb[0].mxu0
        %v1554 = vadd.f32 0.0, %v1553
        %v1555 = vpop.f32.mrb[0].mxu0
        %1556 = vdwg.mxu0
        %1557 = vmatprep.subr.mxu0 0.0
        %1558 = vmatpush1.msra.mxu0 %v1455
        %1559 = vmatprep.subr.mxu0 0.0
        %1560 = vmatpush1.msra.mxu0 %v1456
        %1561 = vmatprep.subr.mxu0 0.0
        %1562 = vmatpush1.msra.mxu0 %v1457
        %1563 = vmatprep.subr.mxu0 0.0
        %1564 = vmatpush1.msra.mxu0 %v1458
        %1565 = vmatprep.subr.mxu0 0.0
        %1566 = vmatpush1.msra.mxu0 %v1459
        %1567 = vmatprep.subr.mxu0 0.0
        %1568 = vmatpush1.msra.mxu0 %v1460
        %1569 = vmatprep.subr.mxu0 0.0
        %1570 = vmatpush1.msra.mxu0 %v1461
        %1571 = vmatprep.subr.mxu0 0.0
        %1572 = vmatpush1.msra.mxu0 %v1462
        %1573 = vmatprep.subr.mxu0 0.0
        %1574 = vmatpush1.msra.mxu0 %v1463
        %1575 = vmatprep.subr.mxu0 0.0
        %1576 = vmatpush1.msra.mxu0 %v1464
        %1577 = vmatprep.subr.mxu0 0.0
        %1578 = vmatpush1.msra.mxu0 %v1465
        %1579 = vmatprep.subr.mxu0 0.0
        %1580 = vmatpush1.msra.mxu0 %v1466
        %1581 = vmatprep.subr.mxu0 0.0
        %1582 = vmatpush1.msra.mxu0 %v1467
        %1583 = vmatprep.subr.mxu0 0.0
        %1584 = vmatpush1.msra.mxu0 %v1468
        %1585 = vmatprep.subr.mxu0 0.0
        %1586 = vmatpush1.msra.mxu0 %v1469
        %1587 = vmatprep.subr.mxu0 0.0
        %1588 = vmatpush1.msra.mxu0 %v1470
        %1589 = vmatprep.subr.mxu0 0.0
        %1590 = vmatpush1.msra.mxu0 0.0
        %1591 = vmatprep.subr.mxu0 0.0
        %1592 = vmatpush1.msra.mxu0 0.0
        %1593 = vmatprep.subr.mxu0 0.0
        %1594 = vmatpush1.msra.mxu0 0.0
        %1595 = vmatprep.subr.mxu0 0.0
        %1596 = vmatpush1.msra.mxu0 0.0
        %1597 = vmatprep.subr.mxu0 0.0
        %1598 = vmatpush1.msra.mxu0 0.0
        %1599 = vmatprep.subr.mxu0 0.0
        %1600 = vmatpush1.msra.mxu0 0.0
        %1601 = vmatprep.subr.mxu0 0.0
        %1602 = vmatpush1.msra.mxu0 0.0
        %1603 = vmatprep.subr.mxu0 0.0
        %1604 = vmatpush1.msra.mxu0 0.0
        %1605 = vmatprep.subr.mxu0 0.0
        %1606 = vmatpush1.msra.mxu0 0.0
        %1607 = vmatprep.subr.mxu0 0.0
        %1608 = vmatpush1.msra.mxu0 0.0
        %1609 = vmatprep.subr.mxu0 0.0
        %1610 = vmatpush1.msra.mxu0 0.0
        %1611 = vmatprep.subr.mxu0 0.0
        %1612 = vmatpush1.msra.mxu0 0.0
        %1613 = vmatprep.subr.mxu0 0.0
        %1614 = vmatpush1.msra.mxu0 0.0
        %1615 = vmatprep.subr.mxu0 0.0
        %1616 = vmatpush1.msra.mxu0 0.0
        %1617 = vmatprep.subr.mxu0 0.0
        %1618 = vmatpush1.msra.mxu0 0.0
        %1619 = vmatprep.subr.mxu0 0.0
        %1620 = vmatpush1.msra.mxu0 0.0
        %1621 = vmatprep.mubr.f32.mxu0 0.0
        %1622 = vmatmul.mubr.f32.gmra.mrb[0].mxu0 %v1432
        %v1623 = vpop.f32.mrb[0].mxu0
        %v1624 = vadd.f32 %v1554, %v1623
        %v1625 = vpop.f32.mrb[0].mxu0
        %1626 = vdwg.mxu0
        %v1627 = vld [vmem:[%s458] sm:$0xff]
        %v1628 = vld [vmem:[%s458 + $0x8] sm:$0xff]
        %v1629 = vld [vmem:[%s458 + $0x10] sm:$0xff]
        %v1630 = vld [vmem:[%s458 + $0x18] sm:$0xff]
        %v1631 = vld [vmem:[%s458 + $0x20] sm:$0xff]
        %v1632 = vld [vmem:[%s458 + $0x28] sm:$0xff]
        %v1633 = vld [vmem:[%s458 + $0x30] sm:$0xff]
        %v1634 = vld [vmem:[%s458 + $0x38] sm:$0xff]
        %v1635 = vld [vmem:[%s458 + $0x40] sm:$0xff]
        %v1636 = vld [vmem:[%s458 + $0x48] sm:$0xff]
        %v1637 = vld [vmem:[%s458 + $0x50] sm:$0xff]
        %v1638 = vld [vmem:[%s458 + $0x58] sm:$0xff]
        %v1639 = vld [vmem:[%s458 + $0x60] sm:$0xff]
        %v1640 = vld [vmem:[%s458 + $0x68] sm:$0xff]
        %v1641 = vld [vmem:[%s458 + $0x70] sm:$0xff]
        %v1642 = vld [vmem:[%s458 + $0x78] sm:$0xff]
        %1643 = vmatprep.subr.mxu0 0.0
        %1644 = vmatpush1.msra.mxu0 %v1627
        %1645 = vmatprep.subr.mxu0 0.0
        %1646 = vmatpush1.msra.mxu0 %v1628
        %1647 = vmatprep.subr.mxu0 0.0
        %1648 = vmatpush1.msra.mxu0 %v1629
        %1649 = vmatprep.subr.mxu0 0.0
        %1650 = vmatpush1.msra.mxu0 %v1630
        %1651 = vmatprep.subr.mxu0 0.0
        %1652 = vmatpush1.msra.mxu0 %v1631
        %1653 = vmatprep.subr.mxu0 0.0
        %1654 = vmatpush1.msra.mxu0 %v1632
        %1655 = vmatprep.subr.mxu0 0.0
        %1656 = vmatpush1.msra.mxu0 %v1633
        %1657 = vmatprep.subr.mxu0 0.0
        %1658 = vmatpush1.msra.mxu0 %v1634
        %1659 = vmatprep.subr.mxu0 0.0
        %1660 = vmatpush1.msra.mxu0 %v1635
        %1661 = vmatprep.subr.mxu0 0.0
        %1662 = vmatpush1.msra.mxu0 %v1636
        %1663 = vmatprep.subr.mxu0 0.0
        %1664 = vmatpush1.msra.mxu0 %v1637
        %1665 = vmatprep.subr.mxu0 0.0
        %1666 = vmatpush1.msra.mxu0 %v1638
        %1667 = vmatprep.subr.mxu0 0.0
        %1668 = vmatpush1.msra.mxu0 %v1639
        %1669 = vmatprep.subr.mxu0 0.0
        %1670 = vmatpush1.msra.mxu0 %v1640
        %1671 = vmatprep.subr.mxu0 0.0
        %1672 = vmatpush1.msra.mxu0 %v1641
        %1673 = vmatprep.subr.mxu0 0.0
        %1674 = vmatpush1.msra.mxu0 %v1642
        %1675 = vmatprep.subr.mxu0 0.0
        %1676 = vmatpush1.msra.mxu0 0.0
        %1677 = vmatprep.subr.mxu0 0.0
        %1678 = vmatpush1.msra.mxu0 0.0
        %1679 = vmatprep.subr.mxu0 0.0
        %1680 = vmatpush1.msra.mxu0 0.0
        %1681 = vmatprep.subr.mxu0 0.0
        %1682 = vmatpush1.msra.mxu0 0.0
        %1683 = vmatprep.subr.mxu0 0.0
        %1684 = vmatpush1.msra.mxu0 0.0
        %1685 = vmatprep.subr.mxu0 0.0
        %1686 = vmatpush1.msra.mxu0 0.0
        %1687 = vmatprep.subr.mxu0 0.0
        %1688 = vmatpush1.msra.mxu0 0.0
        %1689 = vmatprep.subr.mxu0 0.0
        %1690 = vmatpush1.msra.mxu0 0.0
        %1691 = vmatprep.subr.mxu0 0.0
        %1692 = vmatpush1.msra.mxu0 0.0
        %1693 = vmatprep.subr.mxu0 0.0
        %1694 = vmatpush1.msra.mxu0 0.0
        %1695 = vmatprep.subr.mxu0 0.0
        %1696 = vmatpush1.msra.mxu0 0.0
        %1697 = vmatprep.subr.mxu0 0.0
        %1698 = vmatpush1.msra.mxu0 0.0
        %1699 = vmatprep.subr.mxu0 0.0
        %1700 = vmatpush1.msra.mxu0 0.0
        %1701 = vmatprep.subr.mxu0 0.0
        %1702 = vmatpush1.msra.mxu0 0.0
        %1703 = vmatprep.subr.mxu0 0.0
        %1704 = vmatpush1.msra.mxu0 0.0
        %1705 = vmatprep.subr.mxu0 0.0
        %1706 = vmatpush1.msra.mxu0 0.0
        %1707 = vmatprep.mubr.f32.mxu0 0.0
        %1708 = vmatmul.mubr.f32.gmra.mrb[0].mxu0 %v1447
        %v1709 = vpop.f32.mrb[0].mxu0
        %v1710 = vadd.f32 0.0, %v1709
        %v1711 = vpop.f32.mrb[0].mxu0
        %1712 = vdwg.mxu0
        %v1713 = vadd.f32 %v1624, %v1710
        %v1714 = vld [vmem:[%s546] sm:$0xff]
        %v1715 = vld [vmem:[%s546 + $0x8] sm:$0xff]
        %v1716 = vld [vmem:[%s546 + $0x10] sm:$0xff]
        %v1717 = vld [vmem:[%s546 + $0x18] sm:$0xff]
        %v1718 = vld [vmem:[%s546 + $0x20] sm:$0xff]
        %v1719 = vld [vmem:[%s546 + $0x28] sm:$0xff]
        %v1720 = vld [vmem:[%s546 + $0x30] sm:$0xff]
        %v1721 = vld [vmem:[%s546 + $0x38] sm:$0xff]
        %v1722 = vld [vmem:[%s546 + $0x40] sm:$0xff]
        %v1723 = vld [vmem:[%s546 + $0x48] sm:$0xff]
        %v1724 = vld [vmem:[%s546 + $0x50] sm:$0xff]
        %v1725 = vld [vmem:[%s546 + $0x58] sm:$0xff]
        %v1726 = vld [vmem:[%s546 + $0x60] sm:$0xff]
        %v1727 = vld [vmem:[%s546 + $0x68] sm:$0xff]
        %v1728 = vld [vmem:[%s546 + $0x70] sm:$0xff]
        %v1729 = vld [vmem:[%s546 + $0x78] sm:$0xff]
        %1730 = vmatprep.subr.mxu0 0.0
        %1731 = vmatpush1.msra.mxu0 %v1714
        %1732 = vmatprep.subr.mxu0 0.0
        %1733 = vmatpush1.msra.mxu0 %v1715
        %1734 = vmatprep.subr.mxu0 0.0
        %1735 = vmatpush1.msra.mxu0 %v1716
        %1736 = vmatprep.subr.mxu0 0.0
        %1737 = vmatpush1.msra.mxu0 %v1717
        %1738 = vmatprep.subr.mxu0 0.0
        %1739 = vmatpush1.msra.mxu0 %v1718
        %1740 = vmatprep.subr.mxu0 0.0
        %1741 = vmatpush1.msra.mxu0 %v1719
        %1742 = vmatprep.subr.mxu0 0.0
        %1743 = vmatpush1.msra.mxu0 %v1720
        %1744 = vmatprep.subr.mxu0 0.0
        %1745 = vmatpush1.msra.mxu0 %v1721
        %1746 = vmatprep.subr.mxu0 0.0
        %1747 = vmatpush1.msra.mxu0 %v1722
        %1748 = vmatprep.subr.mxu0 0.0
        %1749 = vmatpush1.msra.mxu0 %v1723
        %1750 = vmatprep.subr.mxu0 0.0
        %1751 = vmatpush1.msra.mxu0 %v1724
        %1752 = vmatprep.subr.mxu0 0.0
        %1753 = vmatpush1.msra.mxu0 %v1725
        %1754 = vmatprep.subr.mxu0 0.0
        %1755 = vmatpush1.msra.mxu0 %v1726
        %1756 = vmatprep.subr.mxu0 0.0
        %1757 = vmatpush1.msra.mxu0 %v1727
        %1758 = vmatprep.subr.mxu0 0.0
        %1759 = vmatpush1.msra.mxu0 %v1728
        %1760 = vmatprep.subr.mxu0 0.0
        %1761 = vmatpush1.msra.mxu0 %v1729
        %1762 = vmatprep.subr.mxu0 0.0
        %1763 = vmatpush1.msra.mxu0 0.0
        %1764 = vmatprep.subr.mxu0 0.0
        %1765 = vmatpush1.msra.mxu0 0.0
        %1766 = vmatprep.subr.mxu0 0.0
        %1767 = vmatpush1.msra.mxu0 0.0
        %1768 = vmatprep.subr.mxu0 0.0
        %1769 = vmatpush1.msra.mxu0 0.0
        %1770 = vmatprep.subr.mxu0 0.0
        %1771 = vmatpush1.msra.mxu0 0.0
        %1772 = vmatprep.subr.mxu0 0.0
        %1773 = vmatpush1.msra.mxu0 0.0
        %1774 = vmatprep.subr.mxu0 0.0
        %1775 = vmatpush1.msra.mxu0 0.0
        %1776 = vmatprep.subr.mxu0 0.0
        %1777 = vmatpush1.msra.mxu0 0.0
        %1778 = vmatprep.subr.mxu0 0.0
        %1779 = vmatpush1.msra.mxu0 0.0
        %1780 = vmatprep.subr.mxu0 0.0
        %1781 = vmatpush1.msra.mxu0 0.0
        %1782 = vmatprep.subr.mxu0 0.0
        %1783 = vmatpush1.msra.mxu0 0.0
        %1784 = vmatprep.subr.mxu0 0.0
        %1785 = vmatpush1.msra.mxu0 0.0
        %1786 = vmatprep.subr.mxu0 0.0
        %1787 = vmatpush1.msra.mxu0 0.0
        %1788 = vmatprep.subr.mxu0 0.0
        %1789 = vmatpush1.msra.mxu0 0.0
        %1790 = vmatprep.subr.mxu0 0.0
        %1791 = vmatpush1.msra.mxu0 0.0
        %1792 = vmatprep.subr.mxu0 0.0
        %1793 = vmatpush1.msra.mxu0 0.0
        %1794 = vmatprep.mubr.f32.mxu0 0.0
        %1795 = vmatmul.mubr.f32.gmra.mrb[0].mxu0 %v1454
        %v1796 = vpop.f32.mrb[0].mxu0
        %v1797 = vadd.f32 0.0, %v1796
        %v1798 = vpop.f32.mrb[0].mxu0
        %1799 = vdwg.mxu0
        %v1800 = vadd.f32 %v1713, %v1797
        %v1801 = vmax.f32 %v1800, 0.0
        %s1802 = scalar_lea.vmem %s225, 24 [#allocation5]
        %1803 = vst.msk [vmem:[%s1802] sm:$0xff] %vm635, %v1801
        %s1804 = sadd.s32 %s241, 4
        %s1805 = sshra.s32 %s1804, 7
        %s1806 = sand.u32 %s1804, 127
        %s1807 = sadd.s32 %s1805, %s34
        %s1808 = smul.u32 %s1807, 128
        %s1809 = sshra.s32 %s1804, 7
        %s1810 = sand.u32 %s1804, 127
        %s1811 = sadd.s32 %s1808, %s1810
        %s1812 = sld [smem:[#allocation3 + %s1811]]
        %s1813 = sld [smem:[#allocation4 + %s1811]]
        %v1814 = vstv %s1812
        %v1815 = vadd.s32 %v1814, %v242
        %1816 = vset.pattern.permute.xlu0 0
        %1817 = vperm.xlu0 %1816, %v1815
        %v1818 = vpop.permute.xlu0 %1817
        %vm1819 = vcmp.eq.s32.totalorder %v245, %v1818
        %v1820 = vsel %vm1819, 1, 0
        %v1821 = vcvt.s32.f32 %v1820
        %v1822 = vadd.s32 %v1814, %v243
        %1823 = vset.pattern.permute.xlu0 0
        %1824 = vperm.xlu0 %1823, %v1822
        %v1825 = vpop.permute.xlu0 %1824
        %vm1826 = vcmp.eq.s32.totalorder %v245, %v1825
        %v1827 = vsel %vm1826, 1, 0
        %v1828 = vcvt.s32.f32 %v1827
        %v1829 = vstv %s1813
        %v1830 = vadd.s32 %v1829, %v242
        %1831 = vset.pattern.permute.xlu0 0
        %1832 = vperm.xlu0 %1831, %v1830
        %v1833 = vpop.permute.xlu0 %1832
        %vm1834 = vcmp.eq.s32.totalorder %v245, %v1833
        %v1835 = vsel %vm1834, 1, 0
        %v1836 = vcvt.s32.f32 %v1835
        %v1837 = vadd.s32 %v1829, %v243
        %1838 = vset.pattern.permute.xlu0 0
        %1839 = vperm.xlu0 %1838, %v1837
        %v1840 = vpop.permute.xlu0 %1839
        %vm1841 = vcmp.eq.s32.totalorder %v245, %v1840
        %v1842 = vsel %vm1841, 1, 0
        %v1843 = vcvt.s32.f32 %v1842
        %v1844 = vld [vmem:[%s4] sm:$0xff]
        %v1845 = vld [vmem:[%s4 + $0x8] sm:$0xff]
        %v1846 = vld [vmem:[%s4 + $0x10] sm:$0xff]
        %v1847 = vld [vmem:[%s4 + $0x18] sm:$0xff]
        %v1848 = vld [vmem:[%s4 + $0x20] sm:$0xff]
        %v1849 = vld [vmem:[%s4 + $0x28] sm:$0xff]
        %v1850 = vld [vmem:[%s4 + $0x30] sm:$0xff]
        %v1851 = vld [vmem:[%s4 + $0x38] sm:$0xff]
        %v1852 = vld [vmem:[%s4 + $0x40] sm:$0xff]
        %v1853 = vld [vmem:[%s4 + $0x48] sm:$0xff]
        %v1854 = vld [vmem:[%s4 + $0x50] sm:$0xff]
        %v1855 = vld [vmem:[%s4 + $0x58] sm:$0xff]
        %v1856 = vld [vmem:[%s4 + $0x60] sm:$0xff]
        %v1857 = vld [vmem:[%s4 + $0x68] sm:$0xff]
        %v1858 = vld [vmem:[%s4 + $0x70] sm:$0xff]
        %v1859 = vld [vmem:[%s4 + $0x78] sm:$0xff]
        %v1860 = vld [vmem:[%s301] sm:$0xff]
        %v1861 = vld [vmem:[%s301 + $0x8] sm:$0xff]
        %v1862 = vld [vmem:[%s301 + $0x10] sm:$0xff]
        %v1863 = vld [vmem:[%s301 + $0x18] sm:$0xff]
        %v1864 = vld [vmem:[%s301 + $0x20] sm:$0xff]
        %v1865 = vld [vmem:[%s301 + $0x28] sm:$0xff]
        %v1866 = vld [vmem:[%s301 + $0x30] sm:$0xff]
        %v1867 = vld [vmem:[%s301 + $0x38] sm:$0xff]
        %v1868 = vld [vmem:[%s301 + $0x40] sm:$0xff]
        %v1869 = vld [vmem:[%s301 + $0x48] sm:$0xff]
        %v1870 = vld [vmem:[%s301 + $0x50] sm:$0xff]
        %v1871 = vld [vmem:[%s301 + $0x58] sm:$0xff]
        %v1872 = vld [vmem:[%s301 + $0x60] sm:$0xff]
        %v1873 = vld [vmem:[%s301 + $0x68] sm:$0xff]
        %v1874 = vld [vmem:[%s301 + $0x70] sm:$0xff]
        %v1875 = vld [vmem:[%s301 + $0x78] sm:$0xff]
        %1876 = vmatprep.subr.mxu0 0.0
        %1877 = vmatpush1.msra.mxu0 %v1860
        %1878 = vmatprep.subr.mxu0 0.0
        %1879 = vmatpush1.msra.mxu0 %v1861
        %1880 = vmatprep.subr.mxu0 0.0
        %1881 = vmatpush1.msra.mxu0 %v1862
        %1882 = vmatprep.subr.mxu0 0.0
        %1883 = vmatpush1.msra.mxu0 %v1863
        %1884 = vmatprep.subr.mxu0 0.0
        %1885 = vmatpush1.msra.mxu0 %v1864
        %1886 = vmatprep.subr.mxu0 0.0
        %1887 = vmatpush1.msra.mxu0 %v1865
        %1888 = vmatprep.subr.mxu0 0.0
        %1889 = vmatpush1.msra.mxu0 %v1866
        %1890 = vmatprep.subr.mxu0 0.0
        %1891 = vmatpush1.msra.mxu0 %v1867
        %1892 = vmatprep.subr.mxu0 0.0
        %1893 = vmatpush1.msra.mxu0 %v1868
        %1894 = vmatprep.subr.mxu0 0.0
        %1895 = vmatpush1.msra.mxu0 %v1869
        %1896 = vmatprep.subr.mxu0 0.0
        %1897 = vmatpush1.msra.mxu0 %v1870
        %1898 = vmatprep.subr.mxu0 0.0
        %1899 = vmatpush1.msra.mxu0 %v1871
        %1900 = vmatprep.subr.mxu0 0.0
        %1901 = vmatpush1.msra.mxu0 %v1872
        %1902 = vmatprep.subr.mxu0 0.0
        %1903 = vmatpush1.msra.mxu0 %v1873
        %1904 = vmatprep.subr.mxu0 0.0
        %1905 = vmatpush1.msra.mxu0 %v1874
        %1906 = vmatprep.subr.mxu0 0.0
        %1907 = vmatpush1.msra.mxu0 %v1875
        %1908 = vmatprep.subr.mxu0 0.0
        %1909 = vmatpush1.msra.mxu0 0.0
        %1910 = vmatprep.subr.mxu0 0.0
        %1911 = vmatpush1.msra.mxu0 0.0
        %1912 = vmatprep.subr.mxu0 0.0
        %1913 = vmatpush1.msra.mxu0 0.0
        %1914 = vmatprep.subr.mxu0 0.0
        %1915 = vmatpush1.msra.mxu0 0.0
        %1916 = vmatprep.subr.mxu0 0.0
        %1917 = vmatpush1.msra.mxu0 0.0
        %1918 = vmatprep.subr.mxu0 0.0
        %1919 = vmatpush1.msra.mxu0 0.0
        %1920 = vmatprep.subr.mxu0 0.0
        %1921 = vmatpush1.msra.mxu0 0.0
        %1922 = vmatprep.subr.mxu0 0.0
        %1923 = vmatpush1.msra.mxu0 0.0
        %1924 = vmatprep.subr.mxu0 0.0
        %1925 = vmatpush1.msra.mxu0 0.0
        %1926 = vmatprep.subr.mxu0 0.0
        %1927 = vmatpush1.msra.mxu0 0.0
        %1928 = vmatprep.subr.mxu0 0.0
        %1929 = vmatpush1.msra.mxu0 0.0
        %1930 = vmatprep.subr.mxu0 0.0
        %1931 = vmatpush1.msra.mxu0 0.0
        %1932 = vmatprep.subr.mxu0 0.0
        %1933 = vmatpush1.msra.mxu0 0.0
        %1934 = vmatprep.subr.mxu0 0.0
        %1935 = vmatpush1.msra.mxu0 0.0
        %1936 = vmatprep.subr.mxu0 0.0
        %1937 = vmatpush1.msra.mxu0 0.0
        %1938 = vmatprep.subr.mxu0 0.0
        %1939 = vmatpush1.msra.mxu0 0.0
        %1940 = vmatprep.mubr.f32.mxu0 0.0
        %1941 = vmatmul.mubr.f32.gmra.mrb[0].mxu0 %v1828
        %v1942 = vpop.f32.mrb[0].mxu0
        %v1943 = vadd.f32 0.0, %v1942
        %v1944 = vpop.f32.mrb[0].mxu0
        %1945 = vdwg.mxu0
        %1946 = vmatprep.subr.mxu0 0.0
        %1947 = vmatpush1.msra.mxu0 %v1844
        %1948 = vmatprep.subr.mxu0 0.0
        %1949 = vmatpush1.msra.mxu0 %v1845
        %1950 = vmatprep.subr.mxu0 0.0
        %1951 = vmatpush1.msra.mxu0 %v1846
        %1952 = vmatprep.subr.mxu0 0.0
        %1953 = vmatpush1.msra.mxu0 %v1847
        %1954 = vmatprep.subr.mxu0 0.0
        %1955 = vmatpush1.msra.mxu0 %v1848
        %1956 = vmatprep.subr.mxu0 0.0
        %1957 = vmatpush1.msra.mxu0 %v1849
        %1958 = vmatprep.subr.mxu0 0.0
        %1959 = vmatpush1.msra.mxu0 %v1850
        %1960 = vmatprep.subr.mxu0 0.0
        %1961 = vmatpush1.msra.mxu0 %v1851
        %1962 = vmatprep.subr.mxu0 0.0
        %1963 = vmatpush1.msra.mxu0 %v1852
        %1964 = vmatprep.subr.mxu0 0.0
        %1965 = vmatpush1.msra.mxu0 %v1853
        %1966 = vmatprep.subr.mxu0 0.0
        %1967 = vmatpush1.msra.mxu0 %v1854
        %1968 = vmatprep.subr.mxu0 0.0
        %1969 = vmatpush1.msra.mxu0 %v1855
        %1970 = vmatprep.subr.mxu0 0.0
        %1971 = vmatpush1.msra.mxu0 %v1856
        %1972 = vmatprep.subr.mxu0 0.0
        %1973 = vmatpush1.msra.mxu0 %v1857
        %1974 = vmatprep.subr.mxu0 0.0
        %1975 = vmatpush1.msra.mxu0 %v1858
        %1976 = vmatprep.subr.mxu0 0.0
        %1977 = vmatpush1.msra.mxu0 %v1859
        %1978 = vmatprep.subr.mxu0 0.0
        %1979 = vmatpush1.msra.mxu0 0.0
        %1980 = vmatprep.subr.mxu0 0.0
        %1981 = vmatpush1.msra.mxu0 0.0
        %1982 = vmatprep.subr.mxu0 0.0
        %1983 = vmatpush1.msra.mxu0 0.0
        %1984 = vmatprep.subr.mxu0 0.0
        %1985 = vmatpush1.msra.mxu0 0.0
        %1986 = vmatprep.subr.mxu0 0.0
        %1987 = vmatpush1.msra.mxu0 0.0
        %1988 = vmatprep.subr.mxu0 0.0
        %1989 = vmatpush1.msra.mxu0 0.0
        %1990 = vmatprep.subr.mxu0 0.0
        %1991 = vmatpush1.msra.mxu0 0.0
        %1992 = vmatprep.subr.mxu0 0.0
        %1993 = vmatpush1.msra.mxu0 0.0
        %1994 = vmatprep.subr.mxu0 0.0
        %1995 = vmatpush1.msra.mxu0 0.0
        %1996 = vmatprep.subr.mxu0 0.0
        %1997 = vmatpush1.msra.mxu0 0.0
        %1998 = vmatprep.subr.mxu0 0.0
        %1999 = vmatpush1.msra.mxu0 0.0
        %2000 = vmatprep.subr.mxu0 0.0
        %2001 = vmatpush1.msra.mxu0 0.0
        %2002 = vmatprep.subr.mxu0 0.0
        %2003 = vmatpush1.msra.mxu0 0.0
        %2004 = vmatprep.subr.mxu0 0.0
        %2005 = vmatpush1.msra.mxu0 0.0
        %2006 = vmatprep.subr.mxu0 0.0
        %2007 = vmatpush1.msra.mxu0 0.0
        %2008 = vmatprep.subr.mxu0 0.0
        %2009 = vmatpush1.msra.mxu0 0.0
        %2010 = vmatprep.mubr.f32.mxu0 0.0
        %2011 = vmatmul.mubr.f32.gmra.mrb[0].mxu0 %v1821
        %v2012 = vpop.f32.mrb[0].mxu0
        %v2013 = vadd.f32 %v1943, %v2012
        %v2014 = vpop.f32.mrb[0].mxu0
        %2015 = vdwg.mxu0
        %v2016 = vld [vmem:[%s458] sm:$0xff]
        %v2017 = vld [vmem:[%s458 + $0x8] sm:$0xff]
        %v2018 = vld [vmem:[%s458 + $0x10] sm:$0xff]
        %v2019 = vld [vmem:[%s458 + $0x18] sm:$0xff]
        %v2020 = vld [vmem:[%s458 + $0x20] sm:$0xff]
        %v2021 = vld [vmem:[%s458 + $0x28] sm:$0xff]
        %v2022 = vld [vmem:[%s458 + $0x30] sm:$0xff]
        %v2023 = vld [vmem:[%s458 + $0x38] sm:$0xff]
        %v2024 = vld [vmem:[%s458 + $0x40] sm:$0xff]
        %v2025 = vld [vmem:[%s458 + $0x48] sm:$0xff]
        %v2026 = vld [vmem:[%s458 + $0x50] sm:$0xff]
        %v2027 = vld [vmem:[%s458 + $0x58] sm:$0xff]
        %v2028 = vld [vmem:[%s458 + $0x60] sm:$0xff]
        %v2029 = vld [vmem:[%s458 + $0x68] sm:$0xff]
        %v2030 = vld [vmem:[%s458 + $0x70] sm:$0xff]
        %v2031 = vld [vmem:[%s458 + $0x78] sm:$0xff]
        %2032 = vmatprep.subr.mxu0 0.0
        %2033 = vmatpush1.msra.mxu0 %v2016
        %2034 = vmatprep.subr.mxu0 0.0
        %2035 = vmatpush1.msra.mxu0 %v2017
        %2036 = vmatprep.subr.mxu0 0.0
        %2037 = vmatpush1.msra.mxu0 %v2018
        %2038 = vmatprep.subr.mxu0 0.0
        %2039 = vmatpush1.msra.mxu0 %v2019
        %2040 = vmatprep.subr.mxu0 0.0
        %2041 = vmatpush1.msra.mxu0 %v2020
        %2042 = vmatprep.subr.mxu0 0.0
        %2043 = vmatpush1.msra.mxu0 %v2021
        %2044 = vmatprep.subr.mxu0 0.0
        %2045 = vmatpush1.msra.mxu0 %v2022
        %2046 = vmatprep.subr.mxu0 0.0
        %2047 = vmatpush1.msra.mxu0 %v2023
        %2048 = vmatprep.subr.mxu0 0.0
        %2049 = vmatpush1.msra.mxu0 %v2024
        %2050 = vmatprep.subr.mxu0 0.0
        %2051 = vmatpush1.msra.mxu0 %v2025
        %2052 = vmatprep.subr.mxu0 0.0
        %2053 = vmatpush1.msra.mxu0 %v2026
        %2054 = vmatprep.subr.mxu0 0.0
        %2055 = vmatpush1.msra.mxu0 %v2027
        %2056 = vmatprep.subr.mxu0 0.0
        %2057 = vmatpush1.msra.mxu0 %v2028
        %2058 = vmatprep.subr.mxu0 0.0
        %2059 = vmatpush1.msra.mxu0 %v2029
        %2060 = vmatprep.subr.mxu0 0.0
        %2061 = vmatpush1.msra.mxu0 %v2030
        %2062 = vmatprep.subr.mxu0 0.0
        %2063 = vmatpush1.msra.mxu0 %v2031
        %2064 = vmatprep.subr.mxu0 0.0
        %2065 = vmatpush1.msra.mxu0 0.0
        %2066 = vmatprep.subr.mxu0 0.0
        %2067 = vmatpush1.msra.mxu0 0.0
        %2068 = vmatprep.subr.mxu0 0.0
        %2069 = vmatpush1.msra.mxu0 0.0
        %2070 = vmatprep.subr.mxu0 0.0
        %2071 = vmatpush1.msra.mxu0 0.0
        %2072 = vmatprep.subr.mxu0 0.0
        %2073 = vmatpush1.msra.mxu0 0.0
        %2074 = vmatprep.subr.mxu0 0.0
        %2075 = vmatpush1.msra.mxu0 0.0
        %2076 = vmatprep.subr.mxu0 0.0
        %2077 = vmatpush1.msra.mxu0 0.0
        %2078 = vmatprep.subr.mxu0 0.0
        %2079 = vmatpush1.msra.mxu0 0.0
        %2080 = vmatprep.subr.mxu0 0.0
        %2081 = vmatpush1.msra.mxu0 0.0
        %2082 = vmatprep.subr.mxu0 0.0
        %2083 = vmatpush1.msra.mxu0 0.0
        %2084 = vmatprep.subr.mxu0 0.0
        %2085 = vmatpush1.msra.mxu0 0.0
        %2086 = vmatprep.subr.mxu0 0.0
        %2087 = vmatpush1.msra.mxu0 0.0
        %2088 = vmatprep.subr.mxu0 0.0
        %2089 = vmatpush1.msra.mxu0 0.0
        %2090 = vmatprep.subr.mxu0 0.0
        %2091 = vmatpush1.msra.mxu0 0.0
        %2092 = vmatprep.subr.mxu0 0.0
        %2093 = vmatpush1.msra.mxu0 0.0
        %2094 = vmatprep.subr.mxu0 0.0
        %2095 = vmatpush1.msra.mxu0 0.0
        %2096 = vmatprep.mubr.f32.mxu0 0.0
        %2097 = vmatmul.mubr.f32.gmra.mrb[0].mxu0 %v1836
        %v2098 = vpop.f32.mrb[0].mxu0
        %v2099 = vadd.f32 0.0, %v2098
        %v2100 = vpop.f32.mrb[0].mxu0
        %2101 = vdwg.mxu0
        %v2102 = vadd.f32 %v2013, %v2099
        %v2103 = vld [vmem:[%s546] sm:$0xff]
        %v2104 = vld [vmem:[%s546 + $0x8] sm:$0xff]
        %v2105 = vld [vmem:[%s546 + $0x10] sm:$0xff]
        %v2106 = vld [vmem:[%s546 + $0x18] sm:$0xff]
        %v2107 = vld [vmem:[%s546 + $0x20] sm:$0xff]
        %v2108 = vld [vmem:[%s546 + $0x28] sm:$0xff]
        %v2109 = vld [vmem:[%s546 + $0x30] sm:$0xff]
        %v2110 = vld [vmem:[%s546 + $0x38] sm:$0xff]
        %v2111 = vld [vmem:[%s546 + $0x40] sm:$0xff]
        %v2112 = vld [vmem:[%s546 + $0x48] sm:$0xff]
        %v2113 = vld [vmem:[%s546 + $0x50] sm:$0xff]
        %v2114 = vld [vmem:[%s546 + $0x58] sm:$0xff]
        %v2115 = vld [vmem:[%s546 + $0x60] sm:$0xff]
        %v2116 = vld [vmem:[%s546 + $0x68] sm:$0xff]
        %v2117 = vld [vmem:[%s546 + $0x70] sm:$0xff]
        %v2118 = vld [vmem:[%s546 + $0x78] sm:$0xff]
        %2119 = vmatprep.subr.mxu0 0.0
        %2120 = vmatpush1.msra.mxu0 %v2103
        %2121 = vmatprep.subr.mxu0 0.0
        %2122 = vmatpush1.msra.mxu0 %v2104
        %2123 = vmatprep.subr.mxu0 0.0
        %2124 = vmatpush1.msra.mxu0 %v2105
        %2125 = vmatprep.subr.mxu0 0.0
        %2126 = vmatpush1.msra.mxu0 %v2106
        %2127 = vmatprep.subr.mxu0 0.0
        %2128 = vmatpush1.msra.mxu0 %v2107
        %2129 = vmatprep.subr.mxu0 0.0
        %2130 = vmatpush1.msra.mxu0 %v2108
        %2131 = vmatprep.subr.mxu0 0.0
        %2132 = vmatpush1.msra.mxu0 %v2109
        %2133 = vmatprep.subr.mxu0 0.0
        %2134 = vmatpush1.msra.mxu0 %v2110
        %2135 = vmatprep.subr.mxu0 0.0
        %2136 = vmatpush1.msra.mxu0 %v2111
        %2137 = vmatprep.subr.mxu0 0.0
        %2138 = vmatpush1.msra.mxu0 %v2112
        %2139 = vmatprep.subr.mxu0 0.0
        %2140 = vmatpush1.msra.mxu0 %v2113
        %2141 = vmatprep.subr.mxu0 0.0
        %2142 = vmatpush1.msra.mxu0 %v2114
        %2143 = vmatprep.subr.mxu0 0.0
        %2144 = vmatpush1.msra.mxu0 %v2115
        %2145 = vmatprep.subr.mxu0 0.0
        %2146 = vmatpush1.msra.mxu0 %v2116
        %2147 = vmatprep.subr.mxu0 0.0
        %2148 = vmatpush1.msra.mxu0 %v2117
        %2149 = vmatprep.subr.mxu0 0.0
        %2150 = vmatpush1.msra.mxu0 %v2118
        %2151 = vmatprep.subr.mxu0 0.0
        %2152 = vmatpush1.msra.mxu0 0.0
        %2153 = vmatprep.subr.mxu0 0.0
        %2154 = vmatpush1.msra.mxu0 0.0
        %2155 = vmatprep.subr.mxu0 0.0
        %2156 = vmatpush1.msra.mxu0 0.0
        %2157 = vmatprep.subr.mxu0 0.0
        %2158 = vmatpush1.msra.mxu0 0.0
        %2159 = vmatprep.subr.mxu0 0.0
        %2160 = vmatpush1.msra.mxu0 0.0
        %2161 = vmatprep.subr.mxu0 0.0
        %2162 = vmatpush1.msra.mxu0 0.0
        %2163 = vmatprep.subr.mxu0 0.0
        %2164 = vmatpush1.msra.mxu0 0.0
        %2165 = vmatprep.subr.mxu0 0.0
        %2166 = vmatpush1.msra.mxu0 0.0
        %2167 = vmatprep.subr.mxu0 0.0
        %2168 = vmatpush1.msra.mxu0 0.0
        %2169 = vmatprep.subr.mxu0 0.0
        %2170 = vmatpush1.msra.mxu0 0.0
        %2171 = vmatprep.subr.mxu0 0.0
        %2172 = vmatpush1.msra.mxu0 0.0
        %2173 = vmatprep.subr.mxu0 0.0
        %2174 = vmatpush1.msra.mxu0 0.0
        %2175 = vmatprep.subr.mxu0 0.0
        %2176 = vmatpush1.msra.mxu0 0.0
        %2177 = vmatprep.subr.mxu0 0.0
        %2178 = vmatpush1.msra.mxu0 0.0
        %2179 = vmatprep.subr.mxu0 0.0
        %2180 = vmatpush1.msra.mxu0 0.0
        %2181 = vmatprep.subr.mxu0 0.0
        %2182 = vmatpush1.msra.mxu0 0.0
        %2183 = vmatprep.mubr.f32.mxu0 0.0
        %2184 = vmatmul.mubr.f32.gmra.mrb[0].mxu0 %v1843
        %v2185 = vpop.f32.mrb[0].mxu0
        %v2186 = vadd.f32 0.0, %v2185
        %v2187 = vpop.f32.mrb[0].mxu0
        %2188 = vdwg.mxu0
        %v2189 = vadd.f32 %v2102, %v2186
        %v2190 = vmax.f32 %v2189, 0.0
        %s2191 = scalar_lea.vmem %s225, 32 [#allocation5]
        %2192 = vst.msk [vmem:[%s2191] sm:$0xff] %vm635, %v2190
        %s2193 = sadd.s32 %s241, 5
        %s2194 = sshra.s32 %s2193, 7
        %s2195 = sand.u32 %s2193, 127
        %s2196 = sadd.s32 %s2194, %s34
        %s2197 = smul.u32 %s2196, 128
        %s2198 = sshra.s32 %s2193, 7
        %s2199 = sand.u32 %s2193, 127
        %s2200 = sadd.s32 %s2197, %s2199
        %s2201 = sld [smem:[#allocation3 + %s2200]]
        %s2202 = sld [smem:[#allocation4 + %s2200]]
        %v2203 = vstv %s2201
        %v2204 = vadd.s32 %v2203, %v242
        %2205 = vset.pattern.permute.xlu0 0
        %2206 = vperm.xlu0 %2205, %v2204
        %v2207 = vpop.permute.xlu0 %2206
        %vm2208 = vcmp.eq.s32.totalorder %v245, %v2207
        %v2209 = vsel %vm2208, 1, 0
        %v2210 = vcvt.s32.f32 %v2209
        %v2211 = vadd.s32 %v2203, %v243
        %2212 = vset.pattern.permute.xlu0 0
        %2213 = vperm.xlu0 %2212, %v2211
        %v2214 = vpop.permute.xlu0 %2213
        %vm2215 = vcmp.eq.s32.totalorder %v245, %v2214
        %v2216 = vsel %vm2215, 1, 0
        %v2217 = vcvt.s32.f32 %v2216
        %v2218 = vstv %s2202
        %v2219 = vadd.s32 %v2218, %v242
        %2220 = vset.pattern.permute.xlu0 0
        %2221 = vperm.xlu0 %2220, %v2219
        %v2222 = vpop.permute.xlu0 %2221
        %vm2223 = vcmp.eq.s32.totalorder %v245, %v2222
        %v2224 = vsel %vm2223, 1, 0
        %v2225 = vcvt.s32.f32 %v2224
        %v2226 = vadd.s32 %v2218, %v243
        %2227 = vset.pattern.permute.xlu0 0
        %2228 = vperm.xlu0 %2227, %v2226
        %v2229 = vpop.permute.xlu0 %2228
        %vm2230 = vcmp.eq.s32.totalorder %v245, %v2229
        %v2231 = vsel %vm2230, 1, 0
        %v2232 = vcvt.s32.f32 %v2231
        %v2233 = vld [vmem:[%s4] sm:$0xff]
        %v2234 = vld [vmem:[%s4 + $0x8] sm:$0xff]
        %v2235 = vld [vmem:[%s4 + $0x10] sm:$0xff]
        %v2236 = vld [vmem:[%s4 + $0x18] sm:$0xff]
        %v2237 = vld [vmem:[%s4 + $0x20] sm:$0xff]
        %v2238 = vld [vmem:[%s4 + $0x28] sm:$0xff]
        %v2239 = vld [vmem:[%s4 + $0x30] sm:$0xff]
        %v2240 = vld [vmem:[%s4 + $0x38] sm:$0xff]
        %v2241 = vld [vmem:[%s4 + $0x40] sm:$0xff]
        %v2242 = vld [vmem:[%s4 + $0x48] sm:$0xff]
        %v2243 = vld [vmem:[%s4 + $0x50] sm:$0xff]
        %v2244 = vld [vmem:[%s4 + $0x58] sm:$0xff]
        %v2245 = vld [vmem:[%s4 + $0x60] sm:$0xff]
        %v2246 = vld [vmem:[%s4 + $0x68] sm:$0xff]
        %v2247 = vld [vmem:[%s4 + $0x70] sm:$0xff]
        %v2248 = vld [vmem:[%s4 + $0x78] sm:$0xff]
        %v2249 = vld [vmem:[%s301] sm:$0xff]
        %v2250 = vld [vmem:[%s301 + $0x8] sm:$0xff]
        %v2251 = vld [vmem:[%s301 + $0x10] sm:$0xff]
        %v2252 = vld [vmem:[%s301 + $0x18] sm:$0xff]
        %v2253 = vld [vmem:[%s301 + $0x20] sm:$0xff]
        %v2254 = vld [vmem:[%s301 + $0x28] sm:$0xff]
        %v2255 = vld [vmem:[%s301 + $0x30] sm:$0xff]
        %v2256 = vld [vmem:[%s301 + $0x38] sm:$0xff]
        %v2257 = vld [vmem:[%s301 + $0x40] sm:$0xff]
        %v2258 = vld [vmem:[%s301 + $0x48] sm:$0xff]
        %v2259 = vld [vmem:[%s301 + $0x50] sm:$0xff]
        %v2260 = vld [vmem:[%s301 + $0x58] sm:$0xff]
        %v2261 = vld [vmem:[%s301 + $0x60] sm:$0xff]
        %v2262 = vld [vmem:[%s301 + $0x68] sm:$0xff]
        %v2263 = vld [vmem:[%s301 + $0x70] sm:$0xff]
        %v2264 = vld [vmem:[%s301 + $0x78] sm:$0xff]
        %2265 = vmatprep.subr.mxu0 0.0
        %2266 = vmatpush1.msra.mxu0 %v2249
        %2267 = vmatprep.subr.mxu0 0.0
        %2268 = vmatpush1.msra.mxu0 %v2250
        %2269 = vmatprep.subr.mxu0 0.0
        %2270 = vmatpush1.msra.mxu0 %v2251
        %2271 = vmatprep.subr.mxu0 0.0
        %2272 = vmatpush1.msra.mxu0 %v2252
        %2273 = vmatprep.subr.mxu0 0.0
        %2274 = vmatpush1.msra.mxu0 %v2253
        %2275 = vmatprep.subr.mxu0 0.0
        %2276 = vmatpush1.msra.mxu0 %v2254
        %2277 = vmatprep.subr.mxu0 0.0
        %2278 = vmatpush1.msra.mxu0 %v2255
        %2279 = vmatprep.subr.mxu0 0.0
        %2280 = vmatpush1.msra.mxu0 %v2256
        %2281 = vmatprep.subr.mxu0 0.0
        %2282 = vmatpush1.msra.mxu0 %v2257
        %2283 = vmatprep.subr.mxu0 0.0
        %2284 = vmatpush1.msra.mxu0 %v2258
        %2285 = vmatprep.subr.mxu0 0.0
        %2286 = vmatpush1.msra.mxu0 %v2259
        %2287 = vmatprep.subr.mxu0 0.0
        %2288 = vmatpush1.msra.mxu0 %v2260
        %2289 = vmatprep.subr.mxu0 0.0
        %2290 = vmatpush1.msra.mxu0 %v2261
        %2291 = vmatprep.subr.mxu0 0.0
        %2292 = vmatpush1.msra.mxu0 %v2262
        %2293 = vmatprep.subr.mxu0 0.0
        %2294 = vmatpush1.msra.mxu0 %v2263
        %2295 = vmatprep.subr.mxu0 0.0
        %2296 = vmatpush1.msra.mxu0 %v2264
        %2297 = vmatprep.subr.mxu0 0.0
        %2298 = vmatpush1.msra.mxu0 0.0
        %2299 = vmatprep.subr.mxu0 0.0
        %2300 = vmatpush1.msra.mxu0 0.0
        %2301 = vmatprep.subr.mxu0 0.0
        %2302 = vmatpush1.msra.mxu0 0.0
        %2303 = vmatprep.subr.mxu0 0.0
        %2304 = vmatpush1.msra.mxu0 0.0
        %2305 = vmatprep.subr.mxu0 0.0
        %2306 = vmatpush1.msra.mxu0 0.0
        %2307 = vmatprep.subr.mxu0 0.0
        %2308 = vmatpush1.msra.mxu0 0.0
        %2309 = vmatprep.subr.mxu0 0.0
        %2310 = vmatpush1.msra.mxu0 0.0
        %2311 = vmatprep.subr.mxu0 0.0
        %2312 = vmatpush1.msra.mxu0 0.0
        %2313 = vmatprep.subr.mxu0 0.0
        %2314 = vmatpush1.msra.mxu0 0.0
        %2315 = vmatprep.subr.mxu0 0.0
        %2316 = vmatpush1.msra.mxu0 0.0
        %2317 = vmatprep.subr.mxu0 0.0
        %2318 = vmatpush1.msra.mxu0 0.0
        %2319 = vmatprep.subr.mxu0 0.0
        %2320 = vmatpush1.msra.mxu0 0.0
        %2321 = vmatprep.subr.mxu0 0.0
        %2322 = vmatpush1.msra.mxu0 0.0
        %2323 = vmatprep.subr.mxu0 0.0
        %2324 = vmatpush1.msra.mxu0 0.0
        %2325 = vmatprep.subr.mxu0 0.0
        %2326 = vmatpush1.msra.mxu0 0.0
        %2327 = vmatprep.subr.mxu0 0.0
        %2328 = vmatpush1.msra.mxu0 0.0
        %2329 = vmatprep.mubr.f32.mxu0 0.0
        %2330 = vmatmul.mubr.f32.gmra.mrb[0].mxu0 %v2217
        %v2331 = vpop.f32.mrb[0].mxu0
        %v2332 = vadd.f32 0.0, %v2331
        %v2333 = vpop.f32.mrb[0].mxu0
        %2334 = vdwg.mxu0
        %2335 = vmatprep.subr.mxu0 0.0
        %2336 = vmatpush1.msra.mxu0 %v2233
        %2337 = vmatprep.subr.mxu0 0.0
        %2338 = vmatpush1.msra.mxu0 %v2234
        %2339 = vmatprep.subr.mxu0 0.0
        %2340 = vmatpush1.msra.mxu0 %v2235
        %2341 = vmatprep.subr.mxu0 0.0
        %2342 = vmatpush1.msra.mxu0 %v2236
        %2343 = vmatprep.subr.mxu0 0.0
        %2344 = vmatpush1.msra.mxu0 %v2237
        %2345 = vmatprep.subr.mxu0 0.0
        %2346 = vmatpush1.msra.mxu0 %v2238
        %2347 = vmatprep.subr.mxu0 0.0
        %2348 = vmatpush1.msra.mxu0 %v2239
        %2349 = vmatprep.subr.mxu0 0.0
        %2350 = vmatpush1.msra.mxu0 %v2240
        %2351 = vmatprep.subr.mxu0 0.0
        %2352 = vmatpush1.msra.mxu0 %v2241
        %2353 = vmatprep.subr.mxu0 0.0
        %2354 = vmatpush1.msra.mxu0 %v2242
        %2355 = vmatprep.subr.mxu0 0.0
        %2356 = vmatpush1.msra.mxu0 %v2243
        %2357 = vmatprep.subr.mxu0 0.0
        %2358 = vmatpush1.msra.mxu0 %v2244
        %2359 = vmatprep.subr.mxu0 0.0
        %2360 = vmatpush1.msra.mxu0 %v2245
        %2361 = vmatprep.subr.mxu0 0.0
        %2362 = vmatpush1.msra.mxu0 %v2246
        %2363 = vmatprep.subr.mxu0 0.0
        %2364 = vmatpush1.msra.mxu0 %v2247
        %2365 = vmatprep.subr.mxu0 0.0
        %2366 = vmatpush1.msra.mxu0 %v2248
        %2367 = vmatprep.subr.mxu0 0.0
        %2368 = vmatpush1.msra.mxu0 0.0
        %2369 = vmatprep.subr.mxu0 0.0
        %2370 = vmatpush1.msra.mxu0 0.0
        %2371 = vmatprep.subr.mxu0 0.0
        %2372 = vmatpush1.msra.mxu0 0.0
        %2373 = vmatprep.subr.mxu0 0.0
        %2374 = vmatpush1.msra.mxu0 0.0
        %2375 = vmatprep.subr.mxu0 0.0
        %2376 = vmatpush1.msra.mxu0 0.0
        %2377 = vmatprep.subr.mxu0 0.0
        %2378 = vmatpush1.msra.mxu0 0.0
        %2379 = vmatprep.subr.mxu0 0.0
        %2380 = vmatpush1.msra.mxu0 0.0
        %2381 = vmatprep.subr.mxu0 0.0
        %2382 = vmatpush1.msra.mxu0 0.0
        %2383 = vmatprep.subr.mxu0 0.0
        %2384 = vmatpush1.msra.mxu0 0.0
        %2385 = vmatprep.subr.mxu0 0.0
        %2386 = vmatpush1.msra.mxu0 0.0
        %2387 = vmatprep.subr.mxu0 0.0
        %2388 = vmatpush1.msra.mxu0 0.0
        %2389 = vmatprep.subr.mxu0 0.0
        %2390 = vmatpush1.msra.mxu0 0.0
        %2391 = vmatprep.subr.mxu0 0.0
        %2392 = vmatpush1.msra.mxu0 0.0
        %2393 = vmatprep.subr.mxu0 0.0
        %2394 = vmatpush1.msra.mxu0 0.0
        %2395 = vmatprep.subr.mxu0 0.0
        %2396 = vmatpush1.msra.mxu0 0.0
        %2397 = vmatprep.subr.mxu0 0.0
        %2398 = vmatpush1.msra.mxu0 0.0
        %2399 = vmatprep.mubr.f32.mxu0 0.0
        %2400 = vmatmul.mubr.f32.gmra.mrb[0].mxu0 %v2210
        %v2401 = vpop.f32.mrb[0].mxu0
        %v2402 = vadd.f32 %v2332, %v2401
        %v2403 = vpop.f32.mrb[0].mxu0
        %2404 = vdwg.mxu0
        %v2405 = vld [vmem:[%s458] sm:$0xff]
        %v2406 = vld [vmem:[%s458 + $0x8] sm:$0xff]
        %v2407 = vld [vmem:[%s458 + $0x10] sm:$0xff]
        %v2408 = vld [vmem:[%s458 + $0x18] sm:$0xff]
        %v2409 = vld [vmem:[%s458 + $0x20] sm:$0xff]
        %v2410 = vld [vmem:[%s458 + $0x28] sm:$0xff]
        %v2411 = vld [vmem:[%s458 + $0x30] sm:$0xff]
        %v2412 = vld [vmem:[%s458 + $0x38] sm:$0xff]
        %v2413 = vld [vmem:[%s458 + $0x40] sm:$0xff]
        %v2414 = vld [vmem:[%s458 + $0x48] sm:$0xff]
        %v2415 = vld [vmem:[%s458 + $0x50] sm:$0xff]
        %v2416 = vld [vmem:[%s458 + $0x58] sm:$0xff]
        %v2417 = vld [vmem:[%s458 + $0x60] sm:$0xff]
        %v2418 = vld [vmem:[%s458 + $0x68] sm:$0xff]
        %v2419 = vld [vmem:[%s458 + $0x70] sm:$0xff]
        %v2420 = vld [vmem:[%s458 + $0x78] sm:$0xff]
        %2421 = vmatprep.subr.mxu0 0.0
        %2422 = vmatpush1.msra.mxu0 %v2405
        %2423 = vmatprep.subr.mxu0 0.0
        %2424 = vmatpush1.msra.mxu0 %v2406
        %2425 = vmatprep.subr.mxu0 0.0
        %2426 = vmatpush1.msra.mxu0 %v2407
        %2427 = vmatprep.subr.mxu0 0.0
        %2428 = vmatpush1.msra.mxu0 %v2408
        %2429 = vmatprep.subr.mxu0 0.0
        %2430 = vmatpush1.msra.mxu0 %v2409
        %2431 = vmatprep.subr.mxu0 0.0
        %2432 = vmatpush1.msra.mxu0 %v2410
        %2433 = vmatprep.subr.mxu0 0.0
        %2434 = vmatpush1.msra.mxu0 %v2411
        %2435 = vmatprep.subr.mxu0 0.0
        %2436 = vmatpush1.msra.mxu0 %v2412
        %2437 = vmatprep.subr.mxu0 0.0
        %2438 = vmatpush1.msra.mxu0 %v2413
        %2439 = vmatprep.subr.mxu0 0.0
        %2440 = vmatpush1.msra.mxu0 %v2414
        %2441 = vmatprep.subr.mxu0 0.0
        %2442 = vmatpush1.msra.mxu0 %v2415
        %2443 = vmatprep.subr.mxu0 0.0
        %2444 = vmatpush1.msra.mxu0 %v2416
        %2445 = vmatprep.subr.mxu0 0.0
        %2446 = vmatpush1.msra.mxu0 %v2417
        %2447 = vmatprep.subr.mxu0 0.0
        %2448 = vmatpush1.msra.mxu0 %v2418
        %2449 = vmatprep.subr.mxu0 0.0
        %2450 = vmatpush1.msra.mxu0 %v2419
        %2451 = vmatprep.subr.mxu0 0.0
        %2452 = vmatpush1.msra.mxu0 %v2420
        %2453 = vmatprep.subr.mxu0 0.0
        %2454 = vmatpush1.msra.mxu0 0.0
        %2455 = vmatprep.subr.mxu0 0.0
        %2456 = vmatpush1.msra.mxu0 0.0
        %2457 = vmatprep.subr.mxu0 0.0
        %2458 = vmatpush1.msra.mxu0 0.0
        %2459 = vmatprep.subr.mxu0 0.0
        %2460 = vmatpush1.msra.mxu0 0.0
        %2461 = vmatprep.subr.mxu0 0.0
        %2462 = vmatpush1.msra.mxu0 0.0
        %2463 = vmatprep.subr.mxu0 0.0
        %2464 = vmatpush1.msra.mxu0 0.0
        %2465 = vmatprep.subr.mxu0 0.0
        %2466 = vmatpush1.msra.mxu0 0.0
        %2467 = vmatprep.subr.mxu0 0.0
        %2468 = vmatpush1.msra.mxu0 0.0
        %2469 = vmatprep.subr.mxu0 0.0
        %2470 = vmatpush1.msra.mxu0 0.0
        %2471 = vmatprep.subr.mxu0 0.0
        %2472 = vmatpush1.msra.mxu0 0.0
        %2473 = vmatprep.subr.mxu0 0.0
        %2474 = vmatpush1.msra.mxu0 0.0
        %2475 = vmatprep.subr.mxu0 0.0
        %2476 = vmatpush1.msra.mxu0 0.0
        %2477 = vmatprep.subr.mxu0 0.0
        %2478 = vmatpush1.msra.mxu0 0.0
        %2479 = vmatprep.subr.mxu0 0.0
        %2480 = vmatpush1.msra.mxu0 0.0
        %2481 = vmatprep.subr.mxu0 0.0
        %2482 = vmatpush1.msra.mxu0 0.0
        %2483 = vmatprep.subr.mxu0 0.0
        %2484 = vmatpush1.msra.mxu0 0.0
        %2485 = vmatprep.mubr.f32.mxu0 0.0
        %2486 = vmatmul.mubr.f32.gmra.mrb[0].mxu0 %v2225
        %v2487 = vpop.f32.mrb[0].mxu0
        %v2488 = vadd.f32 0.0, %v2487
        %v2489 = vpop.f32.mrb[0].mxu0
        %2490 = vdwg.mxu0
        %v2491 = vadd.f32 %v2402, %v2488
        %v2492 = vld [vmem:[%s546] sm:$0xff]
        %v2493 = vld [vmem:[%s546 + $0x8] sm:$0xff]
        %v2494 = vld [vmem:[%s546 + $0x10] sm:$0xff]
        %v2495 = vld [vmem:[%s546 + $0x18] sm:$0xff]
        %v2496 = vld [vmem:[%s546 + $0x20] sm:$0xff]
        %v2497 = vld [vmem:[%s546 + $0x28] sm:$0xff]
        %v2498 = vld [vmem:[%s546 + $0x30] sm:$0xff]
        %v2499 = vld [vmem:[%s546 + $0x38] sm:$0xff]
        %v2500 = vld [vmem:[%s546 + $0x40] sm:$0xff]
        %v2501 = vld [vmem:[%s546 + $0x48] sm:$0xff]
        %v2502 = vld [vmem:[%s546 + $0x50] sm:$0xff]
        %v2503 = vld [vmem:[%s546 + $0x58] sm:$0xff]
        %v2504 = vld [vmem:[%s546 + $0x60] sm:$0xff]
        %v2505 = vld [vmem:[%s546 + $0x68] sm:$0xff]
        %v2506 = vld [vmem:[%s546 + $0x70] sm:$0xff]
        %v2507 = vld [vmem:[%s546 + $0x78] sm:$0xff]
        %2508 = vmatprep.subr.mxu0 0.0
        %2509 = vmatpush1.msra.mxu0 %v2492
        %2510 = vmatprep.subr.mxu0 0.0
        %2511 = vmatpush1.msra.mxu0 %v2493
        %2512 = vmatprep.subr.mxu0 0.0
        %2513 = vmatpush1.msra.mxu0 %v2494
        %2514 = vmatprep.subr.mxu0 0.0
        %2515 = vmatpush1.msra.mxu0 %v2495
        %2516 = vmatprep.subr.mxu0 0.0
        %2517 = vmatpush1.msra.mxu0 %v2496
        %2518 = vmatprep.subr.mxu0 0.0
        %2519 = vmatpush1.msra.mxu0 %v2497
        %2520 = vmatprep.subr.mxu0 0.0
        %2521 = vmatpush1.msra.mxu0 %v2498
        %2522 = vmatprep.subr.mxu0 0.0
        %2523 = vmatpush1.msra.mxu0 %v2499
        %2524 = vmatprep.subr.mxu0 0.0
        %2525 = vmatpush1.msra.mxu0 %v2500
        %2526 = vmatprep.subr.mxu0 0.0
        %2527 = vmatpush1.msra.mxu0 %v2501
        %2528 = vmatprep.subr.mxu0 0.0
        %2529 = vmatpush1.msra.mxu0 %v2502
        %2530 = vmatprep.subr.mxu0 0.0
        %2531 = vmatpush1.msra.mxu0 %v2503
        %2532 = vmatprep.subr.mxu0 0.0
        %2533 = vmatpush1.msra.mxu0 %v2504
        %2534 = vmatprep.subr.mxu0 0.0
        %2535 = vmatpush1.msra.mxu0 %v2505
        %2536 = vmatprep.subr.mxu0 0.0
        %2537 = vmatpush1.msra.mxu0 %v2506
        %2538 = vmatprep.subr.mxu0 0.0
        %2539 = vmatpush1.msra.mxu0 %v2507
        %2540 = vmatprep.subr.mxu0 0.0
        %2541 = vmatpush1.msra.mxu0 0.0
        %2542 = vmatprep.subr.mxu0 0.0
        %2543 = vmatpush1.msra.mxu0 0.0
        %2544 = vmatprep.subr.mxu0 0.0
        %2545 = vmatpush1.msra.mxu0 0.0
        %2546 = vmatprep.subr.mxu0 0.0
        %2547 = vmatpush1.msra.mxu0 0.0
        %2548 = vmatprep.subr.mxu0 0.0
        %2549 = vmatpush1.msra.mxu0 0.0
        %2550 = vmatprep.subr.mxu0 0.0
        %2551 = vmatpush1.msra.mxu0 0.0
        %2552 = vmatprep.subr.mxu0 0.0
        %2553 = vmatpush1.msra.mxu0 0.0
        %2554 = vmatprep.subr.mxu0 0.0
        %2555 = vmatpush1.msra.mxu0 0.0
        %2556 = vmatprep.subr.mxu0 0.0
        %2557 = vmatpush1.msra.mxu0 0.0
        %2558 = vmatprep.subr.mxu0 0.0
        %2559 = vmatpush1.msra.mxu0 0.0
        %2560 = vmatprep.subr.mxu0 0.0
        %2561 = vmatpush1.msra.mxu0 0.0
        %2562 = vmatprep.subr.mxu0 0.0
        %2563 = vmatpush1.msra.mxu0 0.0
        %2564 = vmatprep.subr.mxu0 0.0
        %2565 = vmatpush1.msra.mxu0 0.0
        %2566 = vmatprep.subr.mxu0 0.0
        %2567 = vmatpush1.msra.mxu0 0.0
        %2568 = vmatprep.subr.mxu0 0.0
        %2569 = vmatpush1.msra.mxu0 0.0
        %2570 = vmatprep.subr.mxu0 0.0
        %2571 = vmatpush1.msra.mxu0 0.0
        %2572 = vmatprep.mubr.f32.mxu0 0.0
        %2573 = vmatmul.mubr.f32.gmra.mrb[0].mxu0 %v2232
        %v2574 = vpop.f32.mrb[0].mxu0
        %v2575 = vadd.f32 0.0, %v2574
        %v2576 = vpop.f32.mrb[0].mxu0
        %2577 = vdwg.mxu0
        %v2578 = vadd.f32 %v2491, %v2575
        %v2579 = vmax.f32 %v2578, 0.0
        %s2580 = scalar_lea.vmem %s225, 40 [#allocation5]
        %2581 = vst.msk [vmem:[%s2580] sm:$0xff] %vm635, %v2579
        %s2582 = sadd.s32 %s241, 6
        %s2583 = sshra.s32 %s2582, 7
        %s2584 = sand.u32 %s2582, 127
        %s2585 = sadd.s32 %s2583, %s34
        %s2586 = smul.u32 %s2585, 128
        %s2587 = sshra.s32 %s2582, 7
        %s2588 = sand.u32 %s2582, 127
        %s2589 = sadd.s32 %s2586, %s2588
        %s2590 = sld [smem:[#allocation3 + %s2589]]
        %s2591 = sld [smem:[#allocation4 + %s2589]]
        %v2592 = vstv %s2590
        %v2593 = vadd.s32 %v2592, %v242
        %2594 = vset.pattern.permute.xlu0 0
        %2595 = vperm.xlu0 %2594, %v2593
        %v2596 = vpop.permute.xlu0 %2595
        %vm2597 = vcmp.eq.s32.totalorder %v245, %v2596
        %v2598 = vsel %vm2597, 1, 0
        %v2599 = vcvt.s32.f32 %v2598
        %v2600 = vadd.s32 %v2592, %v243
        %2601 = vset.pattern.permute.xlu0 0
        %2602 = vperm.xlu0 %2601, %v2600
        %v2603 = vpop.permute.xlu0 %2602
        %vm2604 = vcmp.eq.s32.totalorder %v245, %v2603
        %v2605 = vsel %vm2604, 1, 0
        %v2606 = vcvt.s32.f32 %v2605
        %v2607 = vstv %s2591
        %v2608 = vadd.s32 %v2607, %v242
        %2609 = vset.pattern.permute.xlu0 0
        %2610 = vperm.xlu0 %2609, %v2608
        %v2611 = vpop.permute.xlu0 %2610
        %vm2612 = vcmp.eq.s32.totalorder %v245, %v2611
        %v2613 = vsel %vm2612, 1, 0
        %v2614 = vcvt.s32.f32 %v2613
        %v2615 = vadd.s32 %v2607, %v243
        %2616 = vset.pattern.permute.xlu0 0
        %2617 = vperm.xlu0 %2616, %v2615
        %v2618 = vpop.permute.xlu0 %2617
        %vm2619 = vcmp.eq.s32.totalorder %v245, %v2618
        %v2620 = vsel %vm2619, 1, 0
        %v2621 = vcvt.s32.f32 %v2620
        %v2622 = vld [vmem:[%s4] sm:$0xff]
        %v2623 = vld [vmem:[%s4 + $0x8] sm:$0xff]
        %v2624 = vld [vmem:[%s4 + $0x10] sm:$0xff]
        %v2625 = vld [vmem:[%s4 + $0x18] sm:$0xff]
        %v2626 = vld [vmem:[%s4 + $0x20] sm:$0xff]
        %v2627 = vld [vmem:[%s4 + $0x28] sm:$0xff]
        %v2628 = vld [vmem:[%s4 + $0x30] sm:$0xff]
        %v2629 = vld [vmem:[%s4 + $0x38] sm:$0xff]
        %v2630 = vld [vmem:[%s4 + $0x40] sm:$0xff]
        %v2631 = vld [vmem:[%s4 + $0x48] sm:$0xff]
        %v2632 = vld [vmem:[%s4 + $0x50] sm:$0xff]
        %v2633 = vld [vmem:[%s4 + $0x58] sm:$0xff]
        %v2634 = vld [vmem:[%s4 + $0x60] sm:$0xff]
        %v2635 = vld [vmem:[%s4 + $0x68] sm:$0xff]
        %v2636 = vld [vmem:[%s4 + $0x70] sm:$0xff]
        %v2637 = vld [vmem:[%s4 + $0x78] sm:$0xff]
        %v2638 = vld [vmem:[%s301] sm:$0xff]
        %v2639 = vld [vmem:[%s301 + $0x8] sm:$0xff]
        %v2640 = vld [vmem:[%s301 + $0x10] sm:$0xff]
        %v2641 = vld [vmem:[%s301 + $0x18] sm:$0xff]
        %v2642 = vld [vmem:[%s301 + $0x20] sm:$0xff]
        %v2643 = vld [vmem:[%s301 + $0x28] sm:$0xff]
        %v2644 = vld [vmem:[%s301 + $0x30] sm:$0xff]
        %v2645 = vld [vmem:[%s301 + $0x38] sm:$0xff]
        %v2646 = vld [vmem:[%s301 + $0x40] sm:$0xff]
        %v2647 = vld [vmem:[%s301 + $0x48] sm:$0xff]
        %v2648 = vld [vmem:[%s301 + $0x50] sm:$0xff]
        %v2649 = vld [vmem:[%s301 + $0x58] sm:$0xff]
        %v2650 = vld [vmem:[%s301 + $0x60] sm:$0xff]
        %v2651 = vld [vmem:[%s301 + $0x68] sm:$0xff]
        %v2652 = vld [vmem:[%s301 + $0x70] sm:$0xff]
        %v2653 = vld [vmem:[%s301 + $0x78] sm:$0xff]
        %2654 = vmatprep.subr.mxu0 0.0
        %2655 = vmatpush1.msra.mxu0 %v2638
        %2656 = vmatprep.subr.mxu0 0.0
        %2657 = vmatpush1.msra.mxu0 %v2639
        %2658 = vmatprep.subr.mxu0 0.0
        %2659 = vmatpush1.msra.mxu0 %v2640
        %2660 = vmatprep.subr.mxu0 0.0
        %2661 = vmatpush1.msra.mxu0 %v2641
        %2662 = vmatprep.subr.mxu0 0.0
        %2663 = vmatpush1.msra.mxu0 %v2642
        %2664 = vmatprep.subr.mxu0 0.0
        %2665 = vmatpush1.msra.mxu0 %v2643
        %2666 = vmatprep.subr.mxu0 0.0
        %2667 = vmatpush1.msra.mxu0 %v2644
        %2668 = vmatprep.subr.mxu0 0.0
        %2669 = vmatpush1.msra.mxu0 %v2645
        %2670 = vmatprep.subr.mxu0 0.0
        %2671 = vmatpush1.msra.mxu0 %v2646
        %2672 = vmatprep.subr.mxu0 0.0
        %2673 = vmatpush1.msra.mxu0 %v2647
        %2674 = vmatprep.subr.mxu0 0.0
        %2675 = vmatpush1.msra.mxu0 %v2648
        %2676 = vmatprep.subr.mxu0 0.0
        %2677 = vmatpush1.msra.mxu0 %v2649
        %2678 = vmatprep.subr.mxu0 0.0
        %2679 = vmatpush1.msra.mxu0 %v2650
        %2680 = vmatprep.subr.mxu0 0.0
        %2681 = vmatpush1.msra.mxu0 %v2651
        %2682 = vmatprep.subr.mxu0 0.0
        %2683 = vmatpush1.msra.mxu0 %v2652
        %2684 = vmatprep.subr.mxu0 0.0
        %2685 = vmatpush1.msra.mxu0 %v2653
        %2686 = vmatprep.subr.mxu0 0.0
        %2687 = vmatpush1.msra.mxu0 0.0
        %2688 = vmatprep.subr.mxu0 0.0
        %2689 = vmatpush1.msra.mxu0 0.0
        %2690 = vmatprep.subr.mxu0 0.0
        %2691 = vmatpush1.msra.mxu0 0.0
        %2692 = vmatprep.subr.mxu0 0.0
        %2693 = vmatpush1.msra.mxu0 0.0
        %2694 = vmatprep.subr.mxu0 0.0
        %2695 = vmatpush1.msra.mxu0 0.0
        %2696 = vmatprep.subr.mxu0 0.0
        %2697 = vmatpush1.msra.mxu0 0.0
        %2698 = vmatprep.subr.mxu0 0.0
        %2699 = vmatpush1.msra.mxu0 0.0
        %2700 = vmatprep.subr.mxu0 0.0
        %2701 = vmatpush1.msra.mxu0 0.0
        %2702 = vmatprep.subr.mxu0 0.0
        %2703 = vmatpush1.msra.mxu0 0.0
        %2704 = vmatprep.subr.mxu0 0.0
        %2705 = vmatpush1.msra.mxu0 0.0
        %2706 = vmatprep.subr.mxu0 0.0
        %2707 = vmatpush1.msra.mxu0 0.0
        %2708 = vmatprep.subr.mxu0 0.0
        %2709 = vmatpush1.msra.mxu0 0.0
        %2710 = vmatprep.subr.mxu0 0.0
        %2711 = vmatpush1.msra.mxu0 0.0
        %2712 = vmatprep.subr.mxu0 0.0
        %2713 = vmatpush1.msra.mxu0 0.0
        %2714 = vmatprep.subr.mxu0 0.0
        %2715 = vmatpush1.msra.mxu0 0.0
        %2716 = vmatprep.subr.mxu0 0.0
        %2717 = vmatpush1.msra.mxu0 0.0
        %2718 = vmatprep.mubr.f32.mxu0 0.0
        %2719 = vmatmul.mubr.f32.gmra.mrb[0].mxu0 %v2606
        %v2720 = vpop.f32.mrb[0].mxu0
        %v2721 = vadd.f32 0.0, %v2720
        %v2722 = vpop.f32.mrb[0].mxu0
        %2723 = vdwg.mxu0
        %2724 = vmatprep.subr.mxu0 0.0
        %2725 = vmatpush1.msra.mxu0 %v2622
        %2726 = vmatprep.subr.mxu0 0.0
        %2727 = vmatpush1.msra.mxu0 %v2623
        %2728 = vmatprep.subr.mxu0 0.0
        %2729 = vmatpush1.msra.mxu0 %v2624
        %2730 = vmatprep.subr.mxu0 0.0
        %2731 = vmatpush1.msra.mxu0 %v2625
        %2732 = vmatprep.subr.mxu0 0.0
        %2733 = vmatpush1.msra.mxu0 %v2626
        %2734 = vmatprep.subr.mxu0 0.0
        %2735 = vmatpush1.msra.mxu0 %v2627
        %2736 = vmatprep.subr.mxu0 0.0
        %2737 = vmatpush1.msra.mxu0 %v2628
        %2738 = vmatprep.subr.mxu0 0.0
        %2739 = vmatpush1.msra.mxu0 %v2629
        %2740 = vmatprep.subr.mxu0 0.0
        %2741 = vmatpush1.msra.mxu0 %v2630
        %2742 = vmatprep.subr.mxu0 0.0
        %2743 = vmatpush1.msra.mxu0 %v2631
        %2744 = vmatprep.subr.mxu0 0.0
        %2745 = vmatpush1.msra.mxu0 %v2632
        %2746 = vmatprep.subr.mxu0 0.0
        %2747 = vmatpush1.msra.mxu0 %v2633
        %2748 = vmatprep.subr.mxu0 0.0
        %2749 = vmatpush1.msra.mxu0 %v2634
        %2750 = vmatprep.subr.mxu0 0.0
        %2751 = vmatpush1.msra.mxu0 %v2635
        %2752 = vmatprep.subr.mxu0 0.0
        %2753 = vmatpush1.msra.mxu0 %v2636
        %2754 = vmatprep.subr.mxu0 0.0
        %2755 = vmatpush1.msra.mxu0 %v2637
        %2756 = vmatprep.subr.mxu0 0.0
        %2757 = vmatpush1.msra.mxu0 0.0
        %2758 = vmatprep.subr.mxu0 0.0
        %2759 = vmatpush1.msra.mxu0 0.0
        %2760 = vmatprep.subr.mxu0 0.0
        %2761 = vmatpush1.msra.mxu0 0.0
        %2762 = vmatprep.subr.mxu0 0.0
        %2763 = vmatpush1.msra.mxu0 0.0
        %2764 = vmatprep.subr.mxu0 0.0
        %2765 = vmatpush1.msra.mxu0 0.0
        %2766 = vmatprep.subr.mxu0 0.0
        %2767 = vmatpush1.msra.mxu0 0.0
        %2768 = vmatprep.subr.mxu0 0.0
        %2769 = vmatpush1.msra.mxu0 0.0
        %2770 = vmatprep.subr.mxu0 0.0
        %2771 = vmatpush1.msra.mxu0 0.0
        %2772 = vmatprep.subr.mxu0 0.0
        %2773 = vmatpush1.msra.mxu0 0.0
        %2774 = vmatprep.subr.mxu0 0.0
        %2775 = vmatpush1.msra.mxu0 0.0
        %2776 = vmatprep.subr.mxu0 0.0
        %2777 = vmatpush1.msra.mxu0 0.0
        %2778 = vmatprep.subr.mxu0 0.0
        %2779 = vmatpush1.msra.mxu0 0.0
        %2780 = vmatprep.subr.mxu0 0.0
        %2781 = vmatpush1.msra.mxu0 0.0
        %2782 = vmatprep.subr.mxu0 0.0
        %2783 = vmatpush1.msra.mxu0 0.0
        %2784 = vmatprep.subr.mxu0 0.0
        %2785 = vmatpush1.msra.mxu0 0.0
        %2786 = vmatprep.subr.mxu0 0.0
        %2787 = vmatpush1.msra.mxu0 0.0
        %2788 = vmatprep.mubr.f32.mxu0 0.0
        %2789 = vmatmul.mubr.f32.gmra.mrb[0].mxu0 %v2599
        %v2790 = vpop.f32.mrb[0].mxu0
        %v2791 = vadd.f32 %v2721, %v2790
        %v2792 = vpop.f32.mrb[0].mxu0
        %2793 = vdwg.mxu0
        %v2794 = vld [vmem:[%s458] sm:$0xff]
        %v2795 = vld [vmem:[%s458 + $0x8] sm:$0xff]
        %v2796 = vld [vmem:[%s458 + $0x10] sm:$0xff]
        %v2797 = vld [vmem:[%s458 + $0x18] sm:$0xff]
        %v2798 = vld [vmem:[%s458 + $0x20] sm:$0xff]
        %v2799 = vld [vmem:[%s458 + $0x28] sm:$0xff]
        %v2800 = vld [vmem:[%s458 + $0x30] sm:$0xff]
        %v2801 = vld [vmem:[%s458 + $0x38] sm:$0xff]
        %v2802 = vld [vmem:[%s458 + $0x40] sm:$0xff]
        %v2803 = vld [vmem:[%s458 + $0x48] sm:$0xff]
        %v2804 = vld [vmem:[%s458 + $0x50] sm:$0xff]
        %v2805 = vld [vmem:[%s458 + $0x58] sm:$0xff]
        %v2806 = vld [vmem:[%s458 + $0x60] sm:$0xff]
        %v2807 = vld [vmem:[%s458 + $0x68] sm:$0xff]
        %v2808 = vld [vmem:[%s458 + $0x70] sm:$0xff]
        %v2809 = vld [vmem:[%s458 + $0x78] sm:$0xff]
        %2810 = vmatprep.subr.mxu0 0.0
        %2811 = vmatpush1.msra.mxu0 %v2794
        %2812 = vmatprep.subr.mxu0 0.0
        %2813 = vmatpush1.msra.mxu0 %v2795
        %2814 = vmatprep.subr.mxu0 0.0
        %2815 = vmatpush1.msra.mxu0 %v2796
        %2816 = vmatprep.subr.mxu0 0.0
        %2817 = vmatpush1.msra.mxu0 %v2797
        %2818 = vmatprep.subr.mxu0 0.0
        %2819 = vmatpush1.msra.mxu0 %v2798
        %2820 = vmatprep.subr.mxu0 0.0
        %2821 = vmatpush1.msra.mxu0 %v2799
        %2822 = vmatprep.subr.mxu0 0.0
        %2823 = vmatpush1.msra.mxu0 %v2800
        %2824 = vmatprep.subr.mxu0 0.0
        %2825 = vmatpush1.msra.mxu0 %v2801
        %2826 = vmatprep.subr.mxu0 0.0
        %2827 = vmatpush1.msra.mxu0 %v2802
        %2828 = vmatprep.subr.mxu0 0.0
        %2829 = vmatpush1.msra.mxu0 %v2803
        %2830 = vmatprep.subr.mxu0 0.0
        %2831 = vmatpush1.msra.mxu0 %v2804
        %2832 = vmatprep.subr.mxu0 0.0
        %2833 = vmatpush1.msra.mxu0 %v2805
        %2834 = vmatprep.subr.mxu0 0.0
        %2835 = vmatpush1.msra.mxu0 %v2806
        %2836 = vmatprep.subr.mxu0 0.0
        %2837 = vmatpush1.msra.mxu0 %v2807
        %2838 = vmatprep.subr.mxu0 0.0
        %2839 = vmatpush1.msra.mxu0 %v2808
        %2840 = vmatprep.subr.mxu0 0.0
        %2841 = vmatpush1.msra.mxu0 %v2809
        %2842 = vmatprep.subr.mxu0 0.0
        %2843 = vmatpush1.msra.mxu0 0.0
        %2844 = vmatprep.subr.mxu0 0.0
        %2845 = vmatpush1.msra.mxu0 0.0
        %2846 = vmatprep.subr.mxu0 0.0
        %2847 = vmatpush1.msra.mxu0 0.0
        %2848 = vmatprep.subr.mxu0 0.0
        %2849 = vmatpush1.msra.mxu0 0.0
        %2850 = vmatprep.subr.mxu0 0.0
        %2851 = vmatpush1.msra.mxu0 0.0
        %2852 = vmatprep.subr.mxu0 0.0
        %2853 = vmatpush1.msra.mxu0 0.0
        %2854 = vmatprep.subr.mxu0 0.0
        %2855 = vmatpush1.msra.mxu0 0.0
        %2856 = vmatprep.subr.mxu0 0.0
        %2857 = vmatpush1.msra.mxu0 0.0
        %2858 = vmatprep.subr.mxu0 0.0
        %2859 = vmatpush1.msra.mxu0 0.0
        %2860 = vmatprep.subr.mxu0 0.0
        %2861 = vmatpush1.msra.mxu0 0.0
        %2862 = vmatprep.subr.mxu0 0.0
        %2863 = vmatpush1.msra.mxu0 0.0
        %2864 = vmatprep.subr.mxu0 0.0
        %2865 = vmatpush1.msra.mxu0 0.0
        %2866 = vmatprep.subr.mxu0 0.0
        %2867 = vmatpush1.msra.mxu0 0.0
        %2868 = vmatprep.subr.mxu0 0.0
        %2869 = vmatpush1.msra.mxu0 0.0
        %2870 = vmatprep.subr.mxu0 0.0
        %2871 = vmatpush1.msra.mxu0 0.0
        %2872 = vmatprep.subr.mxu0 0.0
        %2873 = vmatpush1.msra.mxu0 0.0
        %2874 = vmatprep.mubr.f32.mxu0 0.0
        %2875 = vmatmul.mubr.f32.gmra.mrb[0].mxu0 %v2614
        %v2876 = vpop.f32.mrb[0].mxu0
        %v2877 = vadd.f32 0.0, %v2876
        %v2878 = vpop.f32.mrb[0].mxu0
        %2879 = vdwg.mxu0
        %v2880 = vadd.f32 %v2791, %v2877
        %v2881 = vld [vmem:[%s546] sm:$0xff]
        %v2882 = vld [vmem:[%s546 + $0x8] sm:$0xff]
        %v2883 = vld [vmem:[%s546 + $0x10] sm:$0xff]
        %v2884 = vld [vmem:[%s546 + $0x18] sm:$0xff]
        %v2885 = vld [vmem:[%s546 + $0x20] sm:$0xff]
        %v2886 = vld [vmem:[%s546 + $0x28] sm:$0xff]
        %v2887 = vld [vmem:[%s546 + $0x30] sm:$0xff]
        %v2888 = vld [vmem:[%s546 + $0x38] sm:$0xff]
        %v2889 = vld [vmem:[%s546 + $0x40] sm:$0xff]
        %v2890 = vld [vmem:[%s546 + $0x48] sm:$0xff]
        %v2891 = vld [vmem:[%s546 + $0x50] sm:$0xff]
        %v2892 = vld [vmem:[%s546 + $0x58] sm:$0xff]
        %v2893 = vld [vmem:[%s546 + $0x60] sm:$0xff]
        %v2894 = vld [vmem:[%s546 + $0x68] sm:$0xff]
        %v2895 = vld [vmem:[%s546 + $0x70] sm:$0xff]
        %v2896 = vld [vmem:[%s546 + $0x78] sm:$0xff]
        %2897 = vmatprep.subr.mxu0 0.0
        %2898 = vmatpush1.msra.mxu0 %v2881
        %2899 = vmatprep.subr.mxu0 0.0
        %2900 = vmatpush1.msra.mxu0 %v2882
        %2901 = vmatprep.subr.mxu0 0.0
        %2902 = vmatpush1.msra.mxu0 %v2883
        %2903 = vmatprep.subr.mxu0 0.0
        %2904 = vmatpush1.msra.mxu0 %v2884
        %2905 = vmatprep.subr.mxu0 0.0
        %2906 = vmatpush1.msra.mxu0 %v2885
        %2907 = vmatprep.subr.mxu0 0.0
        %2908 = vmatpush1.msra.mxu0 %v2886
        %2909 = vmatprep.subr.mxu0 0.0
        %2910 = vmatpush1.msra.mxu0 %v2887
        %2911 = vmatprep.subr.mxu0 0.0
        %2912 = vmatpush1.msra.mxu0 %v2888
        %2913 = vmatprep.subr.mxu0 0.0
        %2914 = vmatpush1.msra.mxu0 %v2889
        %2915 = vmatprep.subr.mxu0 0.0
        %2916 = vmatpush1.msra.mxu0 %v2890
        %2917 = vmatprep.subr.mxu0 0.0
        %2918 = vmatpush1.msra.mxu0 %v2891
        %2919 = vmatprep.subr.mxu0 0.0
        %2920 = vmatpush1.msra.mxu0 %v2892
        %2921 = vmatprep.subr.mxu0 0.0
        %2922 = vmatpush1.msra.mxu0 %v2893
        %2923 = vmatprep.subr.mxu0 0.0
        %2924 = vmatpush1.msra.mxu0 %v2894
        %2925 = vmatprep.subr.mxu0 0.0
        %2926 = vmatpush1.msra.mxu0 %v2895
        %2927 = vmatprep.subr.mxu0 0.0
        %2928 = vmatpush1.msra.mxu0 %v2896
        %2929 = vmatprep.subr.mxu0 0.0
        %2930 = vmatpush1.msra.mxu0 0.0
        %2931 = vmatprep.subr.mxu0 0.0
        %2932 = vmatpush1.msra.mxu0 0.0
        %2933 = vmatprep.subr.mxu0 0.0
        %2934 = vmatpush1.msra.mxu0 0.0
        %2935 = vmatprep.subr.mxu0 0.0
        %2936 = vmatpush1.msra.mxu0 0.0
        %2937 = vmatprep.subr.mxu0 0.0
        %2938 = vmatpush1.msra.mxu0 0.0
        %2939 = vmatprep.subr.mxu0 0.0
        %2940 = vmatpush1.msra.mxu0 0.0
        %2941 = vmatprep.subr.mxu0 0.0
        %2942 = vmatpush1.msra.mxu0 0.0
        %2943 = vmatprep.subr.mxu0 0.0
        %2944 = vmatpush1.msra.mxu0 0.0
        %2945 = vmatprep.subr.mxu0 0.0
        %2946 = vmatpush1.msra.mxu0 0.0
        %2947 = vmatprep.subr.mxu0 0.0
        %2948 = vmatpush1.msra.mxu0 0.0
        %2949 = vmatprep.subr.mxu0 0.0
        %2950 = vmatpush1.msra.mxu0 0.0
        %2951 = vmatprep.subr.mxu0 0.0
        %2952 = vmatpush1.msra.mxu0 0.0
        %2953 = vmatprep.subr.mxu0 0.0
        %2954 = vmatpush1.msra.mxu0 0.0
        %2955 = vmatprep.subr.mxu0 0.0
        %2956 = vmatpush1.msra.mxu0 0.0
        %2957 = vmatprep.subr.mxu0 0.0
        %2958 = vmatpush1.msra.mxu0 0.0
        %2959 = vmatprep.subr.mxu0 0.0
        %2960 = vmatpush1.msra.mxu0 0.0
        %2961 = vmatprep.mubr.f32.mxu0 0.0
        %2962 = vmatmul.mubr.f32.gmra.mrb[0].mxu0 %v2621
        %v2963 = vpop.f32.mrb[0].mxu0
        %v2964 = vadd.f32 0.0, %v2963
        %v2965 = vpop.f32.mrb[0].mxu0
        %2966 = vdwg.mxu0
        %v2967 = vadd.f32 %v2880, %v2964
        %v2968 = vmax.f32 %v2967, 0.0
        %s2969 = scalar_lea.vmem %s225, 48 [#allocation5]
        %2970 = vst.msk [vmem:[%s2969] sm:$0xff] %vm635, %v2968
        %s2971 = sadd.s32 %s241, 7
        %s2972 = sshra.s32 %s2971, 7
        %s2973 = sand.u32 %s2971, 127
        %s2974 = sadd.s32 %s2972, %s34
        %s2975 = smul.u32 %s2974, 128
        %s2976 = sshra.s32 %s2971, 7
        %s2977 = sand.u32 %s2971, 127
        %s2978 = sadd.s32 %s2975, %s2977
        %s2979 = sld [smem:[#allocation3 + %s2978]]
        %s2980 = sld [smem:[#allocation4 + %s2978]]
        %v2981 = vstv %s2979
        %v2982 = vadd.s32 %v2981, %v242
        %2983 = vset.pattern.permute.xlu0 0
        %2984 = vperm.xlu0 %2983, %v2982
        %v2985 = vpop.permute.xlu0 %2984
        %vm2986 = vcmp.eq.s32.totalorder %v245, %v2985
        %v2987 = vsel %vm2986, 1, 0
        %v2988 = vcvt.s32.f32 %v2987
        %v2989 = vadd.s32 %v2981, %v243
        %2990 = vset.pattern.permute.xlu0 0
        %2991 = vperm.xlu0 %2990, %v2989
        %v2992 = vpop.permute.xlu0 %2991
        %vm2993 = vcmp.eq.s32.totalorder %v245, %v2992
        %v2994 = vsel %vm2993, 1, 0
        %v2995 = vcvt.s32.f32 %v2994
        %v2996 = vstv %s2980
        %v2997 = vadd.s32 %v2996, %v242
        %2998 = vset.pattern.permute.xlu0 0
        %2999 = vperm.xlu0 %2998, %v2997
        %v3000 = vpop.permute.xlu0 %2999
        %vm3001 = vcmp.eq.s32.totalorder %v245, %v3000
        %v3002 = vsel %vm3001, 1, 0
        %v3003 = vcvt.s32.f32 %v3002
        %v3004 = vadd.s32 %v2996, %v243
        %3005 = vset.pattern.permute.xlu0 0
        %3006 = vperm.xlu0 %3005, %v3004
        %v3007 = vpop.permute.xlu0 %3006
        %vm3008 = vcmp.eq.s32.totalorder %v245, %v3007
        %v3009 = vsel %vm3008, 1, 0
        %v3010 = vcvt.s32.f32 %v3009
        %v3011 = vld [vmem:[%s4] sm:$0xff]
        %v3012 = vld [vmem:[%s4 + $0x8] sm:$0xff]
        %v3013 = vld [vmem:[%s4 + $0x10] sm:$0xff]
        %v3014 = vld [vmem:[%s4 + $0x18] sm:$0xff]
        %v3015 = vld [vmem:[%s4 + $0x20] sm:$0xff]
        %v3016 = vld [vmem:[%s4 + $0x28] sm:$0xff]
        %v3017 = vld [vmem:[%s4 + $0x30] sm:$0xff]
        %v3018 = vld [vmem:[%s4 + $0x38] sm:$0xff]
        %v3019 = vld [vmem:[%s4 + $0x40] sm:$0xff]
        %v3020 = vld [vmem:[%s4 + $0x48] sm:$0xff]
        %v3021 = vld [vmem:[%s4 + $0x50] sm:$0xff]
        %v3022 = vld [vmem:[%s4 + $0x58] sm:$0xff]
        %v3023 = vld [vmem:[%s4 + $0x60] sm:$0xff]
        %v3024 = vld [vmem:[%s4 + $0x68] sm:$0xff]
        %v3025 = vld [vmem:[%s4 + $0x70] sm:$0xff]
        %v3026 = vld [vmem:[%s4 + $0x78] sm:$0xff]
        %v3027 = vld [vmem:[%s301] sm:$0xff]
        %v3028 = vld [vmem:[%s301 + $0x8] sm:$0xff]
        %v3029 = vld [vmem:[%s301 + $0x10] sm:$0xff]
        %v3030 = vld [vmem:[%s301 + $0x18] sm:$0xff]
        %v3031 = vld [vmem:[%s301 + $0x20] sm:$0xff]
        %v3032 = vld [vmem:[%s301 + $0x28] sm:$0xff]
        %v3033 = vld [vmem:[%s301 + $0x30] sm:$0xff]
        %v3034 = vld [vmem:[%s301 + $0x38] sm:$0xff]
        %v3035 = vld [vmem:[%s301 + $0x40] sm:$0xff]
        %v3036 = vld [vmem:[%s301 + $0x48] sm:$0xff]
        %v3037 = vld [vmem:[%s301 + $0x50] sm:$0xff]
        %v3038 = vld [vmem:[%s301 + $0x58] sm:$0xff]
        %v3039 = vld [vmem:[%s301 + $0x60] sm:$0xff]
        %v3040 = vld [vmem:[%s301 + $0x68] sm:$0xff]
        %v3041 = vld [vmem:[%s301 + $0x70] sm:$0xff]
        %v3042 = vld [vmem:[%s301 + $0x78] sm:$0xff]
        %3043 = vmatprep.subr.mxu0 0.0
        %3044 = vmatpush1.msra.mxu0 %v3027
        %3045 = vmatprep.subr.mxu0 0.0
        %3046 = vmatpush1.msra.mxu0 %v3028
        %3047 = vmatprep.subr.mxu0 0.0
        %3048 = vmatpush1.msra.mxu0 %v3029
        %3049 = vmatprep.subr.mxu0 0.0
        %3050 = vmatpush1.msra.mxu0 %v3030
        %3051 = vmatprep.subr.mxu0 0.0
        %3052 = vmatpush1.msra.mxu0 %v3031
        %3053 = vmatprep.subr.mxu0 0.0
        %3054 = vmatpush1.msra.mxu0 %v3032
        %3055 = vmatprep.subr.mxu0 0.0
        %3056 = vmatpush1.msra.mxu0 %v3033
        %3057 = vmatprep.subr.mxu0 0.0
        %3058 = vmatpush1.msra.mxu0 %v3034
        %3059 = vmatprep.subr.mxu0 0.0
        %3060 = vmatpush1.msra.mxu0 %v3035
        %3061 = vmatprep.subr.mxu0 0.0
        %3062 = vmatpush1.msra.mxu0 %v3036
        %3063 = vmatprep.subr.mxu0 0.0
        %3064 = vmatpush1.msra.mxu0 %v3037
        %3065 = vmatprep.subr.mxu0 0.0
        %3066 = vmatpush1.msra.mxu0 %v3038
        %3067 = vmatprep.subr.mxu0 0.0
        %3068 = vmatpush1.msra.mxu0 %v3039
        %3069 = vmatprep.subr.mxu0 0.0
        %3070 = vmatpush1.msra.mxu0 %v3040
        %3071 = vmatprep.subr.mxu0 0.0
        %3072 = vmatpush1.msra.mxu0 %v3041
        %3073 = vmatprep.subr.mxu0 0.0
        %3074 = vmatpush1.msra.mxu0 %v3042
        %3075 = vmatprep.subr.mxu0 0.0
        %3076 = vmatpush1.msra.mxu0 0.0
        %3077 = vmatprep.subr.mxu0 0.0
        %3078 = vmatpush1.msra.mxu0 0.0
        %3079 = vmatprep.subr.mxu0 0.0
        %3080 = vmatpush1.msra.mxu0 0.0
        %3081 = vmatprep.subr.mxu0 0.0
        %3082 = vmatpush1.msra.mxu0 0.0
        %3083 = vmatprep.subr.mxu0 0.0
        %3084 = vmatpush1.msra.mxu0 0.0
        %3085 = vmatprep.subr.mxu0 0.0
        %3086 = vmatpush1.msra.mxu0 0.0
        %3087 = vmatprep.subr.mxu0 0.0
        %3088 = vmatpush1.msra.mxu0 0.0
        %3089 = vmatprep.subr.mxu0 0.0
        %3090 = vmatpush1.msra.mxu0 0.0
        %3091 = vmatprep.subr.mxu0 0.0
        %3092 = vmatpush1.msra.mxu0 0.0
        %3093 = vmatprep.subr.mxu0 0.0
        %3094 = vmatpush1.msra.mxu0 0.0
        %3095 = vmatprep.subr.mxu0 0.0
        %3096 = vmatpush1.msra.mxu0 0.0
        %3097 = vmatprep.subr.mxu0 0.0
        %3098 = vmatpush1.msra.mxu0 0.0
        %3099 = vmatprep.subr.mxu0 0.0
        %3100 = vmatpush1.msra.mxu0 0.0
        %3101 = vmatprep.subr.mxu0 0.0
        %3102 = vmatpush1.msra.mxu0 0.0
        %3103 = vmatprep.subr.mxu0 0.0
        %3104 = vmatpush1.msra.mxu0 0.0
        %3105 = vmatprep.subr.mxu0 0.0
        %3106 = vmatpush1.msra.mxu0 0.0
        %3107 = vmatprep.mubr.f32.mxu0 0.0
        %3108 = vmatmul.mubr.f32.gmra.mrb[0].mxu0 %v2995
        %v3109 = vpop.f32.mrb[0].mxu0
        %v3110 = vadd.f32 0.0, %v3109
        %v3111 = vpop.f32.mrb[0].mxu0
        %3112 = vdwg.mxu0
        %3113 = vmatprep.subr.mxu0 0.0
        %3114 = vmatpush1.msra.mxu0 %v3011
        %3115 = vmatprep.subr.mxu0 0.0
        %3116 = vmatpush1.msra.mxu0 %v3012
        %3117 = vmatprep.subr.mxu0 0.0
        %3118 = vmatpush1.msra.mxu0 %v3013
        %3119 = vmatprep.subr.mxu0 0.0
        %3120 = vmatpush1.msra.mxu0 %v3014
        %3121 = vmatprep.subr.mxu0 0.0
        %3122 = vmatpush1.msra.mxu0 %v3015
        %3123 = vmatprep.subr.mxu0 0.0
        %3124 = vmatpush1.msra.mxu0 %v3016
        %3125 = vmatprep.subr.mxu0 0.0
        %3126 = vmatpush1.msra.mxu0 %v3017
        %3127 = vmatprep.subr.mxu0 0.0
        %3128 = vmatpush1.msra.mxu0 %v3018
        %3129 = vmatprep.subr.mxu0 0.0
        %3130 = vmatpush1.msra.mxu0 %v3019
        %3131 = vmatprep.subr.mxu0 0.0
        %3132 = vmatpush1.msra.mxu0 %v3020
        %3133 = vmatprep.subr.mxu0 0.0
        %3134 = vmatpush1.msra.mxu0 %v3021
        %3135 = vmatprep.subr.mxu0 0.0
        %3136 = vmatpush1.msra.mxu0 %v3022
        %3137 = vmatprep.subr.mxu0 0.0
        %3138 = vmatpush1.msra.mxu0 %v3023
        %3139 = vmatprep.subr.mxu0 0.0
        %3140 = vmatpush1.msra.mxu0 %v3024
        %3141 = vmatprep.subr.mxu0 0.0
        %3142 = vmatpush1.msra.mxu0 %v3025
        %3143 = vmatprep.subr.mxu0 0.0
        %3144 = vmatpush1.msra.mxu0 %v3026
        %3145 = vmatprep.subr.mxu0 0.0
        %3146 = vmatpush1.msra.mxu0 0.0
        %3147 = vmatprep.subr.mxu0 0.0
        %3148 = vmatpush1.msra.mxu0 0.0
        %3149 = vmatprep.subr.mxu0 0.0
        %3150 = vmatpush1.msra.mxu0 0.0
        %3151 = vmatprep.subr.mxu0 0.0
        %3152 = vmatpush1.msra.mxu0 0.0
        %3153 = vmatprep.subr.mxu0 0.0
        %3154 = vmatpush1.msra.mxu0 0.0
        %3155 = vmatprep.subr.mxu0 0.0
        %3156 = vmatpush1.msra.mxu0 0.0
        %3157 = vmatprep.subr.mxu0 0.0
        %3158 = vmatpush1.msra.mxu0 0.0
        %3159 = vmatprep.subr.mxu0 0.0
        %3160 = vmatpush1.msra.mxu0 0.0
        %3161 = vmatprep.subr.mxu0 0.0
        %3162 = vmatpush1.msra.mxu0 0.0
        %3163 = vmatprep.subr.mxu0 0.0
        %3164 = vmatpush1.msra.mxu0 0.0
        %3165 = vmatprep.subr.mxu0 0.0
        %3166 = vmatpush1.msra.mxu0 0.0
        %3167 = vmatprep.subr.mxu0 0.0
        %3168 = vmatpush1.msra.mxu0 0.0
        %3169 = vmatprep.subr.mxu0 0.0
        %3170 = vmatpush1.msra.mxu0 0.0
        %3171 = vmatprep.subr.mxu0 0.0
        %3172 = vmatpush1.msra.mxu0 0.0
        %3173 = vmatprep.subr.mxu0 0.0
        %3174 = vmatpush1.msra.mxu0 0.0
        %3175 = vmatprep.subr.mxu0 0.0
        %3176 = vmatpush1.msra.mxu0 0.0
        %3177 = vmatprep.mubr.f32.mxu0 0.0
        %3178 = vmatmul.mubr.f32.gmra.mrb[0].mxu0 %v2988
        %v3179 = vpop.f32.mrb[0].mxu0
        %v3180 = vadd.f32 %v3110, %v3179
        %v3181 = vpop.f32.mrb[0].mxu0
        %3182 = vdwg.mxu0
        %v3183 = vld [vmem:[%s458] sm:$0xff]
        %v3184 = vld [vmem:[%s458 + $0x8] sm:$0xff]
        %v3185 = vld [vmem:[%s458 + $0x10] sm:$0xff]
        %v3186 = vld [vmem:[%s458 + $0x18] sm:$0xff]
        %v3187 = vld [vmem:[%s458 + $0x20] sm:$0xff]
        %v3188 = vld [vmem:[%s458 + $0x28] sm:$0xff]
        %v3189 = vld [vmem:[%s458 + $0x30] sm:$0xff]
        %v3190 = vld [vmem:[%s458 + $0x38] sm:$0xff]
        %v3191 = vld [vmem:[%s458 + $0x40] sm:$0xff]
        %v3192 = vld [vmem:[%s458 + $0x48] sm:$0xff]
        %v3193 = vld [vmem:[%s458 + $0x50] sm:$0xff]
        %v3194 = vld [vmem:[%s458 + $0x58] sm:$0xff]
        %v3195 = vld [vmem:[%s458 + $0x60] sm:$0xff]
        %v3196 = vld [vmem:[%s458 + $0x68] sm:$0xff]
        %v3197 = vld [vmem:[%s458 + $0x70] sm:$0xff]
        %v3198 = vld [vmem:[%s458 + $0x78] sm:$0xff]
        %3199 = vmatprep.subr.mxu0 0.0
        %3200 = vmatpush1.msra.mxu0 %v3183
        %3201 = vmatprep.subr.mxu0 0.0
        %3202 = vmatpush1.msra.mxu0 %v3184
        %3203 = vmatprep.subr.mxu0 0.0
        %3204 = vmatpush1.msra.mxu0 %v3185
        %3205 = vmatprep.subr.mxu0 0.0
        %3206 = vmatpush1.msra.mxu0 %v3186
        %3207 = vmatprep.subr.mxu0 0.0
        %3208 = vmatpush1.msra.mxu0 %v3187
        %3209 = vmatprep.subr.mxu0 0.0
        %3210 = vmatpush1.msra.mxu0 %v3188
        %3211 = vmatprep.subr.mxu0 0.0
        %3212 = vmatpush1.msra.mxu0 %v3189
        %3213 = vmatprep.subr.mxu0 0.0
        %3214 = vmatpush1.msra.mxu0 %v3190
        %3215 = vmatprep.subr.mxu0 0.0
        %3216 = vmatpush1.msra.mxu0 %v3191
        %3217 = vmatprep.subr.mxu0 0.0
        %3218 = vmatpush1.msra.mxu0 %v3192
        %3219 = vmatprep.subr.mxu0 0.0
        %3220 = vmatpush1.msra.mxu0 %v3193
        %3221 = vmatprep.subr.mxu0 0.0
        %3222 = vmatpush1.msra.mxu0 %v3194
        %3223 = vmatprep.subr.mxu0 0.0
        %3224 = vmatpush1.msra.mxu0 %v3195
        %3225 = vmatprep.subr.mxu0 0.0
        %3226 = vmatpush1.msra.mxu0 %v3196
        %3227 = vmatprep.subr.mxu0 0.0
        %3228 = vmatpush1.msra.mxu0 %v3197
        %3229 = vmatprep.subr.mxu0 0.0
        %3230 = vmatpush1.msra.mxu0 %v3198
        %3231 = vmatprep.subr.mxu0 0.0
        %3232 = vmatpush1.msra.mxu0 0.0
        %3233 = vmatprep.subr.mxu0 0.0
        %3234 = vmatpush1.msra.mxu0 0.0
        %3235 = vmatprep.subr.mxu0 0.0
        %3236 = vmatpush1.msra.mxu0 0.0
        %3237 = vmatprep.subr.mxu0 0.0
        %3238 = vmatpush1.msra.mxu0 0.0
        %3239 = vmatprep.subr.mxu0 0.0
        %3240 = vmatpush1.msra.mxu0 0.0
        %3241 = vmatprep.subr.mxu0 0.0
        %3242 = vmatpush1.msra.mxu0 0.0
        %3243 = vmatprep.subr.mxu0 0.0
        %3244 = vmatpush1.msra.mxu0 0.0
        %3245 = vmatprep.subr.mxu0 0.0
        %3246 = vmatpush1.msra.mxu0 0.0
        %3247 = vmatprep.subr.mxu0 0.0
        %3248 = vmatpush1.msra.mxu0 0.0
        %3249 = vmatprep.subr.mxu0 0.0
        %3250 = vmatpush1.msra.mxu0 0.0
        %3251 = vmatprep.subr.mxu0 0.0
        %3252 = vmatpush1.msra.mxu0 0.0
        %3253 = vmatprep.subr.mxu0 0.0
        %3254 = vmatpush1.msra.mxu0 0.0
        %3255 = vmatprep.subr.mxu0 0.0
        %3256 = vmatpush1.msra.mxu0 0.0
        %3257 = vmatprep.subr.mxu0 0.0
        %3258 = vmatpush1.msra.mxu0 0.0
        %3259 = vmatprep.subr.mxu0 0.0
        %3260 = vmatpush1.msra.mxu0 0.0
        %3261 = vmatprep.subr.mxu0 0.0
        %3262 = vmatpush1.msra.mxu0 0.0
        %3263 = vmatprep.mubr.f32.mxu0 0.0
        %3264 = vmatmul.mubr.f32.gmra.mrb[0].mxu0 %v3003
        %v3265 = vpop.f32.mrb[0].mxu0
        %v3266 = vadd.f32 0.0, %v3265
        %v3267 = vpop.f32.mrb[0].mxu0
        %3268 = vdwg.mxu0
        %v3269 = vadd.f32 %v3180, %v3266
        %v3270 = vld [vmem:[%s546] sm:$0xff]
        %v3271 = vld [vmem:[%s546 + $0x8] sm:$0xff]
        %v3272 = vld [vmem:[%s546 + $0x10] sm:$0xff]
        %v3273 = vld [vmem:[%s546 + $0x18] sm:$0xff]
        %v3274 = vld [vmem:[%s546 + $0x20] sm:$0xff]
        %v3275 = vld [vmem:[%s546 + $0x28] sm:$0xff]
        %v3276 = vld [vmem:[%s546 + $0x30] sm:$0xff]
        %v3277 = vld [vmem:[%s546 + $0x38] sm:$0xff]
        %v3278 = vld [vmem:[%s546 + $0x40] sm:$0xff]
        %v3279 = vld [vmem:[%s546 + $0x48] sm:$0xff]
        %v3280 = vld [vmem:[%s546 + $0x50] sm:$0xff]
        %v3281 = vld [vmem:[%s546 + $0x58] sm:$0xff]
        %v3282 = vld [vmem:[%s546 + $0x60] sm:$0xff]
        %v3283 = vld [vmem:[%s546 + $0x68] sm:$0xff]
        %v3284 = vld [vmem:[%s546 + $0x70] sm:$0xff]
        %v3285 = vld [vmem:[%s546 + $0x78] sm:$0xff]
        %3286 = vmatprep.subr.mxu0 0.0
        %3287 = vmatpush1.msra.mxu0 %v3270
        %3288 = vmatprep.subr.mxu0 0.0
        %3289 = vmatpush1.msra.mxu0 %v3271
        %3290 = vmatprep.subr.mxu0 0.0
        %3291 = vmatpush1.msra.mxu0 %v3272
        %3292 = vmatprep.subr.mxu0 0.0
        %3293 = vmatpush1.msra.mxu0 %v3273
        %3294 = vmatprep.subr.mxu0 0.0
        %3295 = vmatpush1.msra.mxu0 %v3274
        %3296 = vmatprep.subr.mxu0 0.0
        %3297 = vmatpush1.msra.mxu0 %v3275
        %3298 = vmatprep.subr.mxu0 0.0
        %3299 = vmatpush1.msra.mxu0 %v3276
        %3300 = vmatprep.subr.mxu0 0.0
        %3301 = vmatpush1.msra.mxu0 %v3277
        %3302 = vmatprep.subr.mxu0 0.0
        %3303 = vmatpush1.msra.mxu0 %v3278
        %3304 = vmatprep.subr.mxu0 0.0
        %3305 = vmatpush1.msra.mxu0 %v3279
        %3306 = vmatprep.subr.mxu0 0.0
        %3307 = vmatpush1.msra.mxu0 %v3280
        %3308 = vmatprep.subr.mxu0 0.0
        %3309 = vmatpush1.msra.mxu0 %v3281
        %3310 = vmatprep.subr.mxu0 0.0
        %3311 = vmatpush1.msra.mxu0 %v3282
        %3312 = vmatprep.subr.mxu0 0.0
        %3313 = vmatpush1.msra.mxu0 %v3283
        %3314 = vmatprep.subr.mxu0 0.0
        %3315 = vmatpush1.msra.mxu0 %v3284
        %3316 = vmatprep.subr.mxu0 0.0
        %3317 = vmatpush1.msra.mxu0 %v3285
        %3318 = vmatprep.subr.mxu0 0.0
        %3319 = vmatpush1.msra.mxu0 0.0
        %3320 = vmatprep.subr.mxu0 0.0
        %3321 = vmatpush1.msra.mxu0 0.0
        %3322 = vmatprep.subr.mxu0 0.0
        %3323 = vmatpush1.msra.mxu0 0.0
        %3324 = vmatprep.subr.mxu0 0.0
        %3325 = vmatpush1.msra.mxu0 0.0
        %3326 = vmatprep.subr.mxu0 0.0
        %3327 = vmatpush1.msra.mxu0 0.0
        %3328 = vmatprep.subr.mxu0 0.0
        %3329 = vmatpush1.msra.mxu0 0.0
        %3330 = vmatprep.subr.mxu0 0.0
        %3331 = vmatpush1.msra.mxu0 0.0
        %3332 = vmatprep.subr.mxu0 0.0
        %3333 = vmatpush1.msra.mxu0 0.0
        %3334 = vmatprep.subr.mxu0 0.0
        %3335 = vmatpush1.msra.mxu0 0.0
        %3336 = vmatprep.subr.mxu0 0.0
        %3337 = vmatpush1.msra.mxu0 0.0
        %3338 = vmatprep.subr.mxu0 0.0
        %3339 = vmatpush1.msra.mxu0 0.0
        %3340 = vmatprep.subr.mxu0 0.0
        %3341 = vmatpush1.msra.mxu0 0.0
        %3342 = vmatprep.subr.mxu0 0.0
        %3343 = vmatpush1.msra.mxu0 0.0
        %3344 = vmatprep.subr.mxu0 0.0
        %3345 = vmatpush1.msra.mxu0 0.0
        %3346 = vmatprep.subr.mxu0 0.0
        %3347 = vmatpush1.msra.mxu0 0.0
        %3348 = vmatprep.subr.mxu0 0.0
        %3349 = vmatpush1.msra.mxu0 0.0
        %3350 = vmatprep.mubr.f32.mxu0 0.0
        %3351 = vmatmul.mubr.f32.gmra.mrb[0].mxu0 %v3010
        %v3352 = vpop.f32.mrb[0].mxu0
        %v3353 = vadd.f32 0.0, %v3352
        %v3354 = vpop.f32.mrb[0].mxu0
        %3355 = vdwg.mxu0
        %v3356 = vadd.f32 %v3269, %v3353
        %v3357 = vmax.f32 %v3356, 0.0
        %s3358 = scalar_lea.vmem %s225, 56 [#allocation5]
        %3359 = vst.msk [vmem:[%s3358] sm:$0xff] %vm635, %v3357
        %s3360 = sand.u32 %s137, 1
        %s3361 = scalar_lea.sflag [#allocation6], %s3360
        %s3362 = sand.u32 %s137, 1
        %s3363 = smul.addr %s3362, 64
        %s3364 = scalar_lea.vmem [#allocation5], %s3363
        // Predicated region
        $region33: #{tpu_custom_call.1} parent=31 // pred_check
          %p3365 = pneg %p147
        $region34: #{tpu_custom_call.1} parent=31 // pred_check_branch
          %3367 = sbr.rel (%p3365) target = $region36
        $region35: #{tpu_custom_call.1} parent=31 // pred_region
          %s3368 = smul.u32 8, %s35
          %s3370 = ssub.s32 1024, 1024
          %3371 = vsyncadd %s3361, %s3370
          %s3372 = sadd.s32 %s36, %s3368
          %s3373 = smul.addr %s34, 8
          %s3374 = sadd.s32 %s3372, %s3373
          %s3375 = smul.addr %s3374, 128
          %s3376 = scalar_lea.hbm %s5, %s3375
          %s3377 = sshll.u32 %s3364, 4
          %s3378 = int_to_ptr.vmem [resolvable:$true] %s3377
          %3383 = dma.vmem_to_hbm [thread:$0]  %s3378, 1024, %s3376, %s3361, 128, 128, 8
        $region36: #{tpu_custom_call.1} parent=31 // pred_fallthru
          _
      $region32: #{tpu_custom_call.1} parent=5 // pred_fallthru
        _
      %p3384 = scmp.le.s32.totalorder 2, %s24
      // Predicated region
      $region37: #{tpu_custom_call.1} parent=5 // pred_check
        %p3385 = pneg %p3384
      $region38: #{tpu_custom_call.1} parent=5 // pred_check_branch
        %3387 = sbr.rel (%p3385) target = $region40
      $region39: #{tpu_custom_call.1} parent=5 // pred_region
        %s3388 = ssub.s32 %s24, 2
        // Predicated region
        $region41: #{tpu_custom_call.1} parent=39 // pred_check
          %p3389 = pneg %p153
        $region42: #{tpu_custom_call.1} parent=39 // pred_check_branch
          %3391 = sbr.rel (%p3389) target = $region44
        $region43: #{tpu_custom_call.1} parent=39 // pred_region
          %s3392 = sand.u32 %s138, 1
          %s3393 = scalar_lea.sflag [#allocation6], %s3392
          %s3394 = sand.u32 %s138, 1
          %s3395 = smul.addr %s3394, 64
          %s3396 = scalar_lea.vmem [#allocation5], %s3395
          %3397 = dma.done %s3393, 1024
        $region44: #{tpu_custom_call.1} parent=39 // pred_fallthru
          _
      $region40: #{tpu_custom_call.1} parent=5 // pred_fallthru
        _
    $region6: #{tpu_custom_call.1} parent=1 // loop_footer
      %s28 = sadd.s32 1, %s24
    $region7: #{tpu_custom_call.1} parent=1 // loop_footer_branch
      %23 = sbr.rel target = $region3
    $region8: #{tpu_custom_call.1} parent=1 // loop_exit
      _
    %3398 = vsyncpa [#allocation6], 1
    %s3399 = scalar_lea.sflag [#allocation6], 1
    %3400 = vsyncpa %s3399, 1

</llo_original>
